<compile_context>
chip_gen: v7x
topology: tpu7x:2x2x1
jax: 0.10.0
libtpu: 0.0.40
codegen_flags: <defaults>
</compile_context>

<pallas_src>
import jax
import jax.numpy as jnp
from jax.experimental import pallas as pl
from jax.experimental.pallas import tpu as pltpu

# ----------------------------- configuration --------------------------------
IN_CHANNELS = 3
NUM_CLASSES = 25
IMG_SIZE = 32
PATCH = 16
EMBED_DIM = 64
DEPTH = 2
NUM_HEADS = 2
MLP_RATIO = 4
HEAD_DIM = EMBED_DIM // NUM_HEADS
NUM_PATCHES = (IMG_SIZE // PATCH) ** 2
SEQ = NUM_PATCHES + 1          # + cls token
LN_EPS = 1e-6
HEAD_PAD = 128                 # classifier head padded to one full lane width
ATTN_SCALE = HEAD_DIM ** -0.5
PATCH_DIM = IN_CHANNELS * PATCH * PATCH
HIDDEN = EMBED_DIM * MLP_RATIO


# ------------------------------ fused kernel ---------------------------------
def vit_kernel(
    patches_ref,   # [1, SEQ, PATCH_DIM]  (this batch element; zero cls row)
    patch_w_ref,   # [PATCH_DIM, D]
    pos_bias_ref,  # [SEQ, D]             (cls_token/patch_b + pos_embed folded)
    blk_wa_ref,    # [DEPTH, D, 8D]       (qkv_w | proj_w | fc1_w)
    blk_fc2_ref,   # [DEPTH, 4D, D]
    blk_vec_ref,   # [DEPTH, 8, 4D]       (ln1_g, ln1_b, qkv_b, proj_b,
                   #                       ln2_g, ln2_b, fc1_b, fc2_b)
    head_ref,      # [D+3, HEAD_PAD]      (head_w rows, head_b, norm_g, norm_b)
    out_ref,       # [1, 1, HEAD_PAD]
):
    D = EMBED_DIM

    def ln(x, g, b):
        mu = jnp.mean(x, axis=-1, keepdims=True)
        xc = x - mu
        var = jnp.mean(xc * xc, axis=-1, keepdims=True)
        return xc * jax.lax.rsqrt(var + LN_EPS) * g + b

    # Patch embedding; cls token + positional embedding are pre-folded into the
    # additive bias (the cls row of `patches` is all-zero).
    h = (
        jnp.dot(patches_ref[0], patch_w_ref[...],
                preferred_element_type=jnp.float32)
        + pos_bias_ref[...]
    )                                                    # [SEQ, D]

    # TODO(synk): for DEPTH=12 use lax.fori_loop with dynamic ref[l] indexing
    # to bound vreg live ranges; static unroll is fine at DEPTH=2.
    for l in range(DEPTH):
        # -------- per-layer parameter views (static slices, zero cost) -------
        ln1_g = blk_vec_ref[l, 0:1, 0:D]
        ln1_b = blk_vec_ref[l, 1:2, 0:D]
        qkv_b = blk_vec_ref[l, 2:3, 0:3 * D]
        proj_b = blk_vec_ref[l, 3:4, 0:D]
        ln2_g = blk_vec_ref[l, 4:5, 0:D]
        ln2_b = blk_vec_ref[l, 5:6, 0:D]
        fc1_b = blk_vec_ref[l, 6:7, :]                   # [1, 4D]
        fc2_b = blk_vec_ref[l, 7:8, 0:D]

        qkv_w = blk_wa_ref[l, :, 0:3 * D]                # [D, 3D]
        proj_w = blk_wa_ref[l, :, 3 * D:4 * D]           # [D, D]
        fc1_w = blk_wa_ref[l, :, 4 * D:8 * D]            # [D, 4D]

        # ----------------------- attention branch ----------------------------
        h2 = ln(h, ln1_g, ln1_b)
        qkv = (
            jnp.dot(h2, qkv_w, preferred_element_type=jnp.float32) + qkv_b
        )                                                # [SEQ, 3D]
        attn = jnp.zeros_like(h)
        # TODO(synk): at Dh=64/heads=6 fold the per-head loop into one
        # heads-batched dot_general to improve MXU fill.
        for hd in range(NUM_HEADS):                      # static unroll
            lo = hd * HEAD_DIM
            q = qkv[:, lo:lo + HEAD_DIM]                 # scale folded at pack
            k = qkv[:, D + lo:D + lo + HEAD_DIM]
            v = qkv[:, 2 * D + lo:2 * D + lo + HEAD_DIM]
            # q @ k^T without explicit transpose (contract last dims).
            s = jax.lax.dot_general(
                q, k, (((1,), (1,)), ((), ())),
                preferred_element_type=jnp.float32,
            )                                            # [SEQ, SEQ]
            s = s - jnp.max(s, axis=-1, keepdims=True)
            p = jnp.exp(s)
            p = p * pl.reciprocal(jnp.sum(p, axis=-1, keepdims=True),
                                  approx=False)
            o = jnp.dot(p, v, preferred_element_type=jnp.float32)  # [SEQ, Dh]
            # fold per-head output straight into the output projection
            attn = attn + jnp.dot(o, proj_w[lo:lo + HEAD_DIM, :],
                                  preferred_element_type=jnp.float32)
        h = h + attn + proj_b                            # residual

        # -------------------------- MLP branch --------------------------------
        h2 = ln(h, ln2_g, ln2_b)
        m = jnp.dot(h2, fc1_w, preferred_element_type=jnp.float32) + fc1_b
        # exact (erf-based) GELU, as in torch.nn.GELU()
        m = 0.5 * m * (1.0 + jax.lax.erf(m * 0.7071067811865476))
        h = (
            h
            + jnp.dot(m, blk_fc2_ref[l], preferred_element_type=jnp.float32)
            + fc2_b
        )                                                # residual

    # ------- final LN + padded classifier head, cls row ONLY (row 0) ---------
    norm_g = head_ref[D + 1:D + 2, 0:D]
    norm_b = head_ref[D + 2:D + 3, 0:D]
    cls = ln(h[0:1, :], norm_g, norm_b)                  # [1, D]
    logits = (
        jnp.dot(cls, head_ref[0:D, :], preferred_element_type=jnp.float32)
        + head_ref[D:D + 1, :]
    )                                                    # [1, HEAD_PAD]
    out_ref[...] = logits[None]                          # [1, 1, HEAD_PAD]


# --------------------------- parameter creation ------------------------------
def init_params(key):
    def nrm(k, shape, std=0.02):
        return (std * jax.random.normal(k, shape)).astype(jnp.float32)

    keys = iter(jax.random.split(key, 8 + DEPTH * 8))
    p = {
        # conv weight [D, C, p, p] represented directly as a [C*p*p, D] matmul
        "patch_w": nrm(next(keys), (PATCH_DIM, EMBED_DIM)),
        "patch_b": jnp.zeros((EMBED_DIM,), jnp.float32),
        "cls_token": nrm(next(keys), (1, 1, EMBED_DIM)),
        "pos_embed": nrm(next(keys), (1, SEQ, EMBED_DIM)),
        "norm_g": jnp.ones((EMBED_DIM,), jnp.float32),
        "norm_b": jnp.zeros((EMBED_DIM,), jnp.float32),
        "head_w": nrm(next(keys), (EMBED_DIM, NUM_CLASSES)),
        "head_b": jnp.zeros((NUM_CLASSES,), jnp.float32),
        "blocks": [],
    }
    for _ in range(DEPTH):
        p["blocks"].append({
            "ln1_g": jnp.ones((EMBED_DIM,), jnp.float32),
            "ln1_b": jnp.zeros((EMBED_DIM,), jnp.float32),
            "qkv_w": nrm(next(keys), (EMBED_DIM, 3 * EMBED_DIM)),
            "qkv_b": jnp.zeros((3 * EMBED_DIM,), jnp.float32),
            "proj_w": nrm(next(keys), (EMBED_DIM, EMBED_DIM)),
            "proj_b": jnp.zeros((EMBED_DIM,), jnp.float32),
            "ln2_g": jnp.ones((EMBED_DIM,), jnp.float32),
            "ln2_b": jnp.zeros((EMBED_DIM,), jnp.float32),
            "fc1_w": nrm(next(keys), (EMBED_DIM, HIDDEN)),
            "fc1_b": jnp.zeros((HIDDEN,), jnp.float32),
            "fc2_w": nrm(next(keys), (HIDDEN, EMBED_DIM)),
            "fc2_b": jnp.zeros((EMBED_DIM,), jnp.float32),
        })
    return p


def pack_params(p):
    """One-time repack into kernel-ready, DMA-coalesced arrays."""
    D = EMBED_DIM
    pos = p["pos_embed"][0]                               # [SEQ, D]
    # additive bias per token row: cls row gets cls_token + pos[0];
    # patch rows get patch_b + pos[1:].
    pos_bias = jnp.concatenate(
        [p["cls_token"].reshape(1, D) + pos[:1],
         p["patch_b"][None, :] + pos[1:]],
        axis=0,
    )                                                     # [SEQ, D]

    def pad_vec(v):
        return jnp.pad(v, (0, HIDDEN - v.shape[0]))

    wa_l, fc2_l, vec_l = [], [], []
    for b in p["blocks"]:
        # fold the 1/sqrt(Dh) attention scale into the q columns/bias
        qkv_w = b["qkv_w"].at[:, :D].multiply(ATTN_SCALE)
        qkv_b = b["qkv_b"].at[:D].multiply(ATTN_SCALE)
        wa_l.append(jnp.concatenate([qkv_w, b["proj_w"], b["fc1_w"]], axis=1))
        fc2_l.append(b["fc2_w"])
        vec_l.append(jnp.stack([
            pad_vec(b["ln1_g"]), pad_vec(b["ln1_b"]), pad_vec(qkv_b),
            pad_vec(b["proj_b"]), pad_vec(b["ln2_g"]), pad_vec(b["ln2_b"]),
            b["fc1_b"], pad_vec(b["fc2_b"]),
        ]))                                               # [8, 4D]

    head_w = jnp.pad(p["head_w"], ((0, 0), (0, HEAD_PAD - NUM_CLASSES)))
    head_b = jnp.pad(p["head_b"], (0, HEAD_PAD - NUM_CLASSES))
    norm_g = jnp.pad(p["norm_g"], (0, HEAD_PAD - D))
    norm_b = jnp.pad(p["norm_b"], (0, HEAD_PAD - D))
    head_pack = jnp.concatenate(
        [head_w, head_b[None], norm_g[None], norm_b[None]], axis=0
    )                                                     # [D+3, HEAD_PAD]

    return {
        "patch_w": p["patch_w"],
        "pos_bias": pos_bias,
        "blk_wa": jnp.stack(wa_l),        # [DEPTH, D, 8D]
        "blk_fc2": jnp.stack(fc2_l),      # [DEPTH, 4D, D]
        "blk_vec": jnp.stack(vec_l),      # [DEPTH, 8, 4D]
        "head_pack": head_pack,           # [D+3, HEAD_PAD]
    }


# ------------------------------ forward pass ---------------------------------
def vit_forward(packed, x):
    """x: [B, C, H, W] (NCHW, like PyTorch) -> logits [B, NUM_CLASSES]."""
    B, C, H, W = x.shape
    hp, wp = H // PATCH, W // PATCH

    # patch extraction (pure layout glue): NCHW -> [B, num_patches, C*p*p],
    # ordering matches flattening a conv weight of shape [D, C, p, p].
    patches = (
        x.reshape(B, C, hp, PATCH, wp, PATCH)
        .transpose(0, 2, 4, 1, 3, 5)
        .reshape(B, hp * wp, PATCH_DIM)
    )
    # zero patch row at the cls position so the in-kernel matmul covers SEQ rows
    patches = jnp.concatenate(
        [jnp.zeros((B, 1, PATCH_DIM), patches.dtype), patches], axis=1
    )                                                     # [B, SEQ, PATCH_DIM]

    logits_all = pl.pallas_call(
        vit_kernel,
        out_shape=jax.ShapeDtypeStruct((B, 1, HEAD_PAD), jnp.float32),
        grid=(B,),
        in_specs=[
            pl.BlockSpec((1, SEQ, PATCH_DIM), lambda b: (b, 0, 0)),
            pl.BlockSpec((PATCH_DIM, EMBED_DIM), lambda b: (0, 0)),
            pl.BlockSpec((SEQ, EMBED_DIM), lambda b: (0, 0)),
            pl.BlockSpec((DEPTH, EMBED_DIM, 8 * EMBED_DIM), lambda b: (0, 0, 0)),
            pl.BlockSpec((DEPTH, HIDDEN, EMBED_DIM), lambda b: (0, 0, 0)),
            pl.BlockSpec((DEPTH, 8, HIDDEN), lambda b: (0, 0, 0)),
            pl.BlockSpec((EMBED_DIM + 3, HEAD_PAD), lambda b: (0, 0)),
        ],
        out_specs=pl.BlockSpec((1, 1, HEAD_PAD), lambda b: (b, 0, 0)),
        compiler_params=pltpu.CompilerParams(
            dimension_semantics=("parallel",),
        ),
    )(
        patches, packed["patch_w"], packed["pos_bias"],
        packed["blk_wa"], packed["blk_fc2"], packed["blk_vec"],
        packed["head_pack"],
    )
    # un-pad the real classes (trivial XLA glue)
    return logits_all[:, 0, :NUM_CLASSES]


# ---------------------------------- main --------------------------------------
if __name__ == "__main__":
    key = jax.random.PRNGKey(0)
    pkey, xkey = jax.random.split(key)
    params = init_params(pkey)
    packed = pack_params(params)
    x = jax.random.normal(xkey, (2, IN_CHANNELS, IMG_SIZE, IMG_SIZE), jnp.float32)

    logits = jax.jit(vit_forward)(packed, x)
    jax.block_until_ready(logits)
    assert logits.shape == (2, NUM_CLASSES) and logits.dtype == jnp.float32
    print("KERNEL_OK")
</pallas_src>

<mosaic_0001>
module attributes {stable_mosaic.version = 11 : i64} {
  func.func @vit_kernel(%arg0: i32, %arg1: memref<1x5x768xf32, #tpu.memory_space<vmem>>, %arg2: memref<768x64xf32, #tpu.memory_space<vmem>>, %arg3: memref<5x64xf32, #tpu.memory_space<vmem>>, %arg4: memref<2x64x512xf32, #tpu.memory_space<vmem>>, %arg5: memref<2x256x64xf32, #tpu.memory_space<vmem>>, %arg6: memref<2x8x256xf32, #tpu.memory_space<vmem>>, %arg7: memref<67x128xf32, #tpu.memory_space<vmem>>, %arg8: memref<1x1x128xf32, #tpu.memory_space<vmem>>) attributes {dimension_semantics = [#tpu.dimension_semantics<parallel>], iteration_bounds = array<i64: 2>, scalar_prefetch = 0 : i64, scratch_operands = 0 : i64, tpu.core_type = #tpu.core_type<tc>, window_params = [{transform_indices = @transform_0, window_bounds = array<i64: 1, 5, 768>}, {pipeline_mode = #tpu.pipeline_mode<synchronous>, transform_indices = @transform_1, window_bounds = array<i64: 768, 64>}, {pipeline_mode = #tpu.pipeline_mode<synchronous>, transform_indices = @transform_2, window_bounds = array<i64: 5, 64>}, {pipeline_mode = #tpu.pipeline_mode<synchronous>, transform_indices = @transform_3, window_bounds = array<i64: 2, 64, 512>}, {pipeline_mode = #tpu.pipeline_mode<synchronous>, transform_indices = @transform_4, window_bounds = array<i64: 2, 256, 64>}, {pipeline_mode = #tpu.pipeline_mode<synchronous>, transform_indices = @transform_5, window_bounds = array<i64: 2, 8, 256>}, {pipeline_mode = #tpu.pipeline_mode<synchronous>, transform_indices = @transform_6, window_bounds = array<i64: 67, 128>}, {transform_indices = @transform_7, window_bounds = array<i64: 1, 1, 128>}]} {
    %c0 = arith.constant 0 : index
    %c0_0 = arith.constant 0 : index
    %c0_1 = arith.constant 0 : index
    %0 = vector.load %arg1[%c0, %c0_0, %c0_1] : memref<1x5x768xf32, #tpu.memory_space<vmem>>, vector<1x5x768xf32>
    %1 = vector.shape_cast %0 : vector<1x5x768xf32> to vector<5x768xf32>
    %c0_2 = arith.constant 0 : index
    %c0_3 = arith.constant 0 : index
    %2 = vector.load %arg2[%c0_2, %c0_3] : memref<768x64xf32, #tpu.memory_space<vmem>>, vector<768x64xf32>
    %cst = arith.constant dense<0.000000e+00> : vector<5x64xf32>
    %3 = tpu.matmul %1, %2, %cst {dimension_numbers = #tpu.dot_dimension_numbers<[1], [0], [0], [1], [0, 0, 1, 1], [], []>} : vector<5x768xf32>, vector<768x64xf32>, vector<5x64xf32> -> vector<5x64xf32>
    %c0_4 = arith.constant 0 : index
    %c0_5 = arith.constant 0 : index
    %4 = vector.load %arg3[%c0_4, %c0_5] : memref<5x64xf32, #tpu.memory_space<vmem>>, vector<5x64xf32>
    %5 = arith.addf %3, %4 : vector<5x64xf32>
    %c0_6 = arith.constant 0 : index
    %c0_7 = arith.constant 0 : index
    %c0_8 = arith.constant 0 : index
    %6 = vector.load %arg6[%c0_6, %c0_7, %c0_8] : memref<2x8x256xf32, #tpu.memory_space<vmem>>, vector<1x1x64xf32>
    %7 = vector.shape_cast %6 : vector<1x1x64xf32> to vector<1x64xf32>
    %c0_9 = arith.constant 0 : index
    %c1 = arith.constant 1 : index
    %c0_10 = arith.constant 0 : index
    %8 = vector.load %arg6[%c0_9, %c1, %c0_10] : memref<2x8x256xf32, #tpu.memory_space<vmem>>, vector<1x1x64xf32>
    %9 = vector.shape_cast %8 : vector<1x1x64xf32> to vector<1x64xf32>
    %c0_11 = arith.constant 0 : index
    %c2 = arith.constant 2 : index
    %c0_12 = arith.constant 0 : index
    %10 = vector.load %arg6[%c0_11, %c2, %c0_12] : memref<2x8x256xf32, #tpu.memory_space<vmem>>, vector<1x1x192xf32>
    %11 = vector.shape_cast %10 : vector<1x1x192xf32> to vector<1x192xf32>
    %c0_13 = arith.constant 0 : index
    %c3 = arith.constant 3 : index
    %c0_14 = arith.constant 0 : index
    %12 = vector.load %arg6[%c0_13, %c3, %c0_14] : memref<2x8x256xf32, #tpu.memory_space<vmem>>, vector<1x1x64xf32>
    %13 = vector.shape_cast %12 : vector<1x1x64xf32> to vector<1x64xf32>
    %c0_15 = arith.constant 0 : index
    %c4 = arith.constant 4 : index
    %c0_16 = arith.constant 0 : index
    %14 = vector.load %arg6[%c0_15, %c4, %c0_16] : memref<2x8x256xf32, #tpu.memory_space<vmem>>, vector<1x1x64xf32>
    %15 = vector.shape_cast %14 : vector<1x1x64xf32> to vector<1x64xf32>
    %c0_17 = arith.constant 0 : index
    %c5 = arith.constant 5 : index
    %c0_18 = arith.constant 0 : index
    %16 = vector.load %arg6[%c0_17, %c5, %c0_18] : memref<2x8x256xf32, #tpu.memory_space<vmem>>, vector<1x1x64xf32>
    %17 = vector.shape_cast %16 : vector<1x1x64xf32> to vector<1x64xf32>
    %c0_19 = arith.constant 0 : index
    %c6 = arith.constant 6 : index
    %c0_20 = arith.constant 0 : index
    %18 = vector.load %arg6[%c0_19, %c6, %c0_20] : memref<2x8x256xf32, #tpu.memory_space<vmem>>, vector<1x1x256xf32>
    %19 = vector.shape_cast %18 : vector<1x1x256xf32> to vector<1x256xf32>
    %c0_21 = arith.constant 0 : index
    %c7 = arith.constant 7 : index
    %c0_22 = arith.constant 0 : index
    %20 = vector.load %arg6[%c0_21, %c7, %c0_22] : memref<2x8x256xf32, #tpu.memory_space<vmem>>, vector<1x1x64xf32>
    %21 = vector.shape_cast %20 : vector<1x1x64xf32> to vector<1x64xf32>
    %c0_23 = arith.constant 0 : index
    %c0_24 = arith.constant 0 : index
    %c0_25 = arith.constant 0 : index
    %22 = vector.load %arg4[%c0_23, %c0_24, %c0_25] : memref<2x64x512xf32, #tpu.memory_space<vmem>>, vector<1x64x192xf32>
    %23 = vector.shape_cast %22 : vector<1x64x192xf32> to vector<64x192xf32>
    %c0_26 = arith.constant 0 : index
    %c0_27 = arith.constant 0 : index
    %c192 = arith.constant 192 : index
    %24 = vector.load %arg4[%c0_26, %c0_27, %c192] : memref<2x64x512xf32, #tpu.memory_space<vmem>>, vector<1x64x64xf32>
    %25 = vector.shape_cast %24 : vector<1x64x64xf32> to vector<64x64xf32>
    %c0_28 = arith.constant 0 : index
    %c0_29 = arith.constant 0 : index
    %c256 = arith.constant 256 : index
    %26 = vector.load %arg4[%c0_28, %c0_29, %c256] : memref<2x64x512xf32, #tpu.memory_space<vmem>>, vector<1x64x256xf32>
    %27 = vector.shape_cast %26 : vector<1x64x256xf32> to vector<64x256xf32>
    %cst_30 = arith.constant dense<0.000000e+00> : vector<5xf32>
    %28 = vector.multi_reduction <add>, %5, %cst_30 [1] : vector<5x64xf32> to vector<5xf32>
    %29 = vector.shape_cast %28 : vector<5xf32> to vector<5x1xf32>
    %cst_31 = arith.constant 6.400000e+01 : f32
    %30 = vector.broadcast %cst_31 : f32 to vector<5x1xf32>
    %31 = arith.divf %29, %30 : vector<5x1xf32>
    %32 = vector.broadcast %31 : vector<5x1xf32> to vector<5x64xf32>
    %33 = arith.subf %5, %32 : vector<5x64xf32>
    %34 = arith.mulf %33, %33 : vector<5x64xf32>
    %cst_32 = arith.constant dense<0.000000e+00> : vector<5xf32>
    %35 = vector.multi_reduction <add>, %34, %cst_32 [1] : vector<5x64xf32> to vector<5xf32>
    %36 = vector.shape_cast %35 : vector<5xf32> to vector<5x1xf32>
    %cst_33 = arith.constant 6.400000e+01 : f32
    %37 = vector.broadcast %cst_33 : f32 to vector<5x1xf32>
    %38 = arith.divf %36, %37 : vector<5x1xf32>
    %cst_34 = arith.constant 9.99999997E-7 : f32
    %39 = vector.broadcast %cst_34 : f32 to vector<5x1xf32>
    %40 = arith.addf %38, %39 : vector<5x1xf32>
    %41 = math.rsqrt %40 : vector<5x1xf32>
    %42 = vector.broadcast %41 : vector<5x1xf32> to vector<5x64xf32>
    %43 = arith.mulf %33, %42 : vector<5x64xf32>
    %44 = vector.broadcast %7 : vector<1x64xf32> to vector<5x64xf32>
    %45 = arith.mulf %43, %44 : vector<5x64xf32>
    %46 = vector.broadcast %9 : vector<1x64xf32> to vector<5x64xf32>
    %47 = arith.addf %45, %46 : vector<5x64xf32>
    %cst_35 = arith.constant dense<0.000000e+00> : vector<5x192xf32>
    %48 = tpu.matmul %47, %23, %cst_35 {dimension_numbers = #tpu.dot_dimension_numbers<[1], [0], [0], [1], [0, 0, 1, 1], [], []>} : vector<5x64xf32>, vector<64x192xf32>, vector<5x192xf32> -> vector<5x192xf32>
    %49 = vector.broadcast %11 : vector<1x192xf32> to vector<5x192xf32>
    %50 = arith.addf %48, %49 : vector<5x192xf32>
    %cst_36 = arith.constant 0.000000e+00 : f32
    %51 = vector.broadcast %cst_36 : f32 to vector<5x64xf32>
    %52 = vector.extract_strided_slice %50 {offsets = [0, 0], sizes = [5, 32], strides = [1, 1]} : vector<5x192xf32> to vector<5x32xf32>
    %53 = vector.extract_strided_slice %50 {offsets = [0, 64], sizes = [5, 32], strides = [1, 1]} : vector<5x192xf32> to vector<5x32xf32>
    %54 = vector.extract_strided_slice %50 {offsets = [0, 128], sizes = [5, 32], strides = [1, 1]} : vector<5x192xf32> to vector<5x32xf32>
    %cst_37 = arith.constant dense<0.000000e+00> : vector<5x5xf32>
    %55 = tpu.matmul %52, %53, %cst_37 {dimension_numbers = #tpu.dot_dimension_numbers<[1], [1], [0], [0], [0, 0, 1, 0], [], []>} : vector<5x32xf32>, vector<5x32xf32>, vector<5x5xf32> -> vector<5x5xf32>
    %cst_38 = arith.constant dense<0xFF800000> : vector<5xf32>
    %56 = vector.multi_reduction <maximumf>, %55, %cst_38 [1] : vector<5x5xf32> to vector<5xf32>
    %57 = vector.shape_cast %56 : vector<5xf32> to vector<5x1xf32>
    %58 = vector.broadcast %57 : vector<5x1xf32> to vector<5x5xf32>
    %59 = arith.subf %55, %58 : vector<5x5xf32>
    %60 = math.exp %59 : vector<5x5xf32>
    %cst_39 = arith.constant dense<0.000000e+00> : vector<5xf32>
    %61 = vector.multi_reduction <add>, %60, %cst_39 [1] : vector<5x5xf32> to vector<5xf32>
    %62 = vector.shape_cast %61 : vector<5xf32> to vector<5x1xf32>
    %63 = tpu.reciprocal %62 : vector<5x1xf32> -> vector<5x1xf32>
    %64 = vector.broadcast %63 : vector<5x1xf32> to vector<5x5xf32>
    %65 = arith.mulf %60, %64 : vector<5x5xf32>
    %cst_40 = arith.constant dense<0.000000e+00> : vector<5x32xf32>
    %66 = tpu.matmul %65, %54, %cst_40 {dimension_numbers = #tpu.dot_dimension_numbers<[1], [0], [0], [1], [0, 0, 1, 1], [], []>} : vector<5x5xf32>, vector<5x32xf32>, vector<5x32xf32> -> vector<5x32xf32>
    %67 = vector.extract_strided_slice %25 {offsets = [0, 0], sizes = [32, 64], strides = [1, 1]} : vector<64x64xf32> to vector<32x64xf32>
    %cst_41 = arith.constant dense<0.000000e+00> : vector<5x64xf32>
    %68 = tpu.matmul %66, %67, %cst_41 {dimension_numbers = #tpu.dot_dimension_numbers<[1], [0], [0], [1], [0, 0, 1, 1], [], []>} : vector<5x32xf32>, vector<32x64xf32>, vector<5x64xf32> -> vector<5x64xf32>
    %69 = arith.addf %51, %68 : vector<5x64xf32>
    %70 = vector.extract_strided_slice %50 {offsets = [0, 32], sizes = [5, 32], strides = [1, 1]} : vector<5x192xf32> to vector<5x32xf32>
    %71 = vector.extract_strided_slice %50 {offsets = [0, 96], sizes = [5, 32], strides = [1, 1]} : vector<5x192xf32> to vector<5x32xf32>
    %72 = vector.extract_strided_slice %50 {offsets = [0, 160], sizes = [5, 32], strides = [1, 1]} : vector<5x192xf32> to vector<5x32xf32>
    %cst_42 = arith.constant dense<0.000000e+00> : vector<5x5xf32>
    %73 = tpu.matmul %70, %71, %cst_42 {dimension_numbers = #tpu.dot_dimension_numbers<[1], [1], [0], [0], [0, 0, 1, 0], [], []>} : vector<5x32xf32>, vector<5x32xf32>, vector<5x5xf32> -> vector<5x5xf32>
    %cst_43 = arith.constant dense<0xFF800000> : vector<5xf32>
    %74 = vector.multi_reduction <maximumf>, %73, %cst_43 [1] : vector<5x5xf32> to vector<5xf32>
    %75 = vector.shape_cast %74 : vector<5xf32> to vector<5x1xf32>
    %76 = vector.broadcast %75 : vector<5x1xf32> to vector<5x5xf32>
    %77 = arith.subf %73, %76 : vector<5x5xf32>
    %78 = math.exp %77 : vector<5x5xf32>
    %cst_44 = arith.constant dense<0.000000e+00> : vector<5xf32>
    %79 = vector.multi_reduction <add>, %78, %cst_44 [1] : vector<5x5xf32> to vector<5xf32>
    %80 = vector.shape_cast %79 : vector<5xf32> to vector<5x1xf32>
    %81 = tpu.reciprocal %80 : vector<5x1xf32> -> vector<5x1xf32>
    %82 = vector.broadcast %81 : vector<5x1xf32> to vector<5x5xf32>
    %83 = arith.mulf %78, %82 : vector<5x5xf32>
    %cst_45 = arith.constant dense<0.000000e+00> : vector<5x32xf32>
    %84 = tpu.matmul %83, %72, %cst_45 {dimension_numbers = #tpu.dot_dimension_numbers<[1], [0], [0], [1], [0, 0, 1, 1], [], []>} : vector<5x5xf32>, vector<5x32xf32>, vector<5x32xf32> -> vector<5x32xf32>
    %85 = vector.extract_strided_slice %25 {offsets = [32, 0], sizes = [32, 64], strides = [1, 1]} : vector<64x64xf32> to vector<32x64xf32>
    %cst_46 = arith.constant dense<0.000000e+00> : vector<5x64xf32>
    %86 = tpu.matmul %84, %85, %cst_46 {dimension_numbers = #tpu.dot_dimension_numbers<[1], [0], [0], [1], [0, 0, 1, 1], [], []>} : vector<5x32xf32>, vector<32x64xf32>, vector<5x64xf32> -> vector<5x64xf32>
    %87 = arith.addf %69, %86 : vector<5x64xf32>
    %88 = arith.addf %5, %87 : vector<5x64xf32>
    %89 = vector.broadcast %13 : vector<1x64xf32> to vector<5x64xf32>
    %90 = arith.addf %88, %89 : vector<5x64xf32>
    %cst_47 = arith.constant dense<0.000000e+00> : vector<5xf32>
    %91 = vector.multi_reduction <add>, %90, %cst_47 [1] : vector<5x64xf32> to vector<5xf32>
    %92 = vector.shape_cast %91 : vector<5xf32> to vector<5x1xf32>
    %cst_48 = arith.constant 6.400000e+01 : f32
    %93 = vector.broadcast %cst_48 : f32 to vector<5x1xf32>
    %94 = arith.divf %92, %93 : vector<5x1xf32>
    %95 = vector.broadcast %94 : vector<5x1xf32> to vector<5x64xf32>
    %96 = arith.subf %90, %95 : vector<5x64xf32>
    %97 = arith.mulf %96, %96 : vector<5x64xf32>
    %cst_49 = arith.constant dense<0.000000e+00> : vector<5xf32>
    %98 = vector.multi_reduction <add>, %97, %cst_49 [1] : vector<5x64xf32> to vector<5xf32>
    %99 = vector.shape_cast %98 : vector<5xf32> to vector<5x1xf32>
    %cst_50 = arith.constant 6.400000e+01 : f32
    %100 = vector.broadcast %cst_50 : f32 to vector<5x1xf32>
    %101 = arith.divf %99, %100 : vector<5x1xf32>
    %cst_51 = arith.constant 9.99999997E-7 : f32
    %102 = vector.broadcast %cst_51 : f32 to vector<5x1xf32>
    %103 = arith.addf %101, %102 : vector<5x1xf32>
    %104 = math.rsqrt %103 : vector<5x1xf32>
    %105 = vector.broadcast %104 : vector<5x1xf32> to vector<5x64xf32>
    %106 = arith.mulf %96, %105 : vector<5x64xf32>
    %107 = vector.broadcast %15 : vector<1x64xf32> to vector<5x64xf32>
    %108 = arith.mulf %106, %107 : vector<5x64xf32>
    %109 = vector.broadcast %17 : vector<1x64xf32> to vector<5x64xf32>
    %110 = arith.addf %108, %109 : vector<5x64xf32>
    %cst_52 = arith.constant dense<0.000000e+00> : vector<5x256xf32>
    %111 = tpu.matmul %110, %27, %cst_52 {dimension_numbers = #tpu.dot_dimension_numbers<[1], [0], [0], [1], [0, 0, 1, 1], [], []>} : vector<5x64xf32>, vector<64x256xf32>, vector<5x256xf32> -> vector<5x256xf32>
    %112 = vector.broadcast %19 : vector<1x256xf32> to vector<5x256xf32>
    %113 = arith.addf %111, %112 : vector<5x256xf32>
    %cst_53 = arith.constant 5.000000e-01 : f32
    %114 = vector.broadcast %cst_53 : f32 to vector<5x256xf32>
    %115 = arith.mulf %114, %113 : vector<5x256xf32>
    %cst_54 = arith.constant 0.707106769 : f32
    %116 = vector.broadcast %cst_54 : f32 to vector<5x256xf32>
    %117 = arith.mulf %113, %116 : vector<5x256xf32>
    %118 = math.erf %117 : vector<5x256xf32>
    %cst_55 = arith.constant 1.000000e+00 : f32
    %119 = vector.broadcast %cst_55 : f32 to vector<5x256xf32>
    %120 = arith.addf %119, %118 : vector<5x256xf32>
    %121 = arith.mulf %115, %120 : vector<5x256xf32>
    %c0_56 = arith.constant 0 : index
    %c0_57 = arith.constant 0 : index
    %c0_58 = arith.constant 0 : index
    %122 = vector.load %arg5[%c0_56, %c0_57, %c0_58] : memref<2x256x64xf32, #tpu.memory_space<vmem>>, vector<1x256x64xf32>
    %123 = vector.shape_cast %122 : vector<1x256x64xf32> to vector<256x64xf32>
    %cst_59 = arith.constant dense<0.000000e+00> : vector<5x64xf32>
    %124 = tpu.matmul %121, %123, %cst_59 {dimension_numbers = #tpu.dot_dimension_numbers<[1], [0], [0], [1], [0, 0, 1, 1], [], []>} : vector<5x256xf32>, vector<256x64xf32>, vector<5x64xf32> -> vector<5x64xf32>
    %125 = arith.addf %90, %124 : vector<5x64xf32>
    %126 = vector.broadcast %21 : vector<1x64xf32> to vector<5x64xf32>
    %127 = arith.addf %125, %126 : vector<5x64xf32>
    %c1_60 = arith.constant 1 : index
    %c0_61 = arith.constant 0 : index
    %c0_62 = arith.constant 0 : index
    %128 = vector.load %arg6[%c1_60, %c0_61, %c0_62] : memref<2x8x256xf32, #tpu.memory_space<vmem>>, vector<1x1x64xf32>
    %129 = vector.shape_cast %128 : vector<1x1x64xf32> to vector<1x64xf32>
    %c1_63 = arith.constant 1 : index
    %c1_64 = arith.constant 1 : index
    %c0_65 = arith.constant 0 : index
    %130 = vector.load %arg6[%c1_63, %c1_64, %c0_65] : memref<2x8x256xf32, #tpu.memory_space<vmem>>, vector<1x1x64xf32>
    %131 = vector.shape_cast %130 : vector<1x1x64xf32> to vector<1x64xf32>
    %c1_66 = arith.constant 1 : index
    %c2_67 = arith.constant 2 : index
    %c0_68 = arith.constant 0 : index
    %132 = vector.load %arg6[%c1_66, %c2_67, %c0_68] : memref<2x8x256xf32, #tpu.memory_space<vmem>>, vector<1x1x192xf32>
    %133 = vector.shape_cast %132 : vector<1x1x192xf32> to vector<1x192xf32>
    %c1_69 = arith.constant 1 : index
    %c3_70 = arith.constant 3 : index
    %c0_71 = arith.constant 0 : index
    %134 = vector.load %arg6[%c1_69, %c3_70, %c0_71] : memref<2x8x256xf32, #tpu.memory_space<vmem>>, vector<1x1x64xf32>
    %135 = vector.shape_cast %134 : vector<1x1x64xf32> to vector<1x64xf32>
    %c1_72 = arith.constant 1 : index
    %c4_73 = arith.constant 4 : index
    %c0_74 = arith.constant 0 : index
    %136 = vector.load %arg6[%c1_72, %c4_73, %c0_74] : memref<2x8x256xf32, #tpu.memory_space<vmem>>, vector<1x1x64xf32>
    %137 = vector.shape_cast %136 : vector<1x1x64xf32> to vector<1x64xf32>
    %c1_75 = arith.constant 1 : index
    %c5_76 = arith.constant 5 : index
    %c0_77 = arith.constant 0 : index
    %138 = vector.load %arg6[%c1_75, %c5_76, %c0_77] : memref<2x8x256xf32, #tpu.memory_space<vmem>>, vector<1x1x64xf32>
    %139 = vector.shape_cast %138 : vector<1x1x64xf32> to vector<1x64xf32>
    %c1_78 = arith.constant 1 : index
    %c6_79 = arith.constant 6 : index
    %c0_80 = arith.constant 0 : index
    %140 = vector.load %arg6[%c1_78, %c6_79, %c0_80] : memref<2x8x256xf32, #tpu.memory_space<vmem>>, vector<1x1x256xf32>
    %141 = vector.shape_cast %140 : vector<1x1x256xf32> to vector<1x256xf32>
    %c1_81 = arith.constant 1 : index
    %c7_82 = arith.constant 7 : index
    %c0_83 = arith.constant 0 : index
    %142 = vector.load %arg6[%c1_81, %c7_82, %c0_83] : memref<2x8x256xf32, #tpu.memory_space<vmem>>, vector<1x1x64xf32>
    %143 = vector.shape_cast %142 : vector<1x1x64xf32> to vector<1x64xf32>
    %c1_84 = arith.constant 1 : index
    %c0_85 = arith.constant 0 : index
    %c0_86 = arith.constant 0 : index
    %144 = vector.load %arg4[%c1_84, %c0_85, %c0_86] : memref<2x64x512xf32, #tpu.memory_space<vmem>>, vector<1x64x192xf32>
    %145 = vector.shape_cast %144 : vector<1x64x192xf32> to vector<64x192xf32>
    %c1_87 = arith.constant 1 : index
    %c0_88 = arith.constant 0 : index
    %c192_89 = arith.constant 192 : index
    %146 = vector.load %arg4[%c1_87, %c0_88, %c192_89] : memref<2x64x512xf32, #tpu.memory_space<vmem>>, vector<1x64x64xf32>
    %147 = vector.shape_cast %146 : vector<1x64x64xf32> to vector<64x64xf32>
    %c1_90 = arith.constant 1 : index
    %c0_91 = arith.constant 0 : index
    %c256_92 = arith.constant 256 : index
    %148 = vector.load %arg4[%c1_90, %c0_91, %c256_92] : memref<2x64x512xf32, #tpu.memory_space<vmem>>, vector<1x64x256xf32>
    %149 = vector.shape_cast %148 : vector<1x64x256xf32> to vector<64x256xf32>
    %cst_93 = arith.constant dense<0.000000e+00> : vector<5xf32>
    %150 = vector.multi_reduction <add>, %127, %cst_93 [1] : vector<5x64xf32> to vector<5xf32>
    %151 = vector.shape_cast %150 : vector<5xf32> to vector<5x1xf32>
    %cst_94 = arith.constant 6.400000e+01 : f32
    %152 = vector.broadcast %cst_94 : f32 to vector<5x1xf32>
    %153 = arith.divf %151, %152 : vector<5x1xf32>
    %154 = vector.broadcast %153 : vector<5x1xf32> to vector<5x64xf32>
    %155 = arith.subf %127, %154 : vector<5x64xf32>
    %156 = arith.mulf %155, %155 : vector<5x64xf32>
    %cst_95 = arith.constant dense<0.000000e+00> : vector<5xf32>
    %157 = vector.multi_reduction <add>, %156, %cst_95 [1] : vector<5x64xf32> to vector<5xf32>
    %158 = vector.shape_cast %157 : vector<5xf32> to vector<5x1xf32>
    %cst_96 = arith.constant 6.400000e+01 : f32
    %159 = vector.broadcast %cst_96 : f32 to vector<5x1xf32>
    %160 = arith.divf %158, %159 : vector<5x1xf32>
    %cst_97 = arith.constant 9.99999997E-7 : f32
    %161 = vector.broadcast %cst_97 : f32 to vector<5x1xf32>
    %162 = arith.addf %160, %161 : vector<5x1xf32>
    %163 = math.rsqrt %162 : vector<5x1xf32>
    %164 = vector.broadcast %163 : vector<5x1xf32> to vector<5x64xf32>
    %165 = arith.mulf %155, %164 : vector<5x64xf32>
    %166 = vector.broadcast %129 : vector<1x64xf32> to vector<5x64xf32>
    %167 = arith.mulf %165, %166 : vector<5x64xf32>
    %168 = vector.broadcast %131 : vector<1x64xf32> to vector<5x64xf32>
    %169 = arith.addf %167, %168 : vector<5x64xf32>
    %cst_98 = arith.constant dense<0.000000e+00> : vector<5x192xf32>
    %170 = tpu.matmul %169, %145, %cst_98 {dimension_numbers = #tpu.dot_dimension_numbers<[1], [0], [0], [1], [0, 0, 1, 1], [], []>} : vector<5x64xf32>, vector<64x192xf32>, vector<5x192xf32> -> vector<5x192xf32>
    %171 = vector.broadcast %133 : vector<1x192xf32> to vector<5x192xf32>
    %172 = arith.addf %170, %171 : vector<5x192xf32>
    %cst_99 = arith.constant 0.000000e+00 : f32
    %173 = vector.broadcast %cst_99 : f32 to vector<5x64xf32>
    %174 = vector.extract_strided_slice %172 {offsets = [0, 0], sizes = [5, 32], strides = [1, 1]} : vector<5x192xf32> to vector<5x32xf32>
    %175 = vector.extract_strided_slice %172 {offsets = [0, 64], sizes = [5, 32], strides = [1, 1]} : vector<5x192xf32> to vector<5x32xf32>
    %176 = vector.extract_strided_slice %172 {offsets = [0, 128], sizes = [5, 32], strides = [1, 1]} : vector<5x192xf32> to vector<5x32xf32>
    %cst_100 = arith.constant dense<0.000000e+00> : vector<5x5xf32>
    %177 = tpu.matmul %174, %175, %cst_100 {dimension_numbers = #tpu.dot_dimension_numbers<[1], [1], [0], [0], [0, 0, 1, 0], [], []>} : vector<5x32xf32>, vector<5x32xf32>, vector<5x5xf32> -> vector<5x5xf32>
    %cst_101 = arith.constant dense<0xFF800000> : vector<5xf32>
    %178 = vector.multi_reduction <maximumf>, %177, %cst_101 [1] : vector<5x5xf32> to vector<5xf32>
    %179 = vector.shape_cast %178 : vector<5xf32> to vector<5x1xf32>
    %180 = vector.broadcast %179 : vector<5x1xf32> to vector<5x5xf32>
    %181 = arith.subf %177, %180 : vector<5x5xf32>
    %182 = math.exp %181 : vector<5x5xf32>
    %cst_102 = arith.constant dense<0.000000e+00> : vector<5xf32>
    %183 = vector.multi_reduction <add>, %182, %cst_102 [1] : vector<5x5xf32> to vector<5xf32>
    %184 = vector.shape_cast %183 : vector<5xf32> to vector<5x1xf32>
    %185 = tpu.reciprocal %184 : vector<5x1xf32> -> vector<5x1xf32>
    %186 = vector.broadcast %185 : vector<5x1xf32> to vector<5x5xf32>
    %187 = arith.mulf %182, %186 : vector<5x5xf32>
    %cst_103 = arith.constant dense<0.000000e+00> : vector<5x32xf32>
    %188 = tpu.matmul %187, %176, %cst_103 {dimension_numbers = #tpu.dot_dimension_numbers<[1], [0], [0], [1], [0, 0, 1, 1], [], []>} : vector<5x5xf32>, vector<5x32xf32>, vector<5x32xf32> -> vector<5x32xf32>
    %189 = vector.extract_strided_slice %147 {offsets = [0, 0], sizes = [32, 64], strides = [1, 1]} : vector<64x64xf32> to vector<32x64xf32>
    %cst_104 = arith.constant dense<0.000000e+00> : vector<5x64xf32>
    %190 = tpu.matmul %188, %189, %cst_104 {dimension_numbers = #tpu.dot_dimension_numbers<[1], [0], [0], [1], [0, 0, 1, 1], [], []>} : vector<5x32xf32>, vector<32x64xf32>, vector<5x64xf32> -> vector<5x64xf32>
    %191 = arith.addf %173, %190 : vector<5x64xf32>
    %192 = vector.extract_strided_slice %172 {offsets = [0, 32], sizes = [5, 32], strides = [1, 1]} : vector<5x192xf32> to vector<5x32xf32>
    %193 = vector.extract_strided_slice %172 {offsets = [0, 96], sizes = [5, 32], strides = [1, 1]} : vector<5x192xf32> to vector<5x32xf32>
    %194 = vector.extract_strided_slice %172 {offsets = [0, 160], sizes = [5, 32], strides = [1, 1]} : vector<5x192xf32> to vector<5x32xf32>
    %cst_105 = arith.constant dense<0.000000e+00> : vector<5x5xf32>
    %195 = tpu.matmul %192, %193, %cst_105 {dimension_numbers = #tpu.dot_dimension_numbers<[1], [1], [0], [0], [0, 0, 1, 0], [], []>} : vector<5x32xf32>, vector<5x32xf32>, vector<5x5xf32> -> vector<5x5xf32>
    %cst_106 = arith.constant dense<0xFF800000> : vector<5xf32>
    %196 = vector.multi_reduction <maximumf>, %195, %cst_106 [1] : vector<5x5xf32> to vector<5xf32>
    %197 = vector.shape_cast %196 : vector<5xf32> to vector<5x1xf32>
    %198 = vector.broadcast %197 : vector<5x1xf32> to vector<5x5xf32>
    %199 = arith.subf %195, %198 : vector<5x5xf32>
    %200 = math.exp %199 : vector<5x5xf32>
    %cst_107 = arith.constant dense<0.000000e+00> : vector<5xf32>
    %201 = vector.multi_reduction <add>, %200, %cst_107 [1] : vector<5x5xf32> to vector<5xf32>
    %202 = vector.shape_cast %201 : vector<5xf32> to vector<5x1xf32>
    %203 = tpu.reciprocal %202 : vector<5x1xf32> -> vector<5x1xf32>
    %204 = vector.broadcast %203 : vector<5x1xf32> to vector<5x5xf32>
    %205 = arith.mulf %200, %204 : vector<5x5xf32>
    %cst_108 = arith.constant dense<0.000000e+00> : vector<5x32xf32>
    %206 = tpu.matmul %205, %194, %cst_108 {dimension_numbers = #tpu.dot_dimension_numbers<[1], [0], [0], [1], [0, 0, 1, 1], [], []>} : vector<5x5xf32>, vector<5x32xf32>, vector<5x32xf32> -> vector<5x32xf32>
    %207 = vector.extract_strided_slice %147 {offsets = [32, 0], sizes = [32, 64], strides = [1, 1]} : vector<64x64xf32> to vector<32x64xf32>
    %cst_109 = arith.constant dense<0.000000e+00> : vector<5x64xf32>
    %208 = tpu.matmul %206, %207, %cst_109 {dimension_numbers = #tpu.dot_dimension_numbers<[1], [0], [0], [1], [0, 0, 1, 1], [], []>} : vector<5x32xf32>, vector<32x64xf32>, vector<5x64xf32> -> vector<5x64xf32>
    %209 = arith.addf %191, %208 : vector<5x64xf32>
    %210 = arith.addf %127, %209 : vector<5x64xf32>
    %211 = vector.broadcast %135 : vector<1x64xf32> to vector<5x64xf32>
    %212 = arith.addf %210, %211 : vector<5x64xf32>
    %cst_110 = arith.constant dense<0.000000e+00> : vector<5xf32>
    %213 = vector.multi_reduction <add>, %212, %cst_110 [1] : vector<5x64xf32> to vector<5xf32>
    %214 = vector.shape_cast %213 : vector<5xf32> to vector<5x1xf32>
    %cst_111 = arith.constant 6.400000e+01 : f32
    %215 = vector.broadcast %cst_111 : f32 to vector<5x1xf32>
    %216 = arith.divf %214, %215 : vector<5x1xf32>
    %217 = vector.broadcast %216 : vector<5x1xf32> to vector<5x64xf32>
    %218 = arith.subf %212, %217 : vector<5x64xf32>
    %219 = arith.mulf %218, %218 : vector<5x64xf32>
    %cst_112 = arith.constant dense<0.000000e+00> : vector<5xf32>
    %220 = vector.multi_reduction <add>, %219, %cst_112 [1] : vector<5x64xf32> to vector<5xf32>
    %221 = vector.shape_cast %220 : vector<5xf32> to vector<5x1xf32>
    %cst_113 = arith.constant 6.400000e+01 : f32
    %222 = vector.broadcast %cst_113 : f32 to vector<5x1xf32>
    %223 = arith.divf %221, %222 : vector<5x1xf32>
    %cst_114 = arith.constant 9.99999997E-7 : f32
    %224 = vector.broadcast %cst_114 : f32 to vector<5x1xf32>
    %225 = arith.addf %223, %224 : vector<5x1xf32>
    %226 = math.rsqrt %225 : vector<5x1xf32>
    %227 = vector.broadcast %226 : vector<5x1xf32> to vector<5x64xf32>
    %228 = arith.mulf %218, %227 : vector<5x64xf32>
    %229 = vector.broadcast %137 : vector<1x64xf32> to vector<5x64xf32>
    %230 = arith.mulf %228, %229 : vector<5x64xf32>
    %231 = vector.broadcast %139 : vector<1x64xf32> to vector<5x64xf32>
    %232 = arith.addf %230, %231 : vector<5x64xf32>
    %cst_115 = arith.constant dense<0.000000e+00> : vector<5x256xf32>
    %233 = tpu.matmul %232, %149, %cst_115 {dimension_numbers = #tpu.dot_dimension_numbers<[1], [0], [0], [1], [0, 0, 1, 1], [], []>} : vector<5x64xf32>, vector<64x256xf32>, vector<5x256xf32> -> vector<5x256xf32>
    %234 = vector.broadcast %141 : vector<1x256xf32> to vector<5x256xf32>
    %235 = arith.addf %233, %234 : vector<5x256xf32>
    %cst_116 = arith.constant 5.000000e-01 : f32
    %236 = vector.broadcast %cst_116 : f32 to vector<5x256xf32>
    %237 = arith.mulf %236, %235 : vector<5x256xf32>
    %cst_117 = arith.constant 0.707106769 : f32
    %238 = vector.broadcast %cst_117 : f32 to vector<5x256xf32>
    %239 = arith.mulf %235, %238 : vector<5x256xf32>
    %240 = math.erf %239 : vector<5x256xf32>
    %cst_118 = arith.constant 1.000000e+00 : f32
    %241 = vector.broadcast %cst_118 : f32 to vector<5x256xf32>
    %242 = arith.addf %241, %240 : vector<5x256xf32>
    %243 = arith.mulf %237, %242 : vector<5x256xf32>
    %c1_119 = arith.constant 1 : index
    %c0_120 = arith.constant 0 : index
    %c0_121 = arith.constant 0 : index
    %244 = vector.load %arg5[%c1_119, %c0_120, %c0_121] : memref<2x256x64xf32, #tpu.memory_space<vmem>>, vector<1x256x64xf32>
    %245 = vector.shape_cast %244 : vector<1x256x64xf32> to vector<256x64xf32>
    %cst_122 = arith.constant dense<0.000000e+00> : vector<5x64xf32>
    %246 = tpu.matmul %243, %245, %cst_122 {dimension_numbers = #tpu.dot_dimension_numbers<[1], [0], [0], [1], [0, 0, 1, 1], [], []>} : vector<5x256xf32>, vector<256x64xf32>, vector<5x64xf32> -> vector<5x64xf32>
    %247 = arith.addf %212, %246 : vector<5x64xf32>
    %248 = vector.broadcast %143 : vector<1x64xf32> to vector<5x64xf32>
    %249 = arith.addf %247, %248 : vector<5x64xf32>
    %c65 = arith.constant 65 : index
    %c0_123 = arith.constant 0 : index
    %250 = vector.load %arg7[%c65, %c0_123] : memref<67x128xf32, #tpu.memory_space<vmem>>, vector<1x64xf32>
    %c66 = arith.constant 66 : index
    %c0_124 = arith.constant 0 : index
    %251 = vector.load %arg7[%c66, %c0_124] : memref<67x128xf32, #tpu.memory_space<vmem>>, vector<1x64xf32>
    %252 = vector.extract_strided_slice %249 {offsets = [0, 0], sizes = [1, 64], strides = [1, 1]} : vector<5x64xf32> to vector<1x64xf32>
    %cst_125 = arith.constant dense<0.000000e+00> : vector<1xf32>
    %253 = vector.multi_reduction <add>, %252, %cst_125 [1] : vector<1x64xf32> to vector<1xf32>
    %254 = vector.shape_cast %253 : vector<1xf32> to vector<1x1xf32>
    %cst_126 = arith.constant 6.400000e+01 : f32
    %255 = vector.broadcast %cst_126 : f32 to vector<1x1xf32>
    %256 = arith.divf %254, %255 : vector<1x1xf32>
    %257 = vector.broadcast %256 : vector<1x1xf32> to vector<1x64xf32>
    %258 = arith.subf %252, %257 : vector<1x64xf32>
    %259 = arith.mulf %258, %258 : vector<1x64xf32>
    %cst_127 = arith.constant dense<0.000000e+00> : vector<1xf32>
    %260 = vector.multi_reduction <add>, %259, %cst_127 [1] : vector<1x64xf32> to vector<1xf32>
    %261 = vector.shape_cast %260 : vector<1xf32> to vector<1x1xf32>
    %cst_128 = arith.constant 6.400000e+01 : f32
    %262 = vector.broadcast %cst_128 : f32 to vector<1x1xf32>
    %263 = arith.divf %261, %262 : vector<1x1xf32>
    %cst_129 = arith.constant 9.99999997E-7 : f32
    %264 = vector.broadcast %cst_129 : f32 to vector<1x1xf32>
    %265 = arith.addf %263, %264 : vector<1x1xf32>
    %266 = math.rsqrt %265 : vector<1x1xf32>
    %267 = vector.broadcast %266 : vector<1x1xf32> to vector<1x64xf32>
    %268 = arith.mulf %258, %267 : vector<1x64xf32>
    %269 = arith.mulf %268, %250 : vector<1x64xf32>
    %270 = arith.addf %269, %251 : vector<1x64xf32>
    %c0_130 = arith.constant 0 : index
    %c0_131 = arith.constant 0 : index
    %271 = vector.load %arg7[%c0_130, %c0_131] : memref<67x128xf32, #tpu.memory_space<vmem>>, vector<64x128xf32>
    %cst_132 = arith.constant dense<0.000000e+00> : vector<1x128xf32>
    %272 = tpu.matmul %270, %271, %cst_132 {dimension_numbers = #tpu.dot_dimension_numbers<[1], [0], [0], [1], [0, 0, 1, 1], [], []>} : vector<1x64xf32>, vector<64x128xf32>, vector<1x128xf32> -> vector<1x128xf32>
    %c64 = arith.constant 64 : index
    %c0_133 = arith.constant 0 : index
    %273 = vector.load %arg7[%c64, %c0_133] : memref<67x128xf32, #tpu.memory_space<vmem>>, vector<1x128xf32>
    %274 = arith.addf %272, %273 : vector<1x128xf32>
    %275 = vector.shape_cast %274 : vector<1x128xf32> to vector<1x1x128xf32>
    %c0_134 = arith.constant 0 : index
    %c0_135 = arith.constant 0 : index
    %c0_136 = arith.constant 0 : index
    %276 = vector.load %arg8[%c0_134, %c0_135, %c0_136] : memref<1x1x128xf32, #tpu.memory_space<vmem>>, vector<1x1x128xf32>
    tpu.vector_store %arg8[%c0_134, %c0_135, %c0_136], %275 {strides = array<i32>} : memref<1x1x128xf32, #tpu.memory_space<vmem>>, vector<1x1x128xf32>,
    return
  }
  func.func @transform_0(%arg0: i32) -> (i32, i32, i32) {
    %c0_i32 = arith.constant 0 : i32
    %c0_i32_0 = arith.constant 0 : i32
    %c0_i32_1 = arith.constant 0 : i32
    return %arg0, %c0_i32, %c0_i32_0 : i32, i32, i32
  }
  func.func @transform_1(%arg0: i32) -> (i32, i32) {
    %c0_i32 = arith.constant 0 : i32
    %c0_i32_0 = arith.constant 0 : i32
    %c0_i32_1 = arith.constant 0 : i32
    return %c0_i32, %c0_i32_0 : i32, i32
  }
  func.func @transform_2(%arg0: i32) -> (i32, i32) {
    %c0_i32 = arith.constant 0 : i32
    %c0_i32_0 = arith.constant 0 : i32
    %c0_i32_1 = arith.constant 0 : i32
    return %c0_i32, %c0_i32_0 : i32, i32
  }
  func.func @transform_3(%arg0: i32) -> (i32, i32, i32) {
    %c0_i32 = arith.constant 0 : i32
    %c0_i32_0 = arith.constant 0 : i32
    %c0_i32_1 = arith.constant 0 : i32
    %c0_i32_2 = arith.constant 0 : i32
    return %c0_i32, %c0_i32_0, %c0_i32_1 : i32, i32, i32
  }
  func.func @transform_4(%arg0: i32) -> (i32, i32, i32) {
    %c0_i32 = arith.constant 0 : i32
    %c0_i32_0 = arith.constant 0 : i32
    %c0_i32_1 = arith.constant 0 : i32
    %c0_i32_2 = arith.constant 0 : i32
    return %c0_i32, %c0_i32_0, %c0_i32_1 : i32, i32, i32
  }
  func.func @transform_5(%arg0: i32) -> (i32, i32, i32) {
    %c0_i32 = arith.constant 0 : i32
    %c0_i32_0 = arith.constant 0 : i32
    %c0_i32_1 = arith.constant 0 : i32
    %c0_i32_2 = arith.constant 0 : i32
    return %c0_i32, %c0_i32_0, %c0_i32_1 : i32, i32, i32
  }
  func.func @transform_6(%arg0: i32) -> (i32, i32) {
    %c0_i32 = arith.constant 0 : i32
    %c0_i32_0 = arith.constant 0 : i32
    %c0_i32_1 = arith.constant 0 : i32
    return %c0_i32, %c0_i32_0 : i32, i32
  }
  func.func @transform_7(%arg0: i32) -> (i32, i32, i32) {
    %c0_i32 = arith.constant 0 : i32
    %c0_i32_0 = arith.constant 0 : i32
    %c0_i32_1 = arith.constant 0 : i32
    return %arg0, %c0_i32, %c0_i32_0 : i32, i32, i32
  }
}

</mosaic_0001>

<llo_original>
// kernel: vit_forward.1
$region0: #{vit_forward.1}
  #allocation0 [shape = 'u32[]', space=smem, size = 0x4, offset = 0x4, fixed_abs, tag = 'smem constant byte address 0x4 - core index']
  #allocation1 [shape = 'u32[144,128]{1,0:T(1,128)}', space=vmem, size = 0x12000, scoped, tag = 'internal scratch']
  %s0 = inlined_call_operand.vmem [shape: f32[2,5,768], index: 0, kind: input, shape index: {}]
  %s1 = inlined_call_operand.vmem [shape: f32[768,64], index: 1, kind: input, shape index: {}]
  %s2 = inlined_call_operand.vmem [shape: f32[5,64], index: 2, kind: input, shape index: {}]
  %s3 = inlined_call_operand.vmem [shape: f32[2,64,512], index: 3, kind: input, shape index: {}]
  %s4 = inlined_call_operand.vmem [shape: f32[2,256,64], index: 4, kind: input, shape index: {}]
  %s5 = inlined_call_operand.vmem [shape: f32[2,8,256], index: 5, kind: input, shape index: {}]
  %s6 = inlined_call_operand.vmem [shape: f32[67,128], index: 6, kind: input, shape index: {}]
  %s7 = inlined_call_operand.hbm [shape: f32[2,1,128], index: 7, kind: output, shape index: {}]
  %s8 = sld [smem:[#allocation0]]
  $region61: #{vit_forward.1} parent=0
    _
  %s10 = ssub.s32 1, %s8
  %s11 = scalar_select 0, %s10, %s8
  $region1: #{vit_forward.1} parent=0
    #allocation2 [shape = 'u8[1024]{0}', space=vmem, size = 0x400, scoped, tag = 'output window, operand 0']
    #allocation3 [shape = 's32[2]{0}', space=sflag, size = 0x8, scoped, tag = 'scoped memory for vit_forward.1']
    %12 = vsyncpa [#allocation3], 0
    %s13 = scalar_lea.sflag [#allocation3], 1
    %14 = vsyncpa %s13, 0
    loop: start=0, step=1, limit=4
    $region2: #{vit_forward.1} parent=1 // loop_pre_header
      _
    $region3: #{vit_forward.1} parent=1 // loop_header
      %s16 = sphi 0, %s20
      %p17 = scmp.ge.s32.totalorder %s16, 4
      %s26 = sphi 0, %s28
      %s29 = sphi 0, %s26
      %s30 = sphi 0, %s29
      %s46 = sphi 0, %s30
      %s50 = sphi 0, %s50
      %s52 = sphi 0, %s50
      %s53 = sphi 0, %s52
      %s67 = sphi 0, %s53
      %s71 = sphi 0, %s71
      %s73 = sphi 0, %s71
      %s74 = sphi 0, %s73
      %s88 = sphi 0, %s74
      %s92 = sphi 0, %s92
      %s94 = sphi 0, %s92
      %s95 = sphi 0, %s94
      %s109 = sphi 0, %s95
      %s113 = sphi 0, %s113
      %s115 = sphi 0, %s113
      %s116 = sphi 0, %s115
      %s130 = sphi 0, %s116
      %s134 = sphi 0, %s134
      %s136 = sphi 0, %s134
      %s137 = sphi 0, %s136
      %s151 = sphi 0, %s137
      %s155 = sphi 0, %s155
      %s157 = sphi 0, %s155
      %s158 = sphi 0, %s157
      %s172 = sphi 0, %s158
      %s178 = sphi 0, %s180
      %s181 = sphi 0, %s178
      %s182 = sphi 0, %s181
      %s198 = sphi 0, %s182
    $region4: #{vit_forward.1} parent=1 // loop_header_branch
      %19 = sbr.rel (%p17) target = $region8
    $region5: #{vit_forward.1} parent=1 // loop_body
      %s21 = ssub.s32 %s16, 1
      %s22 = ssub.s32 %s16, 2
      %s23 = sadd.s32 %s16, 1
      %s24 = ssub.s32 %s16, %s23
      %p25 = scmp.eq.s32.totalorder %s24, 0
      %s27 = sadd.s32 %s26, 1
      %s28 = scalar_select %p25, %s26, %s27
      %p31 = pneg %p25
      %p32 = scmp.eq.s32.totalorder %s16, 1
      %p33 = por %p31, %p32
      %p34 = scmp.ne.s32.totalorder %s26, %s29
      %p35 = scmp.eq.s32.totalorder %s16, 0
      %p36 = por %p34, %p35
      %p37 = scmp.ne.s32.totalorder %s26, %s29
      %p38 = scmp.eq.s32.totalorder %s21, 1
      %p39 = por %p37, %p38
      %p40 = scmp.ne.s32.totalorder %s29, %s30
      %p41 = scmp.eq.s32.totalorder %s21, 0
      %p42 = por %p40, %p41
      %p43 = scmp.ne.s32.totalorder %s29, %s30
      %p44 = scmp.eq.s32.totalorder %s22, 1
      %p45 = por %p43, %p44
      %p47 = scmp.ne.s32.totalorder %s30, %s46
      %p48 = scmp.eq.s32.totalorder %s22, 0
      %p49 = por %p47, %p48
      %s51 = sadd.s32 %s50, 1
      %p54 = scmp.eq.s32.totalorder %s16, 1
      %p55 = scmp.ne.s32.totalorder %s50, %s52
      %p56 = scmp.eq.s32.totalorder %s16, 0
      %p57 = por %p55, %p56
      %p58 = scmp.ne.s32.totalorder %s50, %s52
      %p59 = scmp.eq.s32.totalorder %s21, 1
      %p60 = por %p58, %p59
      %p61 = scmp.ne.s32.totalorder %s52, %s53
      %p62 = scmp.eq.s32.totalorder %s21, 0
      %p63 = por %p61, %p62
      %p64 = scmp.ne.s32.totalorder %s52, %s53
      %p65 = scmp.eq.s32.totalorder %s22, 1
      %p66 = por %p64, %p65
      %p68 = scmp.ne.s32.totalorder %s53, %s67
      %p69 = scmp.eq.s32.totalorder %s22, 0
      %p70 = por %p68, %p69
      %s72 = sadd.s32 %s71, 1
      %p75 = scmp.eq.s32.totalorder %s16, 1
      %p76 = scmp.ne.s32.totalorder %s71, %s73
      %p77 = scmp.eq.s32.totalorder %s16, 0
      %p78 = por %p76, %p77
      %p79 = scmp.ne.s32.totalorder %s71, %s73
      %p80 = scmp.eq.s32.totalorder %s21, 1
      %p81 = por %p79, %p80
      %p82 = scmp.ne.s32.totalorder %s73, %s74
      %p83 = scmp.eq.s32.totalorder %s21, 0
      %p84 = por %p82, %p83
      %p85 = scmp.ne.s32.totalorder %s73, %s74
      %p86 = scmp.eq.s32.totalorder %s22, 1
      %p87 = por %p85, %p86
      %p89 = scmp.ne.s32.totalorder %s74, %s88
      %p90 = scmp.eq.s32.totalorder %s22, 0
      %p91 = por %p89, %p90
      %s93 = sadd.s32 %s92, 1
      %p96 = scmp.eq.s32.totalorder %s16, 1
      %p97 = scmp.ne.s32.totalorder %s92, %s94
      %p98 = scmp.eq.s32.totalorder %s16, 0
      %p99 = por %p97, %p98
      %p100 = scmp.ne.s32.totalorder %s92, %s94
      %p101 = scmp.eq.s32.totalorder %s21, 1
      %p102 = por %p100, %p101
      %p103 = scmp.ne.s32.totalorder %s94, %s95
      %p104 = scmp.eq.s32.totalorder %s21, 0
      %p105 = por %p103, %p104
      %p106 = scmp.ne.s32.totalorder %s94, %s95
      %p107 = scmp.eq.s32.totalorder %s22, 1
      %p108 = por %p106, %p107
      %p110 = scmp.ne.s32.totalorder %s95, %s109
      %p111 = scmp.eq.s32.totalorder %s22, 0
      %p112 = por %p110, %p111
      %s114 = sadd.s32 %s113, 1
      %p117 = scmp.eq.s32.totalorder %s16, 1
      %p118 = scmp.ne.s32.totalorder %s113, %s115
      %p119 = scmp.eq.s32.totalorder %s16, 0
      %p120 = por %p118, %p119
      %p121 = scmp.ne.s32.totalorder %s113, %s115
      %p122 = scmp.eq.s32.totalorder %s21, 1
      %p123 = por %p121, %p122
      %p124 = scmp.ne.s32.totalorder %s115, %s116
      %p125 = scmp.eq.s32.totalorder %s21, 0
      %p126 = por %p124, %p125
      %p127 = scmp.ne.s32.totalorder %s115, %s116
      %p128 = scmp.eq.s32.totalorder %s22, 1
      %p129 = por %p127, %p128
      %p131 = scmp.ne.s32.totalorder %s116, %s130
      %p132 = scmp.eq.s32.totalorder %s22, 0
      %p133 = por %p131, %p132
      %s135 = sadd.s32 %s134, 1
      %p138 = scmp.eq.s32.totalorder %s16, 1
      %p139 = scmp.ne.s32.totalorder %s134, %s136
      %p140 = scmp.eq.s32.totalorder %s16, 0
      %p141 = por %p139, %p140
      %p142 = scmp.ne.s32.totalorder %s134, %s136
      %p143 = scmp.eq.s32.totalorder %s21, 1
      %p144 = por %p142, %p143
      %p145 = scmp.ne.s32.totalorder %s136, %s137
      %p146 = scmp.eq.s32.totalorder %s21, 0
      %p147 = por %p145, %p146
      %p148 = scmp.ne.s32.totalorder %s136, %s137
      %p149 = scmp.eq.s32.totalorder %s22, 1
      %p150 = por %p148, %p149
      %p152 = scmp.ne.s32.totalorder %s137, %s151
      %p153 = scmp.eq.s32.totalorder %s22, 0
      %p154 = por %p152, %p153
      %s156 = sadd.s32 %s155, 1
      %p159 = scmp.eq.s32.totalorder %s16, 1
      %p160 = scmp.ne.s32.totalorder %s155, %s157
      %p161 = scmp.eq.s32.totalorder %s16, 0
      %p162 = por %p160, %p161
      %p163 = scmp.ne.s32.totalorder %s155, %s157
      %p164 = scmp.eq.s32.totalorder %s21, 1
      %p165 = por %p163, %p164
      %p166 = scmp.ne.s32.totalorder %s157, %s158
      %p167 = scmp.eq.s32.totalorder %s21, 0
      %p168 = por %p166, %p167
      %p169 = scmp.ne.s32.totalorder %s157, %s158
      %p170 = scmp.eq.s32.totalorder %s22, 1
      %p171 = por %p169, %p170
      %p173 = scmp.ne.s32.totalorder %s158, %s172
      %p174 = scmp.eq.s32.totalorder %s22, 0
      %p175 = por %p173, %p174
      %s176 = ssub.s32 %s16, %s23
      %p177 = scmp.eq.s32.totalorder %s176, 0
      %s179 = sadd.s32 %s178, 1
      %s180 = scalar_select %p177, %s178, %s179
      %p183 = pneg %p177
      %p184 = scmp.eq.s32.totalorder %s16, 1
      %p185 = por %p183, %p184
      %p186 = scmp.ne.s32.totalorder %s178, %s181
      %p187 = scmp.eq.s32.totalorder %s16, 0
      %p188 = por %p186, %p187
      %p189 = scmp.ne.s32.totalorder %s178, %s181
      %p190 = scmp.eq.s32.totalorder %s21, 1
      %p191 = por %p189, %p190
      %p192 = scmp.ne.s32.totalorder %s181, %s182
      %p193 = scmp.eq.s32.totalorder %s21, 0
      %p194 = por %p192, %p193
      %p195 = scmp.ne.s32.totalorder %s181, %s182
      %p196 = scmp.eq.s32.totalorder %s22, 1
      %p197 = por %p195, %p196
      %p199 = scmp.ne.s32.totalorder %s182, %s198
      %p200 = scmp.eq.s32.totalorder %s22, 0
      %p201 = por %p199, %p200
      %p202 = scmp.le.s32.totalorder 1, %s16
      %p203 = scmp.lt.s32.totalorder %s16, 3
      %p204 = pnand %p202, %p203
      %p205 = pneg %p204
      // Predicated region
      $region9: #{vit_forward.1} parent=5 // pred_check
        _
      $region10: #{vit_forward.1} parent=5 // pred_check_branch
        %207 = sbr.rel (%p204) target = $region12
      $region11: #{vit_forward.1} parent=5 // pred_region
        %s208 = ssub.s32 %s16, 1
        // Predicated region
        $region13: #{vit_forward.1} parent=11 // pred_check
          %p209 = pneg %p63
        $region14: #{vit_forward.1} parent=11 // pred_check_branch
          %211 = sbr.rel (%p209) target = $region16
        $region15: #{vit_forward.1} parent=11 // pred_region
          _
        $region16: #{vit_forward.1} parent=11 // pred_fallthru
          _
        // Predicated region
        $region17: #{vit_forward.1} parent=11 // pred_check
          %p212 = pneg %p84
        $region18: #{vit_forward.1} parent=11 // pred_check_branch
          %214 = sbr.rel (%p212) target = $region20
        $region19: #{vit_forward.1} parent=11 // pred_region
          _
        $region20: #{vit_forward.1} parent=11 // pred_fallthru
          _
        // Predicated region
        $region21: #{vit_forward.1} parent=11 // pred_check
          %p215 = pneg %p105
        $region22: #{vit_forward.1} parent=11 // pred_check_branch
          %217 = sbr.rel (%p215) target = $region24
        $region23: #{vit_forward.1} parent=11 // pred_region
          _
        $region24: #{vit_forward.1} parent=11 // pred_fallthru
          _
        // Predicated region
        $region25: #{vit_forward.1} parent=11 // pred_check
          %p218 = pneg %p126
        $region26: #{vit_forward.1} parent=11 // pred_check_branch
          %220 = sbr.rel (%p218) target = $region28
        $region27: #{vit_forward.1} parent=11 // pred_region
          _
        $region28: #{vit_forward.1} parent=11 // pred_fallthru
          _
        // Predicated region
        $region29: #{vit_forward.1} parent=11 // pred_check
          %p221 = pneg %p147
        $region30: #{vit_forward.1} parent=11 // pred_check_branch
          %223 = sbr.rel (%p221) target = $region32
        $region31: #{vit_forward.1} parent=11 // pred_region
          _
        $region32: #{vit_forward.1} parent=11 // pred_fallthru
          _
        // Predicated region
        $region33: #{vit_forward.1} parent=11 // pred_check
          %p224 = pneg %p168
        $region34: #{vit_forward.1} parent=11 // pred_check_branch
          %226 = sbr.rel (%p224) target = $region36
        $region35: #{vit_forward.1} parent=11 // pred_region
          _
        $region36: #{vit_forward.1} parent=11 // pred_fallthru
          _
      $region12: #{vit_forward.1} parent=5 // pred_fallthru
        _
      %p227 = scmp.lt.s32.totalorder %s16, 2
      // Predicated region
      $region37: #{vit_forward.1} parent=5 // pred_check
        %p228 = pneg %p227
      $region38: #{vit_forward.1} parent=5 // pred_check_branch
        %230 = sbr.rel (%p228) target = $region40
      $region39: #{vit_forward.1} parent=5 // pred_region
        // Predicated region
        $region41: #{vit_forward.1} parent=39 // pred_check
          %p231 = pneg %p36
        $region42: #{vit_forward.1} parent=39 // pred_check_branch
          %233 = sbr.rel (%p231) target = $region44
        $region43: #{vit_forward.1} parent=39 // pred_region
          %p234 = scmp.lt.s32.totalorder %s16, 1
          %s235 = scalar_select %p234, %s16, 1
          %s236 = smul.addr %s235, 6
          %s237 = smul.addr %s236, 8
          %s238 = scalar_lea.vmem %s0, %s237
        $region44: #{vit_forward.1} parent=39 // pred_fallthru
          _
      $region40: #{vit_forward.1} parent=5 // pred_fallthru
        _
      %p239 = scmp.le.s32.totalorder 1, %s16
      %p240 = scmp.lt.s32.totalorder %s16, 3
      %p241 = pnand %p239, %p240
      %p242 = pneg %p241
      // Predicated region
      $region45: #{vit_forward.1} parent=5 // pred_check
        _
      $region46: #{vit_forward.1} parent=5 // pred_check_branch
        %244 = sbr.rel (%p241) target = $region48
      $region47: #{vit_forward.1} parent=5 // pred_region
        %s245 = ssub.s32 %s16, 1
        %p246 = scmp.lt.s32.totalorder %s21, 1
        %s247 = scalar_select %p246, %s21, 1
        %s248 = smul.addr %s247, 6
        %s249 = smul.addr %s248, 8
        %s250 = scalar_lea.vmem %s0, %s249
        %p251 = pneg %p42
        %p252 = pneg %p39
        %p253 = pneg %p63
        %p254 = pneg %p60
        %p255 = pneg %p84
        %p256 = pneg %p81
        %p257 = pneg %p105
        %p258 = pneg %p102
        %p259 = pneg %p126
        %p260 = pneg %p123
        %p261 = pneg %p147
        %p262 = pneg %p144
        %p263 = pneg %p168
        %p264 = pneg %p165
        %p265 = pneg %p194
        %p266 = pneg %p191
        %s267 = sand.u32 %s181, 1
        %s268 = scalar_lea.sflag [#allocation3], %s267
        %s269 = sand.u32 %s181, 1
        %s270 = scalar_lea.vmem [#allocation2], %s269
        %p271 = scmp.lt.s32.totalorder %s21, 1
        %s272 = scalar_select %p271, %s21, 1
        %s273 = smul.addr %s272, 6
        %s274 = smul.addr %s273, 8
        %s275 = scalar_lea.vmem %s0, %s274
        %v276 = vld [vmem:[%s275] sm:$0x1f]
        %v277 = vld [vmem:[%s275 + $0x8] sm:$0x1f]
        %v278 = vld [vmem:[%s275 + $0x10] sm:$0x1f]
        %v279 = vld [vmem:[%s275 + $0x18] sm:$0x1f]
        %v280 = vld [vmem:[%s275 + $0x20] sm:$0x1f]
        %v281 = vld [vmem:[%s275 + $0x28] sm:$0x1f]
        %v282 = vld [vmem:[%s1] sm:$0xff]
        %v283 = vld [vmem:[%s1 + $0x8] sm:$0xff]
        %v284 = vld [vmem:[%s1 + $0x10] sm:$0xff]
        %v285 = vld [vmem:[%s1 + $0x18] sm:$0xff]
        %v286 = vld [vmem:[%s1 + $0x20] sm:$0xff]
        %v287 = vld [vmem:[%s1 + $0x28] sm:$0xff]
        %v288 = vld [vmem:[%s1 + $0x30] sm:$0xff]
        %v289 = vld [vmem:[%s1 + $0x38] sm:$0xff]
        %v290 = vld [vmem:[%s1 + $0x40] sm:$0xff]
        %v291 = vld [vmem:[%s1 + $0x48] sm:$0xff]
        %v292 = vld [vmem:[%s1 + $0x50] sm:$0xff]
        %v293 = vld [vmem:[%s1 + $0x58] sm:$0xff]
        %v294 = vld [vmem:[%s1 + $0x60] sm:$0xff]
        %v295 = vld [vmem:[%s1 + $0x68] sm:$0xff]
        %v296 = vld [vmem:[%s1 + $0x70] sm:$0xff]
        %v297 = vld [vmem:[%s1 + $0x78] sm:$0xff]
        %v298 = vld [vmem:[%s1 + $0x80] sm:$0xff]
        %v299 = vld [vmem:[%s1 + $0x88] sm:$0xff]
        %v300 = vld [vmem:[%s1 + $0x90] sm:$0xff]
        %v301 = vld [vmem:[%s1 + $0x98] sm:$0xff]
        %v302 = vld [vmem:[%s1 + $0xa0] sm:$0xff]
        %v303 = vld [vmem:[%s1 + $0xa8] sm:$0xff]
        %v304 = vld [vmem:[%s1 + $0xb0] sm:$0xff]
        %v305 = vld [vmem:[%s1 + $0xb8] sm:$0xff]
        %v306 = vld [vmem:[%s1 + $0xc0] sm:$0xff]
        %v307 = vld [vmem:[%s1 + $0xc8] sm:$0xff]
        %v308 = vld [vmem:[%s1 + $0xd0] sm:$0xff]
        %v309 = vld [vmem:[%s1 + $0xd8] sm:$0xff]
        %v310 = vld [vmem:[%s1 + $0xe0] sm:$0xff]
        %v311 = vld [vmem:[%s1 + $0xe8] sm:$0xff]
        %v312 = vld [vmem:[%s1 + $0xf0] sm:$0xff]
        %v313 = vld [vmem:[%s1 + $0xf8] sm:$0xff]
        %v314 = vld [vmem:[%s1 + $0x100] sm:$0xff]
        %v315 = vld [vmem:[%s1 + $0x108] sm:$0xff]
        %v316 = vld [vmem:[%s1 + $0x110] sm:$0xff]
        %v317 = vld [vmem:[%s1 + $0x118] sm:$0xff]
        %v318 = vld [vmem:[%s1 + $0x120] sm:$0xff]
        %v319 = vld [vmem:[%s1 + $0x128] sm:$0xff]
        %v320 = vld [vmem:[%s1 + $0x130] sm:$0xff]
        %v321 = vld [vmem:[%s1 + $0x138] sm:$0xff]
        %v322 = vld [vmem:[%s1 + $0x140] sm:$0xff]
        %v323 = vld [vmem:[%s1 + $0x148] sm:$0xff]
        %v324 = vld [vmem:[%s1 + $0x150] sm:$0xff]
        %v325 = vld [vmem:[%s1 + $0x158] sm:$0xff]
        %v326 = vld [vmem:[%s1 + $0x160] sm:$0xff]
        %v327 = vld [vmem:[%s1 + $0x168] sm:$0xff]
        %v328 = vld [vmem:[%s1 + $0x170] sm:$0xff]
        %v329 = vld [vmem:[%s1 + $0x178] sm:$0xff]
        %v330 = vld [vmem:[%s1 + $0x180] sm:$0xff]
        %v331 = vld [vmem:[%s1 + $0x188] sm:$0xff]
        %v332 = vld [vmem:[%s1 + $0x190] sm:$0xff]
        %v333 = vld [vmem:[%s1 + $0x198] sm:$0xff]
        %v334 = vld [vmem:[%s1 + $0x1a0] sm:$0xff]
        %v335 = vld [vmem:[%s1 + $0x1a8] sm:$0xff]
        %v336 = vld [vmem:[%s1 + $0x1b0] sm:$0xff]
        %v337 = vld [vmem:[%s1 + $0x1b8] sm:$0xff]
        %v338 = vld [vmem:[%s1 + $0x1c0] sm:$0xff]
        %v339 = vld [vmem:[%s1 + $0x1c8] sm:$0xff]
        %v340 = vld [vmem:[%s1 + $0x1d0] sm:$0xff]
        %v341 = vld [vmem:[%s1 + $0x1d8] sm:$0xff]
        %v342 = vld [vmem:[%s1 + $0x1e0] sm:$0xff]
        %v343 = vld [vmem:[%s1 + $0x1e8] sm:$0xff]
        %v344 = vld [vmem:[%s1 + $0x1f0] sm:$0xff]
        %v345 = vld [vmem:[%s1 + $0x1f8] sm:$0xff]
        %v346 = vld [vmem:[%s1 + $0x200] sm:$0xff]
        %v347 = vld [vmem:[%s1 + $0x208] sm:$0xff]
        %v348 = vld [vmem:[%s1 + $0x210] sm:$0xff]
        %v349 = vld [vmem:[%s1 + $0x218] sm:$0xff]
        %v350 = vld [vmem:[%s1 + $0x220] sm:$0xff]
        %v351 = vld [vmem:[%s1 + $0x228] sm:$0xff]
        %v352 = vld [vmem:[%s1 + $0x230] sm:$0xff]
        %v353 = vld [vmem:[%s1 + $0x238] sm:$0xff]
        %v354 = vld [vmem:[%s1 + $0x240] sm:$0xff]
        %v355 = vld [vmem:[%s1 + $0x248] sm:$0xff]
        %v356 = vld [vmem:[%s1 + $0x250] sm:$0xff]
        %v357 = vld [vmem:[%s1 + $0x258] sm:$0xff]
        %v358 = vld [vmem:[%s1 + $0x260] sm:$0xff]
        %v359 = vld [vmem:[%s1 + $0x268] sm:$0xff]
        %v360 = vld [vmem:[%s1 + $0x270] sm:$0xff]
        %v361 = vld [vmem:[%s1 + $0x278] sm:$0xff]
        %v362 = vld [vmem:[%s1 + $0x280] sm:$0xff]
        %v363 = vld [vmem:[%s1 + $0x288] sm:$0xff]
        %v364 = vld [vmem:[%s1 + $0x290] sm:$0xff]
        %v365 = vld [vmem:[%s1 + $0x298] sm:$0xff]
        %v366 = vld [vmem:[%s1 + $0x2a0] sm:$0xff]
        %v367 = vld [vmem:[%s1 + $0x2a8] sm:$0xff]
        %v368 = vld [vmem:[%s1 + $0x2b0] sm:$0xff]
        %v369 = vld [vmem:[%s1 + $0x2b8] sm:$0xff]
        %v370 = vld [vmem:[%s1 + $0x2c0] sm:$0xff]
        %v371 = vld [vmem:[%s1 + $0x2c8] sm:$0xff]
        %v372 = vld [vmem:[%s1 + $0x2d0] sm:$0xff]
        %v373 = vld [vmem:[%s1 + $0x2d8] sm:$0xff]
        %v374 = vld [vmem:[%s1 + $0x2e0] sm:$0xff]
        %v375 = vld [vmem:[%s1 + $0x2e8] sm:$0xff]
        %v376 = vld [vmem:[%s1 + $0x2f0] sm:$0xff]
        %v377 = vld [vmem:[%s1 + $0x2f8] sm:$0xff]
        %v378 = vld [vmem:[%s2] sm:$0x1f]
        %379 = vmatprep.subr.mxu0 0.0
        %380 = vmatpush1.msra.mxu0 %v282
        %381 = vmatprep.subr.mxu0 0.0
        %382 = vmatpush1.msra.mxu0 %v283
        %383 = vmatprep.subr.mxu0 0.0
        %384 = vmatpush1.msra.mxu0 %v284
        %385 = vmatprep.subr.mxu0 0.0
        %386 = vmatpush1.msra.mxu0 %v285
        %387 = vmatprep.subr.mxu0 0.0
        %388 = vmatpush1.msra.mxu0 %v286
        %389 = vmatprep.subr.mxu0 0.0
        %390 = vmatpush1.msra.mxu0 %v287
        %391 = vmatprep.subr.mxu0 0.0
        %392 = vmatpush1.msra.mxu0 %v288
        %393 = vmatprep.subr.mxu0 0.0
        %394 = vmatpush1.msra.mxu0 %v289
        %395 = vmatprep.subr.mxu0 0.0
        %396 = vmatpush1.msra.mxu0 %v290
        %397 = vmatprep.subr.mxu0 0.0
        %398 = vmatpush1.msra.mxu0 %v291
        %399 = vmatprep.subr.mxu0 0.0
        %400 = vmatpush1.msra.mxu0 %v292
        %401 = vmatprep.subr.mxu0 0.0
        %402 = vmatpush1.msra.mxu0 %v293
        %403 = vmatprep.subr.mxu0 0.0
        %404 = vmatpush1.msra.mxu0 %v294
        %405 = vmatprep.subr.mxu0 0.0
        %406 = vmatpush1.msra.mxu0 %v295
        %407 = vmatprep.subr.mxu0 0.0
        %408 = vmatpush1.msra.mxu0 %v296
        %409 = vmatprep.subr.mxu0 0.0
        %410 = vmatpush1.msra.mxu0 %v297
        %411 = vmatprep.subr.mxu0 0.0
        %412 = vmatpush1.msra.mxu0 %v298
        %413 = vmatprep.subr.mxu0 0.0
        %414 = vmatpush1.msra.mxu0 %v299
        %415 = vmatprep.subr.mxu0 0.0
        %416 = vmatpush1.msra.mxu0 %v300
        %417 = vmatprep.subr.mxu0 0.0
        %418 = vmatpush1.msra.mxu0 %v301
        %419 = vmatprep.subr.mxu0 0.0
        %420 = vmatpush1.msra.mxu0 %v302
        %421 = vmatprep.subr.mxu0 0.0
        %422 = vmatpush1.msra.mxu0 %v303
        %423 = vmatprep.subr.mxu0 0.0
        %424 = vmatpush1.msra.mxu0 %v304
        %425 = vmatprep.subr.mxu0 0.0
        %426 = vmatpush1.msra.mxu0 %v305
        %427 = vmatprep.subr.mxu0 0.0
        %428 = vmatpush1.msra.mxu0 %v306
        %429 = vmatprep.subr.mxu0 0.0
        %430 = vmatpush1.msra.mxu0 %v307
        %431 = vmatprep.subr.mxu0 0.0
        %432 = vmatpush1.msra.mxu0 %v308
        %433 = vmatprep.subr.mxu0 0.0
        %434 = vmatpush1.msra.mxu0 %v309
        %435 = vmatprep.subr.mxu0 0.0
        %436 = vmatpush1.msra.mxu0 %v310
        %437 = vmatprep.subr.mxu0 0.0
        %438 = vmatpush1.msra.mxu0 %v311
        %439 = vmatprep.subr.mxu0 0.0
        %440 = vmatpush1.msra.mxu0 %v312
        %441 = vmatprep.subr.mxu0 0.0
        %442 = vmatpush1.msra.mxu0 %v313
        %443 = vmatprep.mubr.f32.mxu0 %v277
        %444 = vmatmul.mubr.f32.gmra.mrb[0].mxu0 %v276
        %v445 = vpop.f32.mrb[0].mxu0
        %v446 = vadd.f32 %v378, %v445
        %v447 = vpop.f32.mrb[0].mxu0
        %448 = vdwg.mxu0
        %449 = vmatprep.subr.mxu0 0.0
        %450 = vmatpush1.msra.mxu0 %v314
        %451 = vmatprep.subr.mxu0 0.0
        %452 = vmatpush1.msra.mxu0 %v315
        %453 = vmatprep.subr.mxu0 0.0
        %454 = vmatpush1.msra.mxu0 %v316
        %455 = vmatprep.subr.mxu0 0.0
        %456 = vmatpush1.msra.mxu0 %v317
        %457 = vmatprep.subr.mxu0 0.0
        %458 = vmatpush1.msra.mxu0 %v318
        %459 = vmatprep.subr.mxu0 0.0
        %460 = vmatpush1.msra.mxu0 %v319
        %461 = vmatprep.subr.mxu0 0.0
        %462 = vmatpush1.msra.mxu0 %v320
        %463 = vmatprep.subr.mxu0 0.0
        %464 = vmatpush1.msra.mxu0 %v321
        %465 = vmatprep.subr.mxu0 0.0
        %466 = vmatpush1.msra.mxu0 %v322
        %467 = vmatprep.subr.mxu0 0.0
        %468 = vmatpush1.msra.mxu0 %v323
        %469 = vmatprep.subr.mxu0 0.0
        %470 = vmatpush1.msra.mxu0 %v324
        %471 = vmatprep.subr.mxu0 0.0
        %472 = vmatpush1.msra.mxu0 %v325
        %473 = vmatprep.subr.mxu0 0.0
        %474 = vmatpush1.msra.mxu0 %v326
        %475 = vmatprep.subr.mxu0 0.0
        %476 = vmatpush1.msra.mxu0 %v327
        %477 = vmatprep.subr.mxu0 0.0
        %478 = vmatpush1.msra.mxu0 %v328
        %479 = vmatprep.subr.mxu0 0.0
        %480 = vmatpush1.msra.mxu0 %v329
        %481 = vmatprep.subr.mxu0 0.0
        %482 = vmatpush1.msra.mxu0 %v330
        %483 = vmatprep.subr.mxu0 0.0
        %484 = vmatpush1.msra.mxu0 %v331
        %485 = vmatprep.subr.mxu0 0.0
        %486 = vmatpush1.msra.mxu0 %v332
        %487 = vmatprep.subr.mxu0 0.0
        %488 = vmatpush1.msra.mxu0 %v333
        %489 = vmatprep.subr.mxu0 0.0
        %490 = vmatpush1.msra.mxu0 %v334
        %491 = vmatprep.subr.mxu0 0.0
        %492 = vmatpush1.msra.mxu0 %v335
        %493 = vmatprep.subr.mxu0 0.0
        %494 = vmatpush1.msra.mxu0 %v336
        %495 = vmatprep.subr.mxu0 0.0
        %496 = vmatpush1.msra.mxu0 %v337
        %497 = vmatprep.subr.mxu0 0.0
        %498 = vmatpush1.msra.mxu0 %v338
        %499 = vmatprep.subr.mxu0 0.0
        %500 = vmatpush1.msra.mxu0 %v339
        %501 = vmatprep.subr.mxu0 0.0
        %502 = vmatpush1.msra.mxu0 %v340
        %503 = vmatprep.subr.mxu0 0.0
        %504 = vmatpush1.msra.mxu0 %v341
        %505 = vmatprep.subr.mxu0 0.0
        %506 = vmatpush1.msra.mxu0 %v342
        %507 = vmatprep.subr.mxu0 0.0
        %508 = vmatpush1.msra.mxu0 %v343
        %509 = vmatprep.subr.mxu0 0.0
        %510 = vmatpush1.msra.mxu0 %v344
        %511 = vmatprep.subr.mxu0 0.0
        %512 = vmatpush1.msra.mxu0 %v345
        %513 = vmatprep.mubr.f32.mxu0 %v279
        %514 = vmatmul.mubr.f32.gmra.mrb[0].mxu0 %v278
        %v515 = vpop.f32.mrb[0].mxu0
        %v516 = vadd.f32 %v446, %v515
        %v517 = vpop.f32.mrb[0].mxu0
        %518 = vdwg.mxu0
        %519 = vmatprep.subr.mxu0 0.0
        %520 = vmatpush1.msra.mxu0 %v346
        %521 = vmatprep.subr.mxu0 0.0
        %522 = vmatpush1.msra.mxu0 %v347
        %523 = vmatprep.subr.mxu0 0.0
        %524 = vmatpush1.msra.mxu0 %v348
        %525 = vmatprep.subr.mxu0 0.0
        %526 = vmatpush1.msra.mxu0 %v349
        %527 = vmatprep.subr.mxu0 0.0
        %528 = vmatpush1.msra.mxu0 %v350
        %529 = vmatprep.subr.mxu0 0.0
        %530 = vmatpush1.msra.mxu0 %v351
        %531 = vmatprep.subr.mxu0 0.0
        %532 = vmatpush1.msra.mxu0 %v352
        %533 = vmatprep.subr.mxu0 0.0
        %534 = vmatpush1.msra.mxu0 %v353
        %535 = vmatprep.subr.mxu0 0.0
        %536 = vmatpush1.msra.mxu0 %v354
        %537 = vmatprep.subr.mxu0 0.0
        %538 = vmatpush1.msra.mxu0 %v355
        %539 = vmatprep.subr.mxu0 0.0
        %540 = vmatpush1.msra.mxu0 %v356
        %541 = vmatprep.subr.mxu0 0.0
        %542 = vmatpush1.msra.mxu0 %v357
        %543 = vmatprep.subr.mxu0 0.0
        %544 = vmatpush1.msra.mxu0 %v358
        %545 = vmatprep.subr.mxu0 0.0
        %546 = vmatpush1.msra.mxu0 %v359
        %547 = vmatprep.subr.mxu0 0.0
        %548 = vmatpush1.msra.mxu0 %v360
        %549 = vmatprep.subr.mxu0 0.0
        %550 = vmatpush1.msra.mxu0 %v361
        %551 = vmatprep.subr.mxu0 0.0
        %552 = vmatpush1.msra.mxu0 %v362
        %553 = vmatprep.subr.mxu0 0.0
        %554 = vmatpush1.msra.mxu0 %v363
        %555 = vmatprep.subr.mxu0 0.0
        %556 = vmatpush1.msra.mxu0 %v364
        %557 = vmatprep.subr.mxu0 0.0
        %558 = vmatpush1.msra.mxu0 %v365
        %559 = vmatprep.subr.mxu0 0.0
        %560 = vmatpush1.msra.mxu0 %v366
        %561 = vmatprep.subr.mxu0 0.0
        %562 = vmatpush1.msra.mxu0 %v367
        %563 = vmatprep.subr.mxu0 0.0
        %564 = vmatpush1.msra.mxu0 %v368
        %565 = vmatprep.subr.mxu0 0.0
        %566 = vmatpush1.msra.mxu0 %v369
        %567 = vmatprep.subr.mxu0 0.0
        %568 = vmatpush1.msra.mxu0 %v370
        %569 = vmatprep.subr.mxu0 0.0
        %570 = vmatpush1.msra.mxu0 %v371
        %571 = vmatprep.subr.mxu0 0.0
        %572 = vmatpush1.msra.mxu0 %v372
        %573 = vmatprep.subr.mxu0 0.0
        %574 = vmatpush1.msra.mxu0 %v373
        %575 = vmatprep.subr.mxu0 0.0
        %576 = vmatpush1.msra.mxu0 %v374
        %577 = vmatprep.subr.mxu0 0.0
        %578 = vmatpush1.msra.mxu0 %v375
        %579 = vmatprep.subr.mxu0 0.0
        %580 = vmatpush1.msra.mxu0 %v376
        %581 = vmatprep.subr.mxu0 0.0
        %582 = vmatpush1.msra.mxu0 %v377
        %583 = vmatprep.mubr.f32.mxu0 %v281
        %584 = vmatmul.mubr.f32.gmra.mrb[0].mxu0 %v280
        %v585 = vpop.f32.mrb[0].mxu0
        %v586 = vadd.f32 %v516, %v585
        %v587 = vpop.f32.mrb[0].mxu0
        %588 = vdwg.mxu0
        %v589 = vld [vmem:[%s5] ss:$0 sm:$0xff]
        %v590 = vld [vmem:[%s5 + $0x1] ss:$0 sm:$0xff]
        %s591 = scalar_lea.vmem %s5, 2
        %v592 = vld [vmem:[%s591] ss:$8 sm:$0x3]
        %v593 = vld [vmem:[%s5 + $0x3] ss:$0 sm:$0xff]
        %v594 = vld [vmem:[%s5 + $0x4] ss:$0 sm:$0xff]
        %v595 = vld [vmem:[%s5 + $0x5] ss:$0 sm:$0xff]
        %s596 = scalar_lea.vmem %s5, 6
        %v597 = vld [vmem:[%s596] ss:$8 sm:$0x3]
        %v598 = vld [vmem:[%s5 + $0x7] ss:$0 sm:$0xff]
        %v599 = vld [vmem:[%s3] sm:$0xff]
        %v600 = vld [vmem:[%s3 + $0x8] sm:$0xff]
        %v601 = vld [vmem:[%s3 + $0x20] sm:$0xff]
        %v602 = vld [vmem:[%s3 + $0x28] sm:$0xff]
        %v603 = vld [vmem:[%s3 + $0x40] sm:$0xff]
        %v604 = vld [vmem:[%s3 + $0x48] sm:$0xff]
        %v605 = vld [vmem:[%s3 + $0x60] sm:$0xff]
        %v606 = vld [vmem:[%s3 + $0x68] sm:$0xff]
        %v607 = vld [vmem:[%s3 + $0x80] sm:$0xff]
        %v608 = vld [vmem:[%s3 + $0x88] sm:$0xff]
        %v609 = vld [vmem:[%s3 + $0xa0] sm:$0xff]
        %v610 = vld [vmem:[%s3 + $0xa8] sm:$0xff]
        %v611 = vld [vmem:[%s3 + $0xc0] sm:$0xff]
        %v612 = vld [vmem:[%s3 + $0xc8] sm:$0xff]
        %v613 = vld [vmem:[%s3 + $0xe0] sm:$0xff]
        %v614 = vld [vmem:[%s3 + $0xe8] sm:$0xff]
        %v615 = vld [vmem:[%s3 + $0x10] sm:$0xff]
        %v616 = vld [vmem:[%s3 + $0x18] sm:$0xff]
        %v617 = vld [vmem:[%s3 + $0x30] sm:$0xff]
        %v618 = vld [vmem:[%s3 + $0x38] sm:$0xff]
        %v619 = vld [vmem:[%s3 + $0x50] sm:$0xff]
        %v620 = vld [vmem:[%s3 + $0x58] sm:$0xff]
        %v621 = vld [vmem:[%s3 + $0x70] sm:$0xff]
        %v622 = vld [vmem:[%s3 + $0x78] sm:$0xff]
        %v623 = vld [vmem:[%s3 + $0x90] sm:$0xff]
        %v624 = vld [vmem:[%s3 + $0x98] sm:$0xff]
        %v625 = vld [vmem:[%s3 + $0xb0] sm:$0xff]
        %v626 = vld [vmem:[%s3 + $0xb8] sm:$0xff]
        %v627 = vld [vmem:[%s3 + $0xd0] sm:$0xff]
        %v628 = vld [vmem:[%s3 + $0xd8] sm:$0xff]
        %v629 = vld [vmem:[%s3 + $0xf0] sm:$0xff]
        %v630 = vld [vmem:[%s3 + $0xf8] sm:$0xff]
        %vm631 = vcmask 520192
        %v632 = vsel %vm631, %v586, 0.0
        %633 = vadd.xlane.f32.xlu0 %v632
        %v634 = vpop.xlane.xlu0 %633
        %v635 = vrcp.pop 64.0
        %v636 = vmul.f32 %v634, %v635
        %v637 = vsub.f32 %v586, %v636
        %v638 = vmul.f32 %v637, %v637
        %v639 = vsel %vm631, %v638, 0.0
        %640 = vadd.xlane.f32.xlu0 %v639
        %v641 = vpop.xlane.xlu0 %640
        %v642 = vmul.f32 %v641, %v635
        %v643 = vadd.f32 %v642, 1e-06
        %v644 = vrsqrt.pop %v643
        %v645 = vmul.f32 %v637, %v644
        %v646 = vmul.f32 %v645, %v589
        %v647 = vadd.f32 %v646, %v590
        %v649 = vlaneseq
        %v650 = vshrl.u32 %v649, 7
        %v651 = vsub.s32 0, %v650
        %v652 = vrot.slane %v592, %v651
        %v653 = vlaneseq
        %v654 = vshrl.u32 %v653, 7
        %v655 = vsub.s32 1, %v654
        %v656 = vrot.slane %v592, %v655
        %vm659 = vcmask 523264
        %v661 = vsel %vm659, %v647, 0
        %663 = vmatprep.subr.mxu0 %v600
        %664 = vmatpush1.msra.mxu0 %v599
        %665 = vmatprep.subr.mxu0 %v602
        %666 = vmatpush1.msra.mxu0 %v601
        %667 = vmatprep.subr.mxu0 %v604
        %668 = vmatpush1.msra.mxu0 %v603
        %669 = vmatprep.subr.mxu0 %v606
        %670 = vmatpush1.msra.mxu0 %v605
        %671 = vmatprep.subr.mxu0 %v608
        %672 = vmatpush1.msra.mxu0 %v607
        %673 = vmatprep.subr.mxu0 %v610
        %674 = vmatpush1.msra.mxu0 %v609
        %675 = vmatprep.subr.mxu0 %v612
        %676 = vmatpush1.msra.mxu0 %v611
        %677 = vmatprep.subr.mxu0 %v614
        %678 = vmatpush1.msra.mxu0 %v613
        %679 = vmatprep.subr.mxu0 0.0
        %680 = vmatpush1.msra.mxu0 0.0
        %681 = vmatprep.subr.mxu0 0.0
        %682 = vmatpush1.msra.mxu0 0.0
        %683 = vmatprep.subr.mxu0 0.0
        %684 = vmatpush1.msra.mxu0 0.0
        %685 = vmatprep.subr.mxu0 0.0
        %686 = vmatpush1.msra.mxu0 0.0
        %687 = vmatprep.subr.mxu0 0.0
        %688 = vmatpush1.msra.mxu0 0.0
        %689 = vmatprep.subr.mxu0 0.0
        %690 = vmatpush1.msra.mxu0 0.0
        %691 = vmatprep.subr.mxu0 0.0
        %692 = vmatpush1.msra.mxu0 0.0
        %693 = vmatprep.subr.mxu0 0.0
        %694 = vmatpush1.msra.mxu0 0.0
        %695 = vmatprep.subr.mxu0 0.0
        %696 = vmatpush1.msra.mxu0 0.0
        %697 = vmatprep.subr.mxu0 0.0
        %698 = vmatpush1.msra.mxu0 0.0
        %699 = vmatprep.subr.mxu0 0.0
        %700 = vmatpush1.msra.mxu0 0.0
        %701 = vmatprep.subr.mxu0 0.0
        %702 = vmatpush1.msra.mxu0 0.0
        %703 = vmatprep.subr.mxu0 0.0
        %704 = vmatpush1.msra.mxu0 0.0
        %705 = vmatprep.subr.mxu0 0.0
        %706 = vmatpush1.msra.mxu0 0.0
        %707 = vmatprep.subr.mxu0 0.0
        %708 = vmatpush1.msra.mxu0 0.0
        %709 = vmatprep.subr.mxu0 0.0
        %710 = vmatpush1.msra.mxu0 0.0
        %711 = vmatprep.subr.mxu0 0.0
        %712 = vmatpush1.msra.mxu0 0.0
        %713 = vmatprep.subr.mxu0 0.0
        %714 = vmatpush1.msra.mxu0 0.0
        %715 = vmatprep.subr.mxu0 0.0
        %716 = vmatpush1.msra.mxu0 0.0
        %717 = vmatprep.subr.mxu0 0.0
        %718 = vmatpush1.msra.mxu0 0.0
        %719 = vmatprep.subr.mxu0 0.0
        %720 = vmatpush1.msra.mxu0 0.0
        %721 = vmatprep.subr.mxu0 0.0
        %722 = vmatpush1.msra.mxu0 0.0
        %723 = vmatprep.subr.mxu0 0.0
        %724 = vmatpush1.msra.mxu0 0.0
        %725 = vmatprep.subr.mxu0 0.0
        %726 = vmatpush1.msra.mxu0 0.0
        %727 = vmatprep.mubr.f32.mxu0 0.0
        %728 = vmatmul.mubr.f32.gmra.mrb[0].mxu0 %v661
        %v729 = vpop.f32.mrb[0].mxu0
        %v730 = vadd.f32 %v652, %v729
        %v731 = vpop.f32.mrb[0].mxu0
        %v732 = vadd.f32 %v656, %v731
        %733 = vdwg.mxu0
        %735 = vrot.lane.b32.xlu0 %v730, 64
        %v736 = vpop.permute.xlu0 %735
        %vm737 = vcmask 261120
        %v738 = vsel %vm737, %v730, 0
        %v740 = vsel %vm737, %v736, 0
        %742 = vmatprep.subr.mxu0 0.0
        %743 = vmatpush1.xpose.msra.mxu0 %v740
        %744 = vmatprep.subr.mxu0 0.0
        %745 = vmatpush1.xpose.msra.mxu0 0.0
        %746 = vmatprep.subr.mxu0 0.0
        %747 = vmatpush1.xpose.msra.mxu0 0.0
        %748 = vmatprep.subr.mxu0 0.0
        %749 = vmatpush1.xpose.msra.mxu0 0.0
        %750 = vmatprep.subr.mxu0 0.0
        %751 = vmatpush1.xpose.msra.mxu0 0.0
        %752 = vmatprep.subr.mxu0 0.0
        %753 = vmatpush1.xpose.msra.mxu0 0.0
        %754 = vmatprep.subr.mxu0 0.0
        %755 = vmatpush1.xpose.msra.mxu0 0.0
        %756 = vmatprep.subr.mxu0 0.0
        %757 = vmatpush1.xpose.msra.mxu0 0.0
        %758 = vmatprep.subr.mxu0 0.0
        %759 = vmatpush1.xpose.msra.mxu0 0.0
        %760 = vmatprep.subr.mxu0 0.0
        %761 = vmatpush1.xpose.msra.mxu0 0.0
        %762 = vmatprep.subr.mxu0 0.0
        %763 = vmatpush1.xpose.msra.mxu0 0.0
        %764 = vmatprep.subr.mxu0 0.0
        %765 = vmatpush1.xpose.msra.mxu0 0.0
        %766 = vmatprep.subr.mxu0 0.0
        %767 = vmatpush1.xpose.msra.mxu0 0.0
        %768 = vmatprep.subr.mxu0 0.0
        %769 = vmatpush1.xpose.msra.mxu0 0.0
        %770 = vmatprep.subr.mxu0 0.0
        %771 = vmatpush1.xpose.msra.mxu0 0.0
        %772 = vmatprep.subr.mxu0 0.0
        %773 = vmatpush1.xpose.msra.mxu0 0.0
        %774 = vmatprep.subr.mxu0 0.0
        %775 = vmatpush1.xpose.msra.mxu0 0.0
        %776 = vmatprep.subr.mxu0 0.0
        %777 = vmatpush1.xpose.msra.mxu0 0.0
        %778 = vmatprep.subr.mxu0 0.0
        %779 = vmatpush1.xpose.msra.mxu0 0.0
        %780 = vmatprep.subr.mxu0 0.0
        %781 = vmatpush1.xpose.msra.mxu0 0.0
        %782 = vmatprep.subr.mxu0 0.0
        %783 = vmatpush1.xpose.msra.mxu0 0.0
        %784 = vmatprep.subr.mxu0 0.0
        %785 = vmatpush1.xpose.msra.mxu0 0.0
        %786 = vmatprep.subr.mxu0 0.0
        %787 = vmatpush1.xpose.msra.mxu0 0.0
        %788 = vmatprep.subr.mxu0 0.0
        %789 = vmatpush1.xpose.msra.mxu0 0.0
        %790 = vmatprep.subr.mxu0 0.0
        %791 = vmatpush1.xpose.msra.mxu0 0.0
        %792 = vmatprep.subr.mxu0 0.0
        %793 = vmatpush1.xpose.msra.mxu0 0.0
        %794 = vmatprep.subr.mxu0 0.0
        %795 = vmatpush1.xpose.msra.mxu0 0.0
        %796 = vmatprep.subr.mxu0 0.0
        %797 = vmatpush1.xpose.msra.mxu0 0.0
        %798 = vmatprep.subr.mxu0 0.0
        %799 = vmatpush1.xpose.msra.mxu0 0.0
        %800 = vmatprep.subr.mxu0 0.0
        %801 = vmatpush1.xpose.msra.mxu0 0.0
        %802 = vmatprep.subr.mxu0 0.0
        %803 = vmatpush1.xpose.msra.mxu0 0.0
        %804 = vmatprep.subr.mxu0 0.0
        %805 = vmatpush1.xpose.msra.mxu0 0.0
        %806 = vmatprep.mubr.f32.mxu0 0.0
        %807 = vmatmul.mubr.f32.gmra.mrb[0].mxu0 %v738
        %v808 = vpop.f32.mrb[0].mxu0
        %v809 = vadd.f32 0.0, %v808
        %v810 = vpop.f32.mrb[0].mxu0
        %811 = vdwg.mxu0
        %vm812 = vcmask 36864
        %v813 = vsel %vm812, %v809, -inf
        %814 = vmax.xlane.f32.xlu0 %v813
        %v815 = vpop.xlane.xlu0 %814
        %v816 = vsub.f32 %v809, %v815
        %v817 = vmul.f32 %v816, 1.442695
        %v818 = vpow.pop %v817
        %v819 = vsel %vm812, %v818, 0.0
        %820 = vadd.xlane.f32.xlu0 %v819
        %v821 = vpop.xlane.xlu0 %820
        %v822 = vrcp.pop %v821
        %v823 = vmul.f32 %v818, %v822
        %vm824 = vcmask 39936
        %v826 = vsel %vm824, %v823, 0
        %vm828 = vcmask 1044480
        %v830 = vsel %vm828, %v732, 0
        %832 = vmatprep.subr.mxu0 0.0
        %833 = vmatpush1.msra.mxu0 %v830
        %834 = vmatprep.subr.mxu0 0.0
        %835 = vmatpush1.msra.mxu0 0.0
        %836 = vmatprep.subr.mxu0 0.0
        %837 = vmatpush1.msra.mxu0 0.0
        %838 = vmatprep.subr.mxu0 0.0
        %839 = vmatpush1.msra.mxu0 0.0
        %840 = vmatprep.subr.mxu0 0.0
        %841 = vmatpush1.msra.mxu0 0.0
        %842 = vmatprep.subr.mxu0 0.0
        %843 = vmatpush1.msra.mxu0 0.0
        %844 = vmatprep.subr.mxu0 0.0
        %845 = vmatpush1.msra.mxu0 0.0
        %846 = vmatprep.subr.mxu0 0.0
        %847 = vmatpush1.msra.mxu0 0.0
        %848 = vmatprep.subr.mxu0 0.0
        %849 = vmatpush1.msra.mxu0 0.0
        %850 = vmatprep.subr.mxu0 0.0
        %851 = vmatpush1.msra.mxu0 0.0
        %852 = vmatprep.subr.mxu0 0.0
        %853 = vmatpush1.msra.mxu0 0.0
        %854 = vmatprep.subr.mxu0 0.0
        %855 = vmatpush1.msra.mxu0 0.0
        %856 = vmatprep.subr.mxu0 0.0
        %857 = vmatpush1.msra.mxu0 0.0
        %858 = vmatprep.subr.mxu0 0.0
        %859 = vmatpush1.msra.mxu0 0.0
        %860 = vmatprep.subr.mxu0 0.0
        %861 = vmatpush1.msra.mxu0 0.0
        %862 = vmatprep.subr.mxu0 0.0
        %863 = vmatpush1.msra.mxu0 0.0
        %864 = vmatprep.subr.mxu0 0.0
        %865 = vmatpush1.msra.mxu0 0.0
        %866 = vmatprep.subr.mxu0 0.0
        %867 = vmatpush1.msra.mxu0 0.0
        %868 = vmatprep.subr.mxu0 0.0
        %869 = vmatpush1.msra.mxu0 0.0
        %870 = vmatprep.subr.mxu0 0.0
        %871 = vmatpush1.msra.mxu0 0.0
        %872 = vmatprep.subr.mxu0 0.0
        %873 = vmatpush1.msra.mxu0 0.0
        %874 = vmatprep.subr.mxu0 0.0
        %875 = vmatpush1.msra.mxu0 0.0
        %876 = vmatprep.subr.mxu0 0.0
        %877 = vmatpush1.msra.mxu0 0.0
        %878 = vmatprep.subr.mxu0 0.0
        %879 = vmatpush1.msra.mxu0 0.0
        %880 = vmatprep.subr.mxu0 0.0
        %881 = vmatpush1.msra.mxu0 0.0
        %882 = vmatprep.subr.mxu0 0.0
        %883 = vmatpush1.msra.mxu0 0.0
        %884 = vmatprep.subr.mxu0 0.0
        %885 = vmatpush1.msra.mxu0 0.0
        %886 = vmatprep.subr.mxu0 0.0
        %887 = vmatpush1.msra.mxu0 0.0
        %888 = vmatprep.subr.mxu0 0.0
        %889 = vmatpush1.msra.mxu0 0.0
        %890 = vmatprep.subr.mxu0 0.0
        %891 = vmatpush1.msra.mxu0 0.0
        %892 = vmatprep.subr.mxu0 0.0
        %893 = vmatpush1.msra.mxu0 0.0
        %894 = vmatprep.subr.mxu0 0.0
        %895 = vmatpush1.msra.mxu0 0.0
        %896 = vmatprep.mubr.f32.mxu0 0.0
        %897 = vmatmul.mubr.f32.gmra.mrb[0].mxu0 %v826
        %v898 = vpop.f32.mrb[0].mxu0
        %v899 = vadd.f32 0.0, %v898
        %v900 = vpop.f32.mrb[0].mxu0
        %901 = vdwg.mxu0
        %902 = vrot.lane.b32.xlu0 %v730, 96
        %v903 = vpop.permute.xlu0 %902
        %904 = vrot.lane.b32.xlu0 %v730, 32
        %v905 = vpop.permute.xlu0 %904
        %v906 = vsel %vm737, %v903, 0
        %v908 = vsel %vm737, %v905, 0
        %910 = vmatprep.subr.mxu0 0.0
        %911 = vmatpush1.xpose.msra.mxu0 %v908
        %912 = vmatprep.subr.mxu0 0.0
        %913 = vmatpush1.xpose.msra.mxu0 0.0
        %914 = vmatprep.subr.mxu0 0.0
        %915 = vmatpush1.xpose.msra.mxu0 0.0
        %916 = vmatprep.subr.mxu0 0.0
        %917 = vmatpush1.xpose.msra.mxu0 0.0
        %918 = vmatprep.subr.mxu0 0.0
        %919 = vmatpush1.xpose.msra.mxu0 0.0
        %920 = vmatprep.subr.mxu0 0.0
        %921 = vmatpush1.xpose.msra.mxu0 0.0
        %922 = vmatprep.subr.mxu0 0.0
        %923 = vmatpush1.xpose.msra.mxu0 0.0
        %924 = vmatprep.subr.mxu0 0.0
        %925 = vmatpush1.xpose.msra.mxu0 0.0
        %926 = vmatprep.subr.mxu0 0.0
        %927 = vmatpush1.xpose.msra.mxu0 0.0
        %928 = vmatprep.subr.mxu0 0.0
        %929 = vmatpush1.xpose.msra.mxu0 0.0
        %930 = vmatprep.subr.mxu0 0.0
        %931 = vmatpush1.xpose.msra.mxu0 0.0
        %932 = vmatprep.subr.mxu0 0.0
        %933 = vmatpush1.xpose.msra.mxu0 0.0
        %934 = vmatprep.subr.mxu0 0.0
        %935 = vmatpush1.xpose.msra.mxu0 0.0
        %936 = vmatprep.subr.mxu0 0.0
        %937 = vmatpush1.xpose.msra.mxu0 0.0
        %938 = vmatprep.subr.mxu0 0.0
        %939 = vmatpush1.xpose.msra.mxu0 0.0
        %940 = vmatprep.subr.mxu0 0.0
        %941 = vmatpush1.xpose.msra.mxu0 0.0
        %942 = vmatprep.subr.mxu0 0.0
        %943 = vmatpush1.xpose.msra.mxu0 0.0
        %944 = vmatprep.subr.mxu0 0.0
        %945 = vmatpush1.xpose.msra.mxu0 0.0
        %946 = vmatprep.subr.mxu0 0.0
        %947 = vmatpush1.xpose.msra.mxu0 0.0
        %948 = vmatprep.subr.mxu0 0.0
        %949 = vmatpush1.xpose.msra.mxu0 0.0
        %950 = vmatprep.subr.mxu0 0.0
        %951 = vmatpush1.xpose.msra.mxu0 0.0
        %952 = vmatprep.subr.mxu0 0.0
        %953 = vmatpush1.xpose.msra.mxu0 0.0
        %954 = vmatprep.subr.mxu0 0.0
        %955 = vmatpush1.xpose.msra.mxu0 0.0
        %956 = vmatprep.subr.mxu0 0.0
        %957 = vmatpush1.xpose.msra.mxu0 0.0
        %958 = vmatprep.subr.mxu0 0.0
        %959 = vmatpush1.xpose.msra.mxu0 0.0
        %960 = vmatprep.subr.mxu0 0.0
        %961 = vmatpush1.xpose.msra.mxu0 0.0
        %962 = vmatprep.subr.mxu0 0.0
        %963 = vmatpush1.xpose.msra.mxu0 0.0
        %964 = vmatprep.subr.mxu0 0.0
        %965 = vmatpush1.xpose.msra.mxu0 0.0
        %966 = vmatprep.subr.mxu0 0.0
        %967 = vmatpush1.xpose.msra.mxu0 0.0
        %968 = vmatprep.subr.mxu0 0.0
        %969 = vmatpush1.xpose.msra.mxu0 0.0
        %970 = vmatprep.subr.mxu0 0.0
        %971 = vmatpush1.xpose.msra.mxu0 0.0
        %972 = vmatprep.subr.mxu0 0.0
        %973 = vmatpush1.xpose.msra.mxu0 0.0
        %974 = vmatprep.mubr.f32.mxu0 0.0
        %975 = vmatmul.mubr.f32.gmra.mrb[0].mxu0 %v906
        %v976 = vpop.f32.mrb[0].mxu0
        %v977 = vadd.f32 0.0, %v976
        %v978 = vpop.f32.mrb[0].mxu0
        %979 = vdwg.mxu0
        %v980 = vsel %vm812, %v977, -inf
        %981 = vmax.xlane.f32.xlu0 %v980
        %v982 = vpop.xlane.xlu0 %981
        %v983 = vsub.f32 %v977, %v982
        %v984 = vmul.f32 %v983, 1.442695
        %v985 = vpow.pop %v984
        %v986 = vsel %vm812, %v985, 0.0
        %987 = vadd.xlane.f32.xlu0 %v986
        %v988 = vpop.xlane.xlu0 %987
        %v989 = vrcp.pop %v988
        %v990 = vmul.f32 %v985, %v989
        %991 = vrot.lane.b32.xlu0 %v732, 96
        %v992 = vpop.permute.xlu0 %991
        %v994 = vsel %vm824, %v990, 0
        %v996 = vsel %vm828, %v992, 0
        %998 = vmatprep.subr.mxu0 0.0
        %999 = vmatpush1.msra.mxu0 %v996
        %1000 = vmatprep.subr.mxu0 0.0
        %1001 = vmatpush1.msra.mxu0 0.0
        %1002 = vmatprep.subr.mxu0 0.0
        %1003 = vmatpush1.msra.mxu0 0.0
        %1004 = vmatprep.subr.mxu0 0.0
        %1005 = vmatpush1.msra.mxu0 0.0
        %1006 = vmatprep.subr.mxu0 0.0
        %1007 = vmatpush1.msra.mxu0 0.0
        %1008 = vmatprep.subr.mxu0 0.0
        %1009 = vmatpush1.msra.mxu0 0.0
        %1010 = vmatprep.subr.mxu0 0.0
        %1011 = vmatpush1.msra.mxu0 0.0
        %1012 = vmatprep.subr.mxu0 0.0
        %1013 = vmatpush1.msra.mxu0 0.0
        %1014 = vmatprep.subr.mxu0 0.0
        %1015 = vmatpush1.msra.mxu0 0.0
        %1016 = vmatprep.subr.mxu0 0.0
        %1017 = vmatpush1.msra.mxu0 0.0
        %1018 = vmatprep.subr.mxu0 0.0
        %1019 = vmatpush1.msra.mxu0 0.0
        %1020 = vmatprep.subr.mxu0 0.0
        %1021 = vmatpush1.msra.mxu0 0.0
        %1022 = vmatprep.subr.mxu0 0.0
        %1023 = vmatpush1.msra.mxu0 0.0
        %1024 = vmatprep.subr.mxu0 0.0
        %1025 = vmatpush1.msra.mxu0 0.0
        %1026 = vmatprep.subr.mxu0 0.0
        %1027 = vmatpush1.msra.mxu0 0.0
        %1028 = vmatprep.subr.mxu0 0.0
        %1029 = vmatpush1.msra.mxu0 0.0
        %1030 = vmatprep.subr.mxu0 0.0
        %1031 = vmatpush1.msra.mxu0 0.0
        %1032 = vmatprep.subr.mxu0 0.0
        %1033 = vmatpush1.msra.mxu0 0.0
        %1034 = vmatprep.subr.mxu0 0.0
        %1035 = vmatpush1.msra.mxu0 0.0
        %1036 = vmatprep.subr.mxu0 0.0
        %1037 = vmatpush1.msra.mxu0 0.0
        %1038 = vmatprep.subr.mxu0 0.0
        %1039 = vmatpush1.msra.mxu0 0.0
        %1040 = vmatprep.subr.mxu0 0.0
        %1041 = vmatpush1.msra.mxu0 0.0
        %1042 = vmatprep.subr.mxu0 0.0
        %1043 = vmatpush1.msra.mxu0 0.0
        %1044 = vmatprep.subr.mxu0 0.0
        %1045 = vmatpush1.msra.mxu0 0.0
        %1046 = vmatprep.subr.mxu0 0.0
        %1047 = vmatpush1.msra.mxu0 0.0
        %1048 = vmatprep.subr.mxu0 0.0
        %1049 = vmatpush1.msra.mxu0 0.0
        %1050 = vmatprep.subr.mxu0 0.0
        %1051 = vmatpush1.msra.mxu0 0.0
        %1052 = vmatprep.subr.mxu0 0.0
        %1053 = vmatpush1.msra.mxu0 0.0
        %1054 = vmatprep.subr.mxu0 0.0
        %1055 = vmatpush1.msra.mxu0 0.0
        %1056 = vmatprep.subr.mxu0 0.0
        %1057 = vmatpush1.msra.mxu0 0.0
        %1058 = vmatprep.subr.mxu0 0.0
        %1059 = vmatpush1.msra.mxu0 0.0
        %1060 = vmatprep.subr.mxu0 0.0
        %1061 = vmatpush1.msra.mxu0 0.0
        %1062 = vmatprep.mubr.f32.mxu0 0.0
        %1063 = vmatmul.mubr.f32.gmra.mrb[0].mxu0 %v994
        %v1064 = vpop.f32.mrb[0].mxu0
        %v1065 = vadd.f32 0.0, %v1064
        %v1066 = vpop.f32.mrb[0].mxu0
        %1067 = vdwg.mxu0
        %1072 = vrot.lane.b32.xlu0 %v608, 64
        %v1073 = vpop.permute.xlu0 %1072
        %1074 = vrot.lane.b32.xlu0 %v610, 64
        %v1075 = vpop.permute.xlu0 %1074
        %1076 = vrot.lane.b32.xlu0 %v612, 64
        %v1077 = vpop.permute.xlu0 %1076
        %1078 = vrot.lane.b32.xlu0 %v614, 64
        %v1079 = vpop.permute.xlu0 %1078
        %v1085 = vsel %vm737, %v1065, 0
        %1087 = vmatprep.subr.mxu0 0.0
        %1088 = vmatpush1.msra.mxu0 %v1073
        %1089 = vmatprep.subr.mxu0 0.0
        %1090 = vmatpush1.msra.mxu0 %v1075
        %1091 = vmatprep.subr.mxu0 0.0
        %1092 = vmatpush1.msra.mxu0 %v1077
        %1093 = vmatprep.subr.mxu0 0.0
        %1094 = vmatpush1.msra.mxu0 %v1079
        %1095 = vmatprep.subr.mxu0 0.0
        %1096 = vmatpush1.msra.mxu0 0.0
        %1097 = vmatprep.subr.mxu0 0.0
        %1098 = vmatpush1.msra.mxu0 0.0
        %1099 = vmatprep.subr.mxu0 0.0
        %1100 = vmatpush1.msra.mxu0 0.0
        %1101 = vmatprep.subr.mxu0 0.0
        %1102 = vmatpush1.msra.mxu0 0.0
        %1103 = vmatprep.subr.mxu0 0.0
        %1104 = vmatpush1.msra.mxu0 0.0
        %1105 = vmatprep.subr.mxu0 0.0
        %1106 = vmatpush1.msra.mxu0 0.0
        %1107 = vmatprep.subr.mxu0 0.0
        %1108 = vmatpush1.msra.mxu0 0.0
        %1109 = vmatprep.subr.mxu0 0.0
        %1110 = vmatpush1.msra.mxu0 0.0
        %1111 = vmatprep.subr.mxu0 0.0
        %1112 = vmatpush1.msra.mxu0 0.0
        %1113 = vmatprep.subr.mxu0 0.0
        %1114 = vmatpush1.msra.mxu0 0.0
        %1115 = vmatprep.subr.mxu0 0.0
        %1116 = vmatpush1.msra.mxu0 0.0
        %1117 = vmatprep.subr.mxu0 0.0
        %1118 = vmatpush1.msra.mxu0 0.0
        %1119 = vmatprep.subr.mxu0 0.0
        %1120 = vmatpush1.msra.mxu0 0.0
        %1121 = vmatprep.subr.mxu0 0.0
        %1122 = vmatpush1.msra.mxu0 0.0
        %1123 = vmatprep.subr.mxu0 0.0
        %1124 = vmatpush1.msra.mxu0 0.0
        %1125 = vmatprep.subr.mxu0 0.0
        %1126 = vmatpush1.msra.mxu0 0.0
        %1127 = vmatprep.subr.mxu0 0.0
        %1128 = vmatpush1.msra.mxu0 0.0
        %1129 = vmatprep.subr.mxu0 0.0
        %1130 = vmatpush1.msra.mxu0 0.0
        %1131 = vmatprep.subr.mxu0 0.0
        %1132 = vmatpush1.msra.mxu0 0.0
        %1133 = vmatprep.subr.mxu0 0.0
        %1134 = vmatpush1.msra.mxu0 0.0
        %1135 = vmatprep.subr.mxu0 0.0
        %1136 = vmatpush1.msra.mxu0 0.0
        %1137 = vmatprep.subr.mxu0 0.0
        %1138 = vmatpush1.msra.mxu0 0.0
        %1139 = vmatprep.subr.mxu0 0.0
        %1140 = vmatpush1.msra.mxu0 0.0
        %1141 = vmatprep.subr.mxu0 0.0
        %1142 = vmatpush1.msra.mxu0 0.0
        %1143 = vmatprep.subr.mxu0 0.0
        %1144 = vmatpush1.msra.mxu0 0.0
        %1145 = vmatprep.subr.mxu0 0.0
        %1146 = vmatpush1.msra.mxu0 0.0
        %1147 = vmatprep.subr.mxu0 0.0
        %1148 = vmatpush1.msra.mxu0 0.0
        %1149 = vmatprep.subr.mxu0 0.0
        %1150 = vmatpush1.msra.mxu0 0.0
        %1151 = vmatprep.mubr.f32.mxu0 0.0
        %1152 = vmatmul.mubr.f32.gmra.mrb[0].mxu0 %v1085
        %v1153 = vpop.f32.mrb[0].mxu0
        %v1154 = vadd.f32 0.0, %v1153
        %v1155 = vpop.f32.mrb[0].mxu0
        %1156 = vdwg.mxu0
        %1161 = vrot.lane.b32.xlu0 %v600, 64
        %v1162 = vpop.permute.xlu0 %1161
        %1163 = vrot.lane.b32.xlu0 %v602, 64
        %v1164 = vpop.permute.xlu0 %1163
        %1165 = vrot.lane.b32.xlu0 %v604, 64
        %v1166 = vpop.permute.xlu0 %1165
        %1167 = vrot.lane.b32.xlu0 %v606, 64
        %v1168 = vpop.permute.xlu0 %1167
        %v1174 = vsel %vm737, %v899, 0
        %1176 = vmatprep.subr.mxu0 0.0
        %1177 = vmatpush1.msra.mxu0 %v1162
        %1178 = vmatprep.subr.mxu0 0.0
        %1179 = vmatpush1.msra.mxu0 %v1164
        %1180 = vmatprep.subr.mxu0 0.0
        %1181 = vmatpush1.msra.mxu0 %v1166
        %1182 = vmatprep.subr.mxu0 0.0
        %1183 = vmatpush1.msra.mxu0 %v1168
        %1184 = vmatprep.subr.mxu0 0.0
        %1185 = vmatpush1.msra.mxu0 0.0
        %1186 = vmatprep.subr.mxu0 0.0
        %1187 = vmatpush1.msra.mxu0 0.0
        %1188 = vmatprep.subr.mxu0 0.0
        %1189 = vmatpush1.msra.mxu0 0.0
        %1190 = vmatprep.subr.mxu0 0.0
        %1191 = vmatpush1.msra.mxu0 0.0
        %1192 = vmatprep.subr.mxu0 0.0
        %1193 = vmatpush1.msra.mxu0 0.0
        %1194 = vmatprep.subr.mxu0 0.0
        %1195 = vmatpush1.msra.mxu0 0.0
        %1196 = vmatprep.subr.mxu0 0.0
        %1197 = vmatpush1.msra.mxu0 0.0
        %1198 = vmatprep.subr.mxu0 0.0
        %1199 = vmatpush1.msra.mxu0 0.0
        %1200 = vmatprep.subr.mxu0 0.0
        %1201 = vmatpush1.msra.mxu0 0.0
        %1202 = vmatprep.subr.mxu0 0.0
        %1203 = vmatpush1.msra.mxu0 0.0
        %1204 = vmatprep.subr.mxu0 0.0
        %1205 = vmatpush1.msra.mxu0 0.0
        %1206 = vmatprep.subr.mxu0 0.0
        %1207 = vmatpush1.msra.mxu0 0.0
        %1208 = vmatprep.subr.mxu0 0.0
        %1209 = vmatpush1.msra.mxu0 0.0
        %1210 = vmatprep.subr.mxu0 0.0
        %1211 = vmatpush1.msra.mxu0 0.0
        %1212 = vmatprep.subr.mxu0 0.0
        %1213 = vmatpush1.msra.mxu0 0.0
        %1214 = vmatprep.subr.mxu0 0.0
        %1215 = vmatpush1.msra.mxu0 0.0
        %1216 = vmatprep.subr.mxu0 0.0
        %1217 = vmatpush1.msra.mxu0 0.0
        %1218 = vmatprep.subr.mxu0 0.0
        %1219 = vmatpush1.msra.mxu0 0.0
        %1220 = vmatprep.subr.mxu0 0.0
        %1221 = vmatpush1.msra.mxu0 0.0
        %1222 = vmatprep.subr.mxu0 0.0
        %1223 = vmatpush1.msra.mxu0 0.0
        %1224 = vmatprep.subr.mxu0 0.0
        %1225 = vmatpush1.msra.mxu0 0.0
        %1226 = vmatprep.subr.mxu0 0.0
        %1227 = vmatpush1.msra.mxu0 0.0
        %1228 = vmatprep.subr.mxu0 0.0
        %1229 = vmatpush1.msra.mxu0 0.0
        %1230 = vmatprep.subr.mxu0 0.0
        %1231 = vmatpush1.msra.mxu0 0.0
        %1232 = vmatprep.subr.mxu0 0.0
        %1233 = vmatpush1.msra.mxu0 0.0
        %1234 = vmatprep.subr.mxu0 0.0
        %1235 = vmatpush1.msra.mxu0 0.0
        %1236 = vmatprep.subr.mxu0 0.0
        %1237 = vmatpush1.msra.mxu0 0.0
        %1238 = vmatprep.subr.mxu0 0.0
        %1239 = vmatpush1.msra.mxu0 0.0
        %1240 = vmatprep.mubr.f32.mxu0 0.0
        %1241 = vmatmul.mubr.f32.gmra.mrb[0].mxu0 %v1174
        %v1242 = vpop.f32.mrb[0].mxu0
        %v1243 = vadd.f32 %v1154, %v1242
        %v1244 = vpop.f32.mrb[0].mxu0
        %1245 = vdwg.mxu0
        %v1246 = vadd.f32 %v586, %v1243
        %v1247 = vadd.f32 %v1246, %v593
        %v1248 = vsel %vm631, %v1247, 0.0
        %1249 = vadd.xlane.f32.xlu0 %v1248
        %v1250 = vpop.xlane.xlu0 %1249
        %v1251 = vmul.f32 %v1250, %v635
        %v1252 = vsub.f32 %v1247, %v1251
        %v1253 = vmul.f32 %v1252, %v1252
        %v1254 = vsel %vm631, %v1253, 0.0
        %1255 = vadd.xlane.f32.xlu0 %v1254
        %v1256 = vpop.xlane.xlu0 %1255
        %v1257 = vmul.f32 %v1256, %v635
        %v1258 = vadd.f32 %v1257, 1e-06
        %v1259 = vrsqrt.pop %v1258
        %v1260 = vmul.f32 %v1252, %v1259
        %v1261 = vmul.f32 %v1260, %v594
        %v1262 = vadd.f32 %v1261, %v595
        %v1264 = vlaneseq
        %v1265 = vshrl.u32 %v1264, 7
        %v1266 = vsub.s32 0, %v1265
        %v1267 = vrot.slane %v597, %v1266
        %v1268 = vlaneseq
        %v1269 = vshrl.u32 %v1268, 7
        %v1270 = vsub.s32 1, %v1269
        %v1271 = vrot.slane %v597, %v1270
        %v1275 = vsel %vm659, %v1262, 0
        %1277 = vmatprep.subr.mxu0 %v616
        %1278 = vmatpush1.msra.mxu0 %v615
        %1279 = vmatprep.subr.mxu0 %v618
        %1280 = vmatpush1.msra.mxu0 %v617
        %1281 = vmatprep.subr.mxu0 %v620
        %1282 = vmatpush1.msra.mxu0 %v619
        %1283 = vmatprep.subr.mxu0 %v622
        %1284 = vmatpush1.msra.mxu0 %v621
        %1285 = vmatprep.subr.mxu0 %v624
        %1286 = vmatpush1.msra.mxu0 %v623
        %1287 = vmatprep.subr.mxu0 %v626
        %1288 = vmatpush1.msra.mxu0 %v625
        %1289 = vmatprep.subr.mxu0 %v628
        %1290 = vmatpush1.msra.mxu0 %v627
        %1291 = vmatprep.subr.mxu0 %v630
        %1292 = vmatpush1.msra.mxu0 %v629
        %1293 = vmatprep.subr.mxu0 0.0
        %1294 = vmatpush1.msra.mxu0 0.0
        %1295 = vmatprep.subr.mxu0 0.0
        %1296 = vmatpush1.msra.mxu0 0.0
        %1297 = vmatprep.subr.mxu0 0.0
        %1298 = vmatpush1.msra.mxu0 0.0
        %1299 = vmatprep.subr.mxu0 0.0
        %1300 = vmatpush1.msra.mxu0 0.0
        %1301 = vmatprep.subr.mxu0 0.0
        %1302 = vmatpush1.msra.mxu0 0.0
        %1303 = vmatprep.subr.mxu0 0.0
        %1304 = vmatpush1.msra.mxu0 0.0
        %1305 = vmatprep.subr.mxu0 0.0
        %1306 = vmatpush1.msra.mxu0 0.0
        %1307 = vmatprep.subr.mxu0 0.0
        %1308 = vmatpush1.msra.mxu0 0.0
        %1309 = vmatprep.subr.mxu0 0.0
        %1310 = vmatpush1.msra.mxu0 0.0
        %1311 = vmatprep.subr.mxu0 0.0
        %1312 = vmatpush1.msra.mxu0 0.0
        %1313 = vmatprep.subr.mxu0 0.0
        %1314 = vmatpush1.msra.mxu0 0.0
        %1315 = vmatprep.subr.mxu0 0.0
        %1316 = vmatpush1.msra.mxu0 0.0
        %1317 = vmatprep.subr.mxu0 0.0
        %1318 = vmatpush1.msra.mxu0 0.0
        %1319 = vmatprep.subr.mxu0 0.0
        %1320 = vmatpush1.msra.mxu0 0.0
        %1321 = vmatprep.subr.mxu0 0.0
        %1322 = vmatpush1.msra.mxu0 0.0
        %1323 = vmatprep.subr.mxu0 0.0
        %1324 = vmatpush1.msra.mxu0 0.0
        %1325 = vmatprep.subr.mxu0 0.0
        %1326 = vmatpush1.msra.mxu0 0.0
        %1327 = vmatprep.subr.mxu0 0.0
        %1328 = vmatpush1.msra.mxu0 0.0
        %1329 = vmatprep.subr.mxu0 0.0
        %1330 = vmatpush1.msra.mxu0 0.0
        %1331 = vmatprep.subr.mxu0 0.0
        %1332 = vmatpush1.msra.mxu0 0.0
        %1333 = vmatprep.subr.mxu0 0.0
        %1334 = vmatpush1.msra.mxu0 0.0
        %1335 = vmatprep.subr.mxu0 0.0
        %1336 = vmatpush1.msra.mxu0 0.0
        %1337 = vmatprep.subr.mxu0 0.0
        %1338 = vmatpush1.msra.mxu0 0.0
        %1339 = vmatprep.subr.mxu0 0.0
        %1340 = vmatpush1.msra.mxu0 0.0
        %1341 = vmatprep.mubr.f32.mxu0 0.0
        %1342 = vmatmul.mubr.f32.gmra.mrb[0].mxu0 %v1275
        %v1343 = vpop.f32.mrb[0].mxu0
        %v1344 = vadd.f32 %v1267, %v1343
        %v1345 = vpop.f32.mrb[0].mxu0
        %v1346 = vadd.f32 %v1271, %v1345
        %1347 = vdwg.mxu0
        %v1348 = vmul.f32 %v1344, 0.5
        %v1349 = vmul.f32 %v1346, 0.5
        %v1350 = vmul.f32 %v1344, 0.70710677
        %v1351 = vmul.f32 %v1346, 0.70710677
        %v1352 = verf.f32.pop %v1350
        %v1353 = verf.f32.pop %v1351
        %v1354 = vadd.f32 %v1352, 1.0
        %v1355 = vadd.f32 %v1353, 1.0
        %v1356 = vmul.f32 %v1348, %v1354
        %v1357 = vmul.f32 %v1349, %v1355
        %v1358 = vld [vmem:[%s4] sm:$0xff]
        %v1359 = vld [vmem:[%s4 + $0x8] sm:$0xff]
        %v1360 = vld [vmem:[%s4 + $0x10] sm:$0xff]
        %v1361 = vld [vmem:[%s4 + $0x18] sm:$0xff]
        %v1362 = vld [vmem:[%s4 + $0x20] sm:$0xff]
        %v1363 = vld [vmem:[%s4 + $0x28] sm:$0xff]
        %v1364 = vld [vmem:[%s4 + $0x30] sm:$0xff]
        %v1365 = vld [vmem:[%s4 + $0x38] sm:$0xff]
        %v1366 = vld [vmem:[%s4 + $0x40] sm:$0xff]
        %v1367 = vld [vmem:[%s4 + $0x48] sm:$0xff]
        %v1368 = vld [vmem:[%s4 + $0x50] sm:$0xff]
        %v1369 = vld [vmem:[%s4 + $0x58] sm:$0xff]
        %v1370 = vld [vmem:[%s4 + $0x60] sm:$0xff]
        %v1371 = vld [vmem:[%s4 + $0x68] sm:$0xff]
        %v1372 = vld [vmem:[%s4 + $0x70] sm:$0xff]
        %v1373 = vld [vmem:[%s4 + $0x78] sm:$0xff]
        %v1374 = vld [vmem:[%s4 + $0x80] sm:$0xff]
        %v1375 = vld [vmem:[%s4 + $0x88] sm:$0xff]
        %v1376 = vld [vmem:[%s4 + $0x90] sm:$0xff]
        %v1377 = vld [vmem:[%s4 + $0x98] sm:$0xff]
        %v1378 = vld [vmem:[%s4 + $0xa0] sm:$0xff]
        %v1379 = vld [vmem:[%s4 + $0xa8] sm:$0xff]
        %v1380 = vld [vmem:[%s4 + $0xb0] sm:$0xff]
        %v1381 = vld [vmem:[%s4 + $0xb8] sm:$0xff]
        %v1382 = vld [vmem:[%s4 + $0xc0] sm:$0xff]
        %v1383 = vld [vmem:[%s4 + $0xc8] sm:$0xff]
        %v1384 = vld [vmem:[%s4 + $0xd0] sm:$0xff]
        %v1385 = vld [vmem:[%s4 + $0xd8] sm:$0xff]
        %v1386 = vld [vmem:[%s4 + $0xe0] sm:$0xff]
        %v1387 = vld [vmem:[%s4 + $0xe8] sm:$0xff]
        %v1388 = vld [vmem:[%s4 + $0xf0] sm:$0xff]
        %v1389 = vld [vmem:[%s4 + $0xf8] sm:$0xff]
        %1390 = vmatprep.subr.mxu0 0.0
        %1391 = vmatpush1.msra.mxu0 %v1358
        %1392 = vmatprep.subr.mxu0 0.0
        %1393 = vmatpush1.msra.mxu0 %v1359
        %1394 = vmatprep.subr.mxu0 0.0
        %1395 = vmatpush1.msra.mxu0 %v1360
        %1396 = vmatprep.subr.mxu0 0.0
        %1397 = vmatpush1.msra.mxu0 %v1361
        %1398 = vmatprep.subr.mxu0 0.0
        %1399 = vmatpush1.msra.mxu0 %v1362
        %1400 = vmatprep.subr.mxu0 0.0
        %1401 = vmatpush1.msra.mxu0 %v1363
        %1402 = vmatprep.subr.mxu0 0.0
        %1403 = vmatpush1.msra.mxu0 %v1364
        %1404 = vmatprep.subr.mxu0 0.0
        %1405 = vmatpush1.msra.mxu0 %v1365
        %1406 = vmatprep.subr.mxu0 0.0
        %1407 = vmatpush1.msra.mxu0 %v1366
        %1408 = vmatprep.subr.mxu0 0.0
        %1409 = vmatpush1.msra.mxu0 %v1367
        %1410 = vmatprep.subr.mxu0 0.0
        %1411 = vmatpush1.msra.mxu0 %v1368
        %1412 = vmatprep.subr.mxu0 0.0
        %1413 = vmatpush1.msra.mxu0 %v1369
        %1414 = vmatprep.subr.mxu0 0.0
        %1415 = vmatpush1.msra.mxu0 %v1370
        %1416 = vmatprep.subr.mxu0 0.0
        %1417 = vmatpush1.msra.mxu0 %v1371
        %1418 = vmatprep.subr.mxu0 0.0
        %1419 = vmatpush1.msra.mxu0 %v1372
        %1420 = vmatprep.subr.mxu0 0.0
        %1421 = vmatpush1.msra.mxu0 %v1373
        %1422 = vmatprep.subr.mxu0 0.0
        %1423 = vmatpush1.msra.mxu0 %v1374
        %1424 = vmatprep.subr.mxu0 0.0
        %1425 = vmatpush1.msra.mxu0 %v1375
        %1426 = vmatprep.subr.mxu0 0.0
        %1427 = vmatpush1.msra.mxu0 %v1376
        %1428 = vmatprep.subr.mxu0 0.0
        %1429 = vmatpush1.msra.mxu0 %v1377
        %1430 = vmatprep.subr.mxu0 0.0
        %1431 = vmatpush1.msra.mxu0 %v1378
        %1432 = vmatprep.subr.mxu0 0.0
        %1433 = vmatpush1.msra.mxu0 %v1379
        %1434 = vmatprep.subr.mxu0 0.0
        %1435 = vmatpush1.msra.mxu0 %v1380
        %1436 = vmatprep.subr.mxu0 0.0
        %1437 = vmatpush1.msra.mxu0 %v1381
        %1438 = vmatprep.subr.mxu0 0.0
        %1439 = vmatpush1.msra.mxu0 %v1382
        %1440 = vmatprep.subr.mxu0 0.0
        %1441 = vmatpush1.msra.mxu0 %v1383
        %1442 = vmatprep.subr.mxu0 0.0
        %1443 = vmatpush1.msra.mxu0 %v1384
        %1444 = vmatprep.subr.mxu0 0.0
        %1445 = vmatpush1.msra.mxu0 %v1385
        %1446 = vmatprep.subr.mxu0 0.0
        %1447 = vmatpush1.msra.mxu0 %v1386
        %1448 = vmatprep.subr.mxu0 0.0
        %1449 = vmatpush1.msra.mxu0 %v1387
        %1450 = vmatprep.subr.mxu0 0.0
        %1451 = vmatpush1.msra.mxu0 %v1388
        %1452 = vmatprep.subr.mxu0 0.0
        %1453 = vmatpush1.msra.mxu0 %v1389
        %1454 = vmatprep.mubr.f32.mxu0 %v1357
        %1455 = vmatmul.mubr.f32.gmra.mrb[0].mxu0 %v1356
        %v1456 = vpop.f32.mrb[0].mxu0
        %v1457 = vadd.f32 0.0, %v1456
        %v1458 = vpop.f32.mrb[0].mxu0
        %1459 = vdwg.mxu0
        %v1460 = vadd.f32 %v1247, %v1457
        %v1461 = vadd.f32 %v1460, %v598
        %s1462 = scalar_lea.vmem %s5, 16
        %v1463 = vld [vmem:[%s1462] ss:$0 sm:$0xff]
        %v1464 = vld [vmem:[%s1462 + $0x1] ss:$0 sm:$0xff]
        %s1465 = scalar_lea.vmem %s1462, 2
        %v1466 = vld [vmem:[%s1465] ss:$8 sm:$0x3]
        %v1467 = vld [vmem:[%s1462 + $0x3] ss:$0 sm:$0xff]
        %v1468 = vld [vmem:[%s1462 + $0x4] ss:$0 sm:$0xff]
        %v1469 = vld [vmem:[%s1462 + $0x5] ss:$0 sm:$0xff]
        %s1470 = scalar_lea.vmem %s1462, 6
        %v1471 = vld [vmem:[%s1470] ss:$8 sm:$0x3]
        %v1472 = vld [vmem:[%s1462 + $0x7] ss:$0 sm:$0xff]
        %s1473 = scalar_lea.vmem %s3, 256
        %v1474 = vld [vmem:[%s1473] sm:$0xff]
        %v1475 = vld [vmem:[%s1473 + $0x8] sm:$0xff]
        %v1476 = vld [vmem:[%s1473 + $0x20] sm:$0xff]
        %v1477 = vld [vmem:[%s1473 + $0x28] sm:$0xff]
        %v1478 = vld [vmem:[%s1473 + $0x40] sm:$0xff]
        %v1479 = vld [vmem:[%s1473 + $0x48] sm:$0xff]
        %v1480 = vld [vmem:[%s1473 + $0x60] sm:$0xff]
        %v1481 = vld [vmem:[%s1473 + $0x68] sm:$0xff]
        %v1482 = vld [vmem:[%s1473 + $0x80] sm:$0xff]
        %v1483 = vld [vmem:[%s1473 + $0x88] sm:$0xff]
        %v1484 = vld [vmem:[%s1473 + $0xa0] sm:$0xff]
        %v1485 = vld [vmem:[%s1473 + $0xa8] sm:$0xff]
        %v1486 = vld [vmem:[%s1473 + $0xc0] sm:$0xff]
        %v1487 = vld [vmem:[%s1473 + $0xc8] sm:$0xff]
        %v1488 = vld [vmem:[%s1473 + $0xe0] sm:$0xff]
        %v1489 = vld [vmem:[%s1473 + $0xe8] sm:$0xff]
        %v1490 = vld [vmem:[%s1473 + $0x10] sm:$0xff]
        %v1491 = vld [vmem:[%s1473 + $0x18] sm:$0xff]
        %v1492 = vld [vmem:[%s1473 + $0x30] sm:$0xff]
        %v1493 = vld [vmem:[%s1473 + $0x38] sm:$0xff]
        %v1494 = vld [vmem:[%s1473 + $0x50] sm:$0xff]
        %v1495 = vld [vmem:[%s1473 + $0x58] sm:$0xff]
        %v1496 = vld [vmem:[%s1473 + $0x70] sm:$0xff]
        %v1497 = vld [vmem:[%s1473 + $0x78] sm:$0xff]
        %v1498 = vld [vmem:[%s1473 + $0x90] sm:$0xff]
        %v1499 = vld [vmem:[%s1473 + $0x98] sm:$0xff]
        %v1500 = vld [vmem:[%s1473 + $0xb0] sm:$0xff]
        %v1501 = vld [vmem:[%s1473 + $0xb8] sm:$0xff]
        %v1502 = vld [vmem:[%s1473 + $0xd0] sm:$0xff]
        %v1503 = vld [vmem:[%s1473 + $0xd8] sm:$0xff]
        %v1504 = vld [vmem:[%s1473 + $0xf0] sm:$0xff]
        %v1505 = vld [vmem:[%s1473 + $0xf8] sm:$0xff]
        %v1506 = vsel %vm631, %v1461, 0.0
        %1507 = vadd.xlane.f32.xlu0 %v1506
        %v1508 = vpop.xlane.xlu0 %1507
        %v1509 = vmul.f32 %v1508, %v635
        %v1510 = vsub.f32 %v1461, %v1509
        %v1511 = vmul.f32 %v1510, %v1510
        %v1512 = vsel %vm631, %v1511, 0.0
        %1513 = vadd.xlane.f32.xlu0 %v1512
        %v1514 = vpop.xlane.xlu0 %1513
        %v1515 = vmul.f32 %v1514, %v635
        %v1516 = vadd.f32 %v1515, 1e-06
        %v1517 = vrsqrt.pop %v1516
        %v1518 = vmul.f32 %v1510, %v1517
        %v1519 = vmul.f32 %v1518, %v1463
        %v1520 = vadd.f32 %v1519, %v1464
        %v1522 = vlaneseq
        %v1523 = vshrl.u32 %v1522, 7
        %v1524 = vsub.s32 0, %v1523
        %v1525 = vrot.slane %v1466, %v1524
        %v1526 = vlaneseq
        %v1527 = vshrl.u32 %v1526, 7
        %v1528 = vsub.s32 1, %v1527
        %v1529 = vrot.slane %v1466, %v1528
        %v1533 = vsel %vm659, %v1520, 0
        %1535 = vmatprep.subr.mxu0 %v1475
        %1536 = vmatpush1.msra.mxu0 %v1474
        %1537 = vmatprep.subr.mxu0 %v1477
        %1538 = vmatpush1.msra.mxu0 %v1476
        %1539 = vmatprep.subr.mxu0 %v1479
        %1540 = vmatpush1.msra.mxu0 %v1478
        %1541 = vmatprep.subr.mxu0 %v1481
        %1542 = vmatpush1.msra.mxu0 %v1480
        %1543 = vmatprep.subr.mxu0 %v1483
        %1544 = vmatpush1.msra.mxu0 %v1482
        %1545 = vmatprep.subr.mxu0 %v1485
        %1546 = vmatpush1.msra.mxu0 %v1484
        %1547 = vmatprep.subr.mxu0 %v1487
        %1548 = vmatpush1.msra.mxu0 %v1486
        %1549 = vmatprep.subr.mxu0 %v1489
        %1550 = vmatpush1.msra.mxu0 %v1488
        %1551 = vmatprep.subr.mxu0 0.0
        %1552 = vmatpush1.msra.mxu0 0.0
        %1553 = vmatprep.subr.mxu0 0.0
        %1554 = vmatpush1.msra.mxu0 0.0
        %1555 = vmatprep.subr.mxu0 0.0
        %1556 = vmatpush1.msra.mxu0 0.0
        %1557 = vmatprep.subr.mxu0 0.0
        %1558 = vmatpush1.msra.mxu0 0.0
        %1559 = vmatprep.subr.mxu0 0.0
        %1560 = vmatpush1.msra.mxu0 0.0
        %1561 = vmatprep.subr.mxu0 0.0
        %1562 = vmatpush1.msra.mxu0 0.0
        %1563 = vmatprep.subr.mxu0 0.0
        %1564 = vmatpush1.msra.mxu0 0.0
        %1565 = vmatprep.subr.mxu0 0.0
        %1566 = vmatpush1.msra.mxu0 0.0
        %1567 = vmatprep.subr.mxu0 0.0
        %1568 = vmatpush1.msra.mxu0 0.0
        %1569 = vmatprep.subr.mxu0 0.0
        %1570 = vmatpush1.msra.mxu0 0.0
        %1571 = vmatprep.subr.mxu0 0.0
        %1572 = vmatpush1.msra.mxu0 0.0
        %1573 = vmatprep.subr.mxu0 0.0
        %1574 = vmatpush1.msra.mxu0 0.0
        %1575 = vmatprep.subr.mxu0 0.0
        %1576 = vmatpush1.msra.mxu0 0.0
        %1577 = vmatprep.subr.mxu0 0.0
        %1578 = vmatpush1.msra.mxu0 0.0
        %1579 = vmatprep.subr.mxu0 0.0
        %1580 = vmatpush1.msra.mxu0 0.0
        %1581 = vmatprep.subr.mxu0 0.0
        %1582 = vmatpush1.msra.mxu0 0.0
        %1583 = vmatprep.subr.mxu0 0.0
        %1584 = vmatpush1.msra.mxu0 0.0
        %1585 = vmatprep.subr.mxu0 0.0
        %1586 = vmatpush1.msra.mxu0 0.0
        %1587 = vmatprep.subr.mxu0 0.0
        %1588 = vmatpush1.msra.mxu0 0.0
        %1589 = vmatprep.subr.mxu0 0.0
        %1590 = vmatpush1.msra.mxu0 0.0
        %1591 = vmatprep.subr.mxu0 0.0
        %1592 = vmatpush1.msra.mxu0 0.0
        %1593 = vmatprep.subr.mxu0 0.0
        %1594 = vmatpush1.msra.mxu0 0.0
        %1595 = vmatprep.subr.mxu0 0.0
        %1596 = vmatpush1.msra.mxu0 0.0
        %1597 = vmatprep.subr.mxu0 0.0
        %1598 = vmatpush1.msra.mxu0 0.0
        %1599 = vmatprep.mubr.f32.mxu0 0.0
        %1600 = vmatmul.mubr.f32.gmra.mrb[0].mxu0 %v1533
        %v1601 = vpop.f32.mrb[0].mxu0
        %v1602 = vadd.f32 %v1525, %v1601
        %v1603 = vpop.f32.mrb[0].mxu0
        %v1604 = vadd.f32 %v1529, %v1603
        %1605 = vdwg.mxu0
        %1607 = vrot.lane.b32.xlu0 %v1602, 64
        %v1608 = vpop.permute.xlu0 %1607
        %v1609 = vsel %vm737, %v1602, 0
        %v1611 = vsel %vm737, %v1608, 0
        %1613 = vmatprep.subr.mxu0 0.0
        %1614 = vmatpush1.xpose.msra.mxu0 %v1611
        %1615 = vmatprep.subr.mxu0 0.0
        %1616 = vmatpush1.xpose.msra.mxu0 0.0
        %1617 = vmatprep.subr.mxu0 0.0
        %1618 = vmatpush1.xpose.msra.mxu0 0.0
        %1619 = vmatprep.subr.mxu0 0.0
        %1620 = vmatpush1.xpose.msra.mxu0 0.0
        %1621 = vmatprep.subr.mxu0 0.0
        %1622 = vmatpush1.xpose.msra.mxu0 0.0
        %1623 = vmatprep.subr.mxu0 0.0
        %1624 = vmatpush1.xpose.msra.mxu0 0.0
        %1625 = vmatprep.subr.mxu0 0.0
        %1626 = vmatpush1.xpose.msra.mxu0 0.0
        %1627 = vmatprep.subr.mxu0 0.0
        %1628 = vmatpush1.xpose.msra.mxu0 0.0
        %1629 = vmatprep.subr.mxu0 0.0
        %1630 = vmatpush1.xpose.msra.mxu0 0.0
        %1631 = vmatprep.subr.mxu0 0.0
        %1632 = vmatpush1.xpose.msra.mxu0 0.0
        %1633 = vmatprep.subr.mxu0 0.0
        %1634 = vmatpush1.xpose.msra.mxu0 0.0
        %1635 = vmatprep.subr.mxu0 0.0
        %1636 = vmatpush1.xpose.msra.mxu0 0.0
        %1637 = vmatprep.subr.mxu0 0.0
        %1638 = vmatpush1.xpose.msra.mxu0 0.0
        %1639 = vmatprep.subr.mxu0 0.0
        %1640 = vmatpush1.xpose.msra.mxu0 0.0
        %1641 = vmatprep.subr.mxu0 0.0
        %1642 = vmatpush1.xpose.msra.mxu0 0.0
        %1643 = vmatprep.subr.mxu0 0.0
        %1644 = vmatpush1.xpose.msra.mxu0 0.0
        %1645 = vmatprep.subr.mxu0 0.0
        %1646 = vmatpush1.xpose.msra.mxu0 0.0
        %1647 = vmatprep.subr.mxu0 0.0
        %1648 = vmatpush1.xpose.msra.mxu0 0.0
        %1649 = vmatprep.subr.mxu0 0.0
        %1650 = vmatpush1.xpose.msra.mxu0 0.0
        %1651 = vmatprep.subr.mxu0 0.0
        %1652 = vmatpush1.xpose.msra.mxu0 0.0
        %1653 = vmatprep.subr.mxu0 0.0
        %1654 = vmatpush1.xpose.msra.mxu0 0.0
        %1655 = vmatprep.subr.mxu0 0.0
        %1656 = vmatpush1.xpose.msra.mxu0 0.0
        %1657 = vmatprep.subr.mxu0 0.0
        %1658 = vmatpush1.xpose.msra.mxu0 0.0
        %1659 = vmatprep.subr.mxu0 0.0
        %1660 = vmatpush1.xpose.msra.mxu0 0.0
        %1661 = vmatprep.subr.mxu0 0.0
        %1662 = vmatpush1.xpose.msra.mxu0 0.0
        %1663 = vmatprep.subr.mxu0 0.0
        %1664 = vmatpush1.xpose.msra.mxu0 0.0
        %1665 = vmatprep.subr.mxu0 0.0
        %1666 = vmatpush1.xpose.msra.mxu0 0.0
        %1667 = vmatprep.subr.mxu0 0.0
        %1668 = vmatpush1.xpose.msra.mxu0 0.0
        %1669 = vmatprep.subr.mxu0 0.0
        %1670 = vmatpush1.xpose.msra.mxu0 0.0
        %1671 = vmatprep.subr.mxu0 0.0
        %1672 = vmatpush1.xpose.msra.mxu0 0.0
        %1673 = vmatprep.subr.mxu0 0.0
        %1674 = vmatpush1.xpose.msra.mxu0 0.0
        %1675 = vmatprep.subr.mxu0 0.0
        %1676 = vmatpush1.xpose.msra.mxu0 0.0
        %1677 = vmatprep.mubr.f32.mxu0 0.0
        %1678 = vmatmul.mubr.f32.gmra.mrb[0].mxu0 %v1609
        %v1679 = vpop.f32.mrb[0].mxu0
        %v1680 = vadd.f32 0.0, %v1679
        %v1681 = vpop.f32.mrb[0].mxu0
        %1682 = vdwg.mxu0
        %v1683 = vsel %vm812, %v1680, -inf
        %1684 = vmax.xlane.f32.xlu0 %v1683
        %v1685 = vpop.xlane.xlu0 %1684
        %v1686 = vsub.f32 %v1680, %v1685
        %v1687 = vmul.f32 %v1686, 1.442695
        %v1688 = vpow.pop %v1687
        %v1689 = vsel %vm812, %v1688, 0.0
        %1690 = vadd.xlane.f32.xlu0 %v1689
        %v1691 = vpop.xlane.xlu0 %1690
        %v1692 = vrcp.pop %v1691
        %v1693 = vmul.f32 %v1688, %v1692
        %v1695 = vsel %vm824, %v1693, 0
        %v1698 = vsel %vm828, %v1604, 0
        %1700 = vmatprep.subr.mxu0 0.0
        %1701 = vmatpush1.msra.mxu0 %v1698
        %1702 = vmatprep.subr.mxu0 0.0
        %1703 = vmatpush1.msra.mxu0 0.0
        %1704 = vmatprep.subr.mxu0 0.0
        %1705 = vmatpush1.msra.mxu0 0.0
        %1706 = vmatprep.subr.mxu0 0.0
        %1707 = vmatpush1.msra.mxu0 0.0
        %1708 = vmatprep.subr.mxu0 0.0
        %1709 = vmatpush1.msra.mxu0 0.0
        %1710 = vmatprep.subr.mxu0 0.0
        %1711 = vmatpush1.msra.mxu0 0.0
        %1712 = vmatprep.subr.mxu0 0.0
        %1713 = vmatpush1.msra.mxu0 0.0
        %1714 = vmatprep.subr.mxu0 0.0
        %1715 = vmatpush1.msra.mxu0 0.0
        %1716 = vmatprep.subr.mxu0 0.0
        %1717 = vmatpush1.msra.mxu0 0.0
        %1718 = vmatprep.subr.mxu0 0.0
        %1719 = vmatpush1.msra.mxu0 0.0
        %1720 = vmatprep.subr.mxu0 0.0
        %1721 = vmatpush1.msra.mxu0 0.0
        %1722 = vmatprep.subr.mxu0 0.0
        %1723 = vmatpush1.msra.mxu0 0.0
        %1724 = vmatprep.subr.mxu0 0.0
        %1725 = vmatpush1.msra.mxu0 0.0
        %1726 = vmatprep.subr.mxu0 0.0
        %1727 = vmatpush1.msra.mxu0 0.0
        %1728 = vmatprep.subr.mxu0 0.0
        %1729 = vmatpush1.msra.mxu0 0.0
        %1730 = vmatprep.subr.mxu0 0.0
        %1731 = vmatpush1.msra.mxu0 0.0
        %1732 = vmatprep.subr.mxu0 0.0
        %1733 = vmatpush1.msra.mxu0 0.0
        %1734 = vmatprep.subr.mxu0 0.0
        %1735 = vmatpush1.msra.mxu0 0.0
        %1736 = vmatprep.subr.mxu0 0.0
        %1737 = vmatpush1.msra.mxu0 0.0
        %1738 = vmatprep.subr.mxu0 0.0
        %1739 = vmatpush1.msra.mxu0 0.0
        %1740 = vmatprep.subr.mxu0 0.0
        %1741 = vmatpush1.msra.mxu0 0.0
        %1742 = vmatprep.subr.mxu0 0.0
        %1743 = vmatpush1.msra.mxu0 0.0
        %1744 = vmatprep.subr.mxu0 0.0
        %1745 = vmatpush1.msra.mxu0 0.0
        %1746 = vmatprep.subr.mxu0 0.0
        %1747 = vmatpush1.msra.mxu0 0.0
        %1748 = vmatprep.subr.mxu0 0.0
        %1749 = vmatpush1.msra.mxu0 0.0
        %1750 = vmatprep.subr.mxu0 0.0
        %1751 = vmatpush1.msra.mxu0 0.0
        %1752 = vmatprep.subr.mxu0 0.0
        %1753 = vmatpush1.msra.mxu0 0.0
        %1754 = vmatprep.subr.mxu0 0.0
        %1755 = vmatpush1.msra.mxu0 0.0
        %1756 = vmatprep.subr.mxu0 0.0
        %1757 = vmatpush1.msra.mxu0 0.0
        %1758 = vmatprep.subr.mxu0 0.0
        %1759 = vmatpush1.msra.mxu0 0.0
        %1760 = vmatprep.subr.mxu0 0.0
        %1761 = vmatpush1.msra.mxu0 0.0
        %1762 = vmatprep.subr.mxu0 0.0
        %1763 = vmatpush1.msra.mxu0 0.0
        %1764 = vmatprep.mubr.f32.mxu0 0.0
        %1765 = vmatmul.mubr.f32.gmra.mrb[0].mxu0 %v1695
        %v1766 = vpop.f32.mrb[0].mxu0
        %v1767 = vadd.f32 0.0, %v1766
        %v1768 = vpop.f32.mrb[0].mxu0
        %1769 = vdwg.mxu0
        %1770 = vrot.lane.b32.xlu0 %v1602, 96
        %v1771 = vpop.permute.xlu0 %1770
        %1772 = vrot.lane.b32.xlu0 %v1602, 32
        %v1773 = vpop.permute.xlu0 %1772
        %v1774 = vsel %vm737, %v1771, 0
        %v1776 = vsel %vm737, %v1773, 0
        %1778 = vmatprep.subr.mxu0 0.0
        %1779 = vmatpush1.xpose.msra.mxu0 %v1776
        %1780 = vmatprep.subr.mxu0 0.0
        %1781 = vmatpush1.xpose.msra.mxu0 0.0
        %1782 = vmatprep.subr.mxu0 0.0
        %1783 = vmatpush1.xpose.msra.mxu0 0.0
        %1784 = vmatprep.subr.mxu0 0.0
        %1785 = vmatpush1.xpose.msra.mxu0 0.0
        %1786 = vmatprep.subr.mxu0 0.0
        %1787 = vmatpush1.xpose.msra.mxu0 0.0
        %1788 = vmatprep.subr.mxu0 0.0
        %1789 = vmatpush1.xpose.msra.mxu0 0.0
        %1790 = vmatprep.subr.mxu0 0.0
        %1791 = vmatpush1.xpose.msra.mxu0 0.0
        %1792 = vmatprep.subr.mxu0 0.0
        %1793 = vmatpush1.xpose.msra.mxu0 0.0
        %1794 = vmatprep.subr.mxu0 0.0
        %1795 = vmatpush1.xpose.msra.mxu0 0.0
        %1796 = vmatprep.subr.mxu0 0.0
        %1797 = vmatpush1.xpose.msra.mxu0 0.0
        %1798 = vmatprep.subr.mxu0 0.0
        %1799 = vmatpush1.xpose.msra.mxu0 0.0
        %1800 = vmatprep.subr.mxu0 0.0
        %1801 = vmatpush1.xpose.msra.mxu0 0.0
        %1802 = vmatprep.subr.mxu0 0.0
        %1803 = vmatpush1.xpose.msra.mxu0 0.0
        %1804 = vmatprep.subr.mxu0 0.0
        %1805 = vmatpush1.xpose.msra.mxu0 0.0
        %1806 = vmatprep.subr.mxu0 0.0
        %1807 = vmatpush1.xpose.msra.mxu0 0.0
        %1808 = vmatprep.subr.mxu0 0.0
        %1809 = vmatpush1.xpose.msra.mxu0 0.0
        %1810 = vmatprep.subr.mxu0 0.0
        %1811 = vmatpush1.xpose.msra.mxu0 0.0
        %1812 = vmatprep.subr.mxu0 0.0
        %1813 = vmatpush1.xpose.msra.mxu0 0.0
        %1814 = vmatprep.subr.mxu0 0.0
        %1815 = vmatpush1.xpose.msra.mxu0 0.0
        %1816 = vmatprep.subr.mxu0 0.0
        %1817 = vmatpush1.xpose.msra.mxu0 0.0
        %1818 = vmatprep.subr.mxu0 0.0
        %1819 = vmatpush1.xpose.msra.mxu0 0.0
        %1820 = vmatprep.subr.mxu0 0.0
        %1821 = vmatpush1.xpose.msra.mxu0 0.0
        %1822 = vmatprep.subr.mxu0 0.0
        %1823 = vmatpush1.xpose.msra.mxu0 0.0
        %1824 = vmatprep.subr.mxu0 0.0
        %1825 = vmatpush1.xpose.msra.mxu0 0.0
        %1826 = vmatprep.subr.mxu0 0.0
        %1827 = vmatpush1.xpose.msra.mxu0 0.0
        %1828 = vmatprep.subr.mxu0 0.0
        %1829 = vmatpush1.xpose.msra.mxu0 0.0
        %1830 = vmatprep.subr.mxu0 0.0
        %1831 = vmatpush1.xpose.msra.mxu0 0.0
        %1832 = vmatprep.subr.mxu0 0.0
        %1833 = vmatpush1.xpose.msra.mxu0 0.0
        %1834 = vmatprep.subr.mxu0 0.0
        %1835 = vmatpush1.xpose.msra.mxu0 0.0
        %1836 = vmatprep.subr.mxu0 0.0
        %1837 = vmatpush1.xpose.msra.mxu0 0.0
        %1838 = vmatprep.subr.mxu0 0.0
        %1839 = vmatpush1.xpose.msra.mxu0 0.0
        %1840 = vmatprep.subr.mxu0 0.0
        %1841 = vmatpush1.xpose.msra.mxu0 0.0
        %1842 = vmatprep.mubr.f32.mxu0 0.0
        %1843 = vmatmul.mubr.f32.gmra.mrb[0].mxu0 %v1774
        %v1844 = vpop.f32.mrb[0].mxu0
        %v1845 = vadd.f32 0.0, %v1844
        %v1846 = vpop.f32.mrb[0].mxu0
        %1847 = vdwg.mxu0
        %v1848 = vsel %vm812, %v1845, -inf
        %1849 = vmax.xlane.f32.xlu0 %v1848
        %v1850 = vpop.xlane.xlu0 %1849
        %v1851 = vsub.f32 %v1845, %v1850
        %v1852 = vmul.f32 %v1851, 1.442695
        %v1853 = vpow.pop %v1852
        %v1854 = vsel %vm812, %v1853, 0.0
        %1855 = vadd.xlane.f32.xlu0 %v1854
        %v1856 = vpop.xlane.xlu0 %1855
        %v1857 = vrcp.pop %v1856
        %v1858 = vmul.f32 %v1853, %v1857
        %1859 = vrot.lane.b32.xlu0 %v1604, 96
        %v1860 = vpop.permute.xlu0 %1859
        %v1862 = vsel %vm824, %v1858, 0
        %v1864 = vsel %vm828, %v1860, 0
        %1866 = vmatprep.subr.mxu0 0.0
        %1867 = vmatpush1.msra.mxu0 %v1864
        %1868 = vmatprep.subr.mxu0 0.0
        %1869 = vmatpush1.msra.mxu0 0.0
        %1870 = vmatprep.subr.mxu0 0.0
        %1871 = vmatpush1.msra.mxu0 0.0
        %1872 = vmatprep.subr.mxu0 0.0
        %1873 = vmatpush1.msra.mxu0 0.0
        %1874 = vmatprep.subr.mxu0 0.0
        %1875 = vmatpush1.msra.mxu0 0.0
        %1876 = vmatprep.subr.mxu0 0.0
        %1877 = vmatpush1.msra.mxu0 0.0
        %1878 = vmatprep.subr.mxu0 0.0
        %1879 = vmatpush1.msra.mxu0 0.0
        %1880 = vmatprep.subr.mxu0 0.0
        %1881 = vmatpush1.msra.mxu0 0.0
        %1882 = vmatprep.subr.mxu0 0.0
        %1883 = vmatpush1.msra.mxu0 0.0
        %1884 = vmatprep.subr.mxu0 0.0
        %1885 = vmatpush1.msra.mxu0 0.0
        %1886 = vmatprep.subr.mxu0 0.0
        %1887 = vmatpush1.msra.mxu0 0.0
        %1888 = vmatprep.subr.mxu0 0.0
        %1889 = vmatpush1.msra.mxu0 0.0
        %1890 = vmatprep.subr.mxu0 0.0
        %1891 = vmatpush1.msra.mxu0 0.0
        %1892 = vmatprep.subr.mxu0 0.0
        %1893 = vmatpush1.msra.mxu0 0.0
        %1894 = vmatprep.subr.mxu0 0.0
        %1895 = vmatpush1.msra.mxu0 0.0
        %1896 = vmatprep.subr.mxu0 0.0
        %1897 = vmatpush1.msra.mxu0 0.0
        %1898 = vmatprep.subr.mxu0 0.0
        %1899 = vmatpush1.msra.mxu0 0.0
        %1900 = vmatprep.subr.mxu0 0.0
        %1901 = vmatpush1.msra.mxu0 0.0
        %1902 = vmatprep.subr.mxu0 0.0
        %1903 = vmatpush1.msra.mxu0 0.0
        %1904 = vmatprep.subr.mxu0 0.0
        %1905 = vmatpush1.msra.mxu0 0.0
        %1906 = vmatprep.subr.mxu0 0.0
        %1907 = vmatpush1.msra.mxu0 0.0
        %1908 = vmatprep.subr.mxu0 0.0
        %1909 = vmatpush1.msra.mxu0 0.0
        %1910 = vmatprep.subr.mxu0 0.0
        %1911 = vmatpush1.msra.mxu0 0.0
        %1912 = vmatprep.subr.mxu0 0.0
        %1913 = vmatpush1.msra.mxu0 0.0
        %1914 = vmatprep.subr.mxu0 0.0
        %1915 = vmatpush1.msra.mxu0 0.0
        %1916 = vmatprep.subr.mxu0 0.0
        %1917 = vmatpush1.msra.mxu0 0.0
        %1918 = vmatprep.subr.mxu0 0.0
        %1919 = vmatpush1.msra.mxu0 0.0
        %1920 = vmatprep.subr.mxu0 0.0
        %1921 = vmatpush1.msra.mxu0 0.0
        %1922 = vmatprep.subr.mxu0 0.0
        %1923 = vmatpush1.msra.mxu0 0.0
        %1924 = vmatprep.subr.mxu0 0.0
        %1925 = vmatpush1.msra.mxu0 0.0
        %1926 = vmatprep.subr.mxu0 0.0
        %1927 = vmatpush1.msra.mxu0 0.0
        %1928 = vmatprep.subr.mxu0 0.0
        %1929 = vmatpush1.msra.mxu0 0.0
        %1930 = vmatprep.mubr.f32.mxu0 0.0
        %1931 = vmatmul.mubr.f32.gmra.mrb[0].mxu0 %v1862
        %v1932 = vpop.f32.mrb[0].mxu0
        %v1933 = vadd.f32 0.0, %v1932
        %v1934 = vpop.f32.mrb[0].mxu0
        %1935 = vdwg.mxu0
        %1940 = vrot.lane.b32.xlu0 %v1483, 64
        %v1941 = vpop.permute.xlu0 %1940
        %1942 = vrot.lane.b32.xlu0 %v1485, 64
        %v1943 = vpop.permute.xlu0 %1942
        %1944 = vrot.lane.b32.xlu0 %v1487, 64
        %v1945 = vpop.permute.xlu0 %1944
        %1946 = vrot.lane.b32.xlu0 %v1489, 64
        %v1947 = vpop.permute.xlu0 %1946
        %v1953 = vsel %vm737, %v1933, 0
        %1955 = vmatprep.subr.mxu0 0.0
        %1956 = vmatpush1.msra.mxu0 %v1941
        %1957 = vmatprep.subr.mxu0 0.0
        %1958 = vmatpush1.msra.mxu0 %v1943
        %1959 = vmatprep.subr.mxu0 0.0
        %1960 = vmatpush1.msra.mxu0 %v1945
        %1961 = vmatprep.subr.mxu0 0.0
        %1962 = vmatpush1.msra.mxu0 %v1947
        %1963 = vmatprep.subr.mxu0 0.0
        %1964 = vmatpush1.msra.mxu0 0.0
        %1965 = vmatprep.subr.mxu0 0.0
        %1966 = vmatpush1.msra.mxu0 0.0
        %1967 = vmatprep.subr.mxu0 0.0
        %1968 = vmatpush1.msra.mxu0 0.0
        %1969 = vmatprep.subr.mxu0 0.0
        %1970 = vmatpush1.msra.mxu0 0.0
        %1971 = vmatprep.subr.mxu0 0.0
        %1972 = vmatpush1.msra.mxu0 0.0
        %1973 = vmatprep.subr.mxu0 0.0
        %1974 = vmatpush1.msra.mxu0 0.0
        %1975 = vmatprep.subr.mxu0 0.0
        %1976 = vmatpush1.msra.mxu0 0.0
        %1977 = vmatprep.subr.mxu0 0.0
        %1978 = vmatpush1.msra.mxu0 0.0
        %1979 = vmatprep.subr.mxu0 0.0
        %1980 = vmatpush1.msra.mxu0 0.0
        %1981 = vmatprep.subr.mxu0 0.0
        %1982 = vmatpush1.msra.mxu0 0.0
        %1983 = vmatprep.subr.mxu0 0.0
        %1984 = vmatpush1.msra.mxu0 0.0
        %1985 = vmatprep.subr.mxu0 0.0
        %1986 = vmatpush1.msra.mxu0 0.0
        %1987 = vmatprep.subr.mxu0 0.0
        %1988 = vmatpush1.msra.mxu0 0.0
        %1989 = vmatprep.subr.mxu0 0.0
        %1990 = vmatpush1.msra.mxu0 0.0
        %1991 = vmatprep.subr.mxu0 0.0
        %1992 = vmatpush1.msra.mxu0 0.0
        %1993 = vmatprep.subr.mxu0 0.0
        %1994 = vmatpush1.msra.mxu0 0.0
        %1995 = vmatprep.subr.mxu0 0.0
        %1996 = vmatpush1.msra.mxu0 0.0
        %1997 = vmatprep.subr.mxu0 0.0
        %1998 = vmatpush1.msra.mxu0 0.0
        %1999 = vmatprep.subr.mxu0 0.0
        %2000 = vmatpush1.msra.mxu0 0.0
        %2001 = vmatprep.subr.mxu0 0.0
        %2002 = vmatpush1.msra.mxu0 0.0
        %2003 = vmatprep.subr.mxu0 0.0
        %2004 = vmatpush1.msra.mxu0 0.0
        %2005 = vmatprep.subr.mxu0 0.0
        %2006 = vmatpush1.msra.mxu0 0.0
        %2007 = vmatprep.subr.mxu0 0.0
        %2008 = vmatpush1.msra.mxu0 0.0
        %2009 = vmatprep.subr.mxu0 0.0
        %2010 = vmatpush1.msra.mxu0 0.0
        %2011 = vmatprep.subr.mxu0 0.0
        %2012 = vmatpush1.msra.mxu0 0.0
        %2013 = vmatprep.subr.mxu0 0.0
        %2014 = vmatpush1.msra.mxu0 0.0
        %2015 = vmatprep.subr.mxu0 0.0
        %2016 = vmatpush1.msra.mxu0 0.0
        %2017 = vmatprep.subr.mxu0 0.0
        %2018 = vmatpush1.msra.mxu0 0.0
        %2019 = vmatprep.mubr.f32.mxu0 0.0
        %2020 = vmatmul.mubr.f32.gmra.mrb[0].mxu0 %v1953
        %v2021 = vpop.f32.mrb[0].mxu0
        %v2022 = vadd.f32 0.0, %v2021
        %v2023 = vpop.f32.mrb[0].mxu0
        %2024 = vdwg.mxu0
        %2029 = vrot.lane.b32.xlu0 %v1475, 64
        %v2030 = vpop.permute.xlu0 %2029
        %2031 = vrot.lane.b32.xlu0 %v1477, 64
        %v2032 = vpop.permute.xlu0 %2031
        %2033 = vrot.lane.b32.xlu0 %v1479, 64
        %v2034 = vpop.permute.xlu0 %2033
        %2035 = vrot.lane.b32.xlu0 %v1481, 64
        %v2036 = vpop.permute.xlu0 %2035
        %v2042 = vsel %vm737, %v1767, 0
        %2044 = vmatprep.subr.mxu0 0.0
        %2045 = vmatpush1.msra.mxu0 %v2030
        %2046 = vmatprep.subr.mxu0 0.0
        %2047 = vmatpush1.msra.mxu0 %v2032
        %2048 = vmatprep.subr.mxu0 0.0
        %2049 = vmatpush1.msra.mxu0 %v2034
        %2050 = vmatprep.subr.mxu0 0.0
        %2051 = vmatpush1.msra.mxu0 %v2036
        %2052 = vmatprep.subr.mxu0 0.0
        %2053 = vmatpush1.msra.mxu0 0.0
        %2054 = vmatprep.subr.mxu0 0.0
        %2055 = vmatpush1.msra.mxu0 0.0
        %2056 = vmatprep.subr.mxu0 0.0
        %2057 = vmatpush1.msra.mxu0 0.0
        %2058 = vmatprep.subr.mxu0 0.0
        %2059 = vmatpush1.msra.mxu0 0.0
        %2060 = vmatprep.subr.mxu0 0.0
        %2061 = vmatpush1.msra.mxu0 0.0
        %2062 = vmatprep.subr.mxu0 0.0
        %2063 = vmatpush1.msra.mxu0 0.0
        %2064 = vmatprep.subr.mxu0 0.0
        %2065 = vmatpush1.msra.mxu0 0.0
        %2066 = vmatprep.subr.mxu0 0.0
        %2067 = vmatpush1.msra.mxu0 0.0
        %2068 = vmatprep.subr.mxu0 0.0
        %2069 = vmatpush1.msra.mxu0 0.0
        %2070 = vmatprep.subr.mxu0 0.0
        %2071 = vmatpush1.msra.mxu0 0.0
        %2072 = vmatprep.subr.mxu0 0.0
        %2073 = vmatpush1.msra.mxu0 0.0
        %2074 = vmatprep.subr.mxu0 0.0
        %2075 = vmatpush1.msra.mxu0 0.0
        %2076 = vmatprep.subr.mxu0 0.0
        %2077 = vmatpush1.msra.mxu0 0.0
        %2078 = vmatprep.subr.mxu0 0.0
        %2079 = vmatpush1.msra.mxu0 0.0
        %2080 = vmatprep.subr.mxu0 0.0
        %2081 = vmatpush1.msra.mxu0 0.0
        %2082 = vmatprep.subr.mxu0 0.0
        %2083 = vmatpush1.msra.mxu0 0.0
        %2084 = vmatprep.subr.mxu0 0.0
        %2085 = vmatpush1.msra.mxu0 0.0
        %2086 = vmatprep.subr.mxu0 0.0
        %2087 = vmatpush1.msra.mxu0 0.0
        %2088 = vmatprep.subr.mxu0 0.0
        %2089 = vmatpush1.msra.mxu0 0.0
        %2090 = vmatprep.subr.mxu0 0.0
        %2091 = vmatpush1.msra.mxu0 0.0
        %2092 = vmatprep.subr.mxu0 0.0
        %2093 = vmatpush1.msra.mxu0 0.0
        %2094 = vmatprep.subr.mxu0 0.0
        %2095 = vmatpush1.msra.mxu0 0.0
        %2096 = vmatprep.subr.mxu0 0.0
        %2097 = vmatpush1.msra.mxu0 0.0
        %2098 = vmatprep.subr.mxu0 0.0
        %2099 = vmatpush1.msra.mxu0 0.0
        %2100 = vmatprep.subr.mxu0 0.0
        %2101 = vmatpush1.msra.mxu0 0.0
        %2102 = vmatprep.subr.mxu0 0.0
        %2103 = vmatpush1.msra.mxu0 0.0
        %2104 = vmatprep.subr.mxu0 0.0
        %2105 = vmatpush1.msra.mxu0 0.0
        %2106 = vmatprep.subr.mxu0 0.0
        %2107 = vmatpush1.msra.mxu0 0.0
        %2108 = vmatprep.mubr.f32.mxu0 0.0
        %2109 = vmatmul.mubr.f32.gmra.mrb[0].mxu0 %v2042
        %v2110 = vpop.f32.mrb[0].mxu0
        %v2111 = vadd.f32 %v2022, %v2110
        %v2112 = vpop.f32.mrb[0].mxu0
        %2113 = vdwg.mxu0
        %v2114 = vadd.f32 %v1461, %v2111
        %v2115 = vadd.f32 %v2114, %v1467
        %v2116 = vsel %vm631, %v2115, 0.0
        %2117 = vadd.xlane.f32.xlu0 %v2116
        %v2118 = vpop.xlane.xlu0 %2117
        %v2119 = vmul.f32 %v2118, %v635
        %v2120 = vsub.f32 %v2115, %v2119
        %v2121 = vmul.f32 %v2120, %v2120
        %v2122 = vsel %vm631, %v2121, 0.0
        %2123 = vadd.xlane.f32.xlu0 %v2122
        %v2124 = vpop.xlane.xlu0 %2123
        %v2125 = vmul.f32 %v2124, %v635
        %v2126 = vadd.f32 %v2125, 1e-06
        %v2127 = vrsqrt.pop %v2126
        %v2128 = vmul.f32 %v2120, %v2127
        %v2129 = vmul.f32 %v2128, %v1468
        %v2130 = vadd.f32 %v2129, %v1469
        %v2132 = vlaneseq
        %v2133 = vshrl.u32 %v2132, 7
        %v2134 = vsub.s32 0, %v2133
        %v2135 = vrot.slane %v1471, %v2134
        %v2136 = vlaneseq
        %v2137 = vshrl.u32 %v2136, 7
        %v2138 = vsub.s32 1, %v2137
        %v2139 = vrot.slane %v1471, %v2138
        %v2143 = vsel %vm659, %v2130, 0
        %2145 = vmatprep.subr.mxu0 %v1491
        %2146 = vmatpush1.msra.mxu0 %v1490
        %2147 = vmatprep.subr.mxu0 %v1493
        %2148 = vmatpush1.msra.mxu0 %v1492
        %2149 = vmatprep.subr.mxu0 %v1495
        %2150 = vmatpush1.msra.mxu0 %v1494
        %2151 = vmatprep.subr.mxu0 %v1497
        %2152 = vmatpush1.msra.mxu0 %v1496
        %2153 = vmatprep.subr.mxu0 %v1499
        %2154 = vmatpush1.msra.mxu0 %v1498
        %2155 = vmatprep.subr.mxu0 %v1501
        %2156 = vmatpush1.msra.mxu0 %v1500
        %2157 = vmatprep.subr.mxu0 %v1503
        %2158 = vmatpush1.msra.mxu0 %v1502
        %2159 = vmatprep.subr.mxu0 %v1505
        %2160 = vmatpush1.msra.mxu0 %v1504
        %2161 = vmatprep.subr.mxu0 0.0
        %2162 = vmatpush1.msra.mxu0 0.0
        %2163 = vmatprep.subr.mxu0 0.0
        %2164 = vmatpush1.msra.mxu0 0.0
        %2165 = vmatprep.subr.mxu0 0.0
        %2166 = vmatpush1.msra.mxu0 0.0
        %2167 = vmatprep.subr.mxu0 0.0
        %2168 = vmatpush1.msra.mxu0 0.0
        %2169 = vmatprep.subr.mxu0 0.0
        %2170 = vmatpush1.msra.mxu0 0.0
        %2171 = vmatprep.subr.mxu0 0.0
        %2172 = vmatpush1.msra.mxu0 0.0
        %2173 = vmatprep.subr.mxu0 0.0
        %2174 = vmatpush1.msra.mxu0 0.0
        %2175 = vmatprep.subr.mxu0 0.0
        %2176 = vmatpush1.msra.mxu0 0.0
        %2177 = vmatprep.subr.mxu0 0.0
        %2178 = vmatpush1.msra.mxu0 0.0
        %2179 = vmatprep.subr.mxu0 0.0
        %2180 = vmatpush1.msra.mxu0 0.0
        %2181 = vmatprep.subr.mxu0 0.0
        %2182 = vmatpush1.msra.mxu0 0.0
        %2183 = vmatprep.subr.mxu0 0.0
        %2184 = vmatpush1.msra.mxu0 0.0
        %2185 = vmatprep.subr.mxu0 0.0
        %2186 = vmatpush1.msra.mxu0 0.0
        %2187 = vmatprep.subr.mxu0 0.0
        %2188 = vmatpush1.msra.mxu0 0.0
        %2189 = vmatprep.subr.mxu0 0.0
        %2190 = vmatpush1.msra.mxu0 0.0
        %2191 = vmatprep.subr.mxu0 0.0
        %2192 = vmatpush1.msra.mxu0 0.0
        %2193 = vmatprep.subr.mxu0 0.0
        %2194 = vmatpush1.msra.mxu0 0.0
        %2195 = vmatprep.subr.mxu0 0.0
        %2196 = vmatpush1.msra.mxu0 0.0
        %2197 = vmatprep.subr.mxu0 0.0
        %2198 = vmatpush1.msra.mxu0 0.0
        %2199 = vmatprep.subr.mxu0 0.0
        %2200 = vmatpush1.msra.mxu0 0.0
        %2201 = vmatprep.subr.mxu0 0.0
        %2202 = vmatpush1.msra.mxu0 0.0
        %2203 = vmatprep.subr.mxu0 0.0
        %2204 = vmatpush1.msra.mxu0 0.0
        %2205 = vmatprep.subr.mxu0 0.0
        %2206 = vmatpush1.msra.mxu0 0.0
        %2207 = vmatprep.subr.mxu0 0.0
        %2208 = vmatpush1.msra.mxu0 0.0
        %2209 = vmatprep.mubr.f32.mxu0 0.0
        %2210 = vmatmul.mubr.f32.gmra.mrb[0].mxu0 %v2143
        %v2211 = vpop.f32.mrb[0].mxu0
        %v2212 = vadd.f32 %v2135, %v2211
        %v2213 = vpop.f32.mrb[0].mxu0
        %v2214 = vadd.f32 %v2139, %v2213
        %2215 = vdwg.mxu0
        %v2216 = vmul.f32 %v2212, 0.5
        %v2217 = vmul.f32 %v2214, 0.5
        %v2218 = vmul.f32 %v2212, 0.70710677
        %v2219 = vmul.f32 %v2214, 0.70710677
        %v2220 = verf.f32.pop %v2218
        %v2221 = verf.f32.pop %v2219
        %v2222 = vadd.f32 %v2220, 1.0
        %v2223 = vadd.f32 %v2221, 1.0
        %v2224 = vmul.f32 %v2216, %v2222
        %v2225 = vmul.f32 %v2217, %v2223
        %s2226 = scalar_lea.vmem %s4, 256
        %v2227 = vld [vmem:[%s2226] sm:$0xff]
        %v2228 = vld [vmem:[%s2226 + $0x8] sm:$0xff]
        %v2229 = vld [vmem:[%s2226 + $0x10] sm:$0xff]
        %v2230 = vld [vmem:[%s2226 + $0x18] sm:$0xff]
        %v2231 = vld [vmem:[%s2226 + $0x20] sm:$0xff]
        %v2232 = vld [vmem:[%s2226 + $0x28] sm:$0xff]
        %v2233 = vld [vmem:[%s2226 + $0x30] sm:$0xff]
        %v2234 = vld [vmem:[%s2226 + $0x38] sm:$0xff]
        %v2235 = vld [vmem:[%s2226 + $0x40] sm:$0xff]
        %v2236 = vld [vmem:[%s2226 + $0x48] sm:$0xff]
        %v2237 = vld [vmem:[%s2226 + $0x50] sm:$0xff]
        %v2238 = vld [vmem:[%s2226 + $0x58] sm:$0xff]
        %v2239 = vld [vmem:[%s2226 + $0x60] sm:$0xff]
        %v2240 = vld [vmem:[%s2226 + $0x68] sm:$0xff]
        %v2241 = vld [vmem:[%s2226 + $0x70] sm:$0xff]
        %v2242 = vld [vmem:[%s2226 + $0x78] sm:$0xff]
        %v2243 = vld [vmem:[%s2226 + $0x80] sm:$0xff]
        %v2244 = vld [vmem:[%s2226 + $0x88] sm:$0xff]
        %v2245 = vld [vmem:[%s2226 + $0x90] sm:$0xff]
        %v2246 = vld [vmem:[%s2226 + $0x98] sm:$0xff]
        %v2247 = vld [vmem:[%s2226 + $0xa0] sm:$0xff]
        %v2248 = vld [vmem:[%s2226 + $0xa8] sm:$0xff]
        %v2249 = vld [vmem:[%s2226 + $0xb0] sm:$0xff]
        %v2250 = vld [vmem:[%s2226 + $0xb8] sm:$0xff]
        %v2251 = vld [vmem:[%s2226 + $0xc0] sm:$0xff]
        %v2252 = vld [vmem:[%s2226 + $0xc8] sm:$0xff]
        %v2253 = vld [vmem:[%s2226 + $0xd0] sm:$0xff]
        %v2254 = vld [vmem:[%s2226 + $0xd8] sm:$0xff]
        %v2255 = vld [vmem:[%s2226 + $0xe0] sm:$0xff]
        %v2256 = vld [vmem:[%s2226 + $0xe8] sm:$0xff]
        %v2257 = vld [vmem:[%s2226 + $0xf0] sm:$0xff]
        %v2258 = vld [vmem:[%s2226 + $0xf8] sm:$0xff]
        %2259 = vmatprep.subr.mxu0 0.0
        %2260 = vmatpush1.msra.mxu0 %v2227
        %2261 = vmatprep.subr.mxu0 0.0
        %2262 = vmatpush1.msra.mxu0 %v2228
        %2263 = vmatprep.subr.mxu0 0.0
        %2264 = vmatpush1.msra.mxu0 %v2229
        %2265 = vmatprep.subr.mxu0 0.0
        %2266 = vmatpush1.msra.mxu0 %v2230
        %2267 = vmatprep.subr.mxu0 0.0
        %2268 = vmatpush1.msra.mxu0 %v2231
        %2269 = vmatprep.subr.mxu0 0.0
        %2270 = vmatpush1.msra.mxu0 %v2232
        %2271 = vmatprep.subr.mxu0 0.0
        %2272 = vmatpush1.msra.mxu0 %v2233
        %2273 = vmatprep.subr.mxu0 0.0
        %2274 = vmatpush1.msra.mxu0 %v2234
        %2275 = vmatprep.subr.mxu0 0.0
        %2276 = vmatpush1.msra.mxu0 %v2235
        %2277 = vmatprep.subr.mxu0 0.0
        %2278 = vmatpush1.msra.mxu0 %v2236
        %2279 = vmatprep.subr.mxu0 0.0
        %2280 = vmatpush1.msra.mxu0 %v2237
        %2281 = vmatprep.subr.mxu0 0.0
        %2282 = vmatpush1.msra.mxu0 %v2238
        %2283 = vmatprep.subr.mxu0 0.0
        %2284 = vmatpush1.msra.mxu0 %v2239
        %2285 = vmatprep.subr.mxu0 0.0
        %2286 = vmatpush1.msra.mxu0 %v2240
        %2287 = vmatprep.subr.mxu0 0.0
        %2288 = vmatpush1.msra.mxu0 %v2241
        %2289 = vmatprep.subr.mxu0 0.0
        %2290 = vmatpush1.msra.mxu0 %v2242
        %2291 = vmatprep.subr.mxu0 0.0
        %2292 = vmatpush1.msra.mxu0 %v2243
        %2293 = vmatprep.subr.mxu0 0.0
        %2294 = vmatpush1.msra.mxu0 %v2244
        %2295 = vmatprep.subr.mxu0 0.0
        %2296 = vmatpush1.msra.mxu0 %v2245
        %2297 = vmatprep.subr.mxu0 0.0
        %2298 = vmatpush1.msra.mxu0 %v2246
        %2299 = vmatprep.subr.mxu0 0.0
        %2300 = vmatpush1.msra.mxu0 %v2247
        %2301 = vmatprep.subr.mxu0 0.0
        %2302 = vmatpush1.msra.mxu0 %v2248
        %2303 = vmatprep.subr.mxu0 0.0
        %2304 = vmatpush1.msra.mxu0 %v2249
        %2305 = vmatprep.subr.mxu0 0.0
        %2306 = vmatpush1.msra.mxu0 %v2250
        %2307 = vmatprep.subr.mxu0 0.0
        %2308 = vmatpush1.msra.mxu0 %v2251
        %2309 = vmatprep.subr.mxu0 0.0
        %2310 = vmatpush1.msra.mxu0 %v2252
        %2311 = vmatprep.subr.mxu0 0.0
        %2312 = vmatpush1.msra.mxu0 %v2253
        %2313 = vmatprep.subr.mxu0 0.0
        %2314 = vmatpush1.msra.mxu0 %v2254
        %2315 = vmatprep.subr.mxu0 0.0
        %2316 = vmatpush1.msra.mxu0 %v2255
        %2317 = vmatprep.subr.mxu0 0.0
        %2318 = vmatpush1.msra.mxu0 %v2256
        %2319 = vmatprep.subr.mxu0 0.0
        %2320 = vmatpush1.msra.mxu0 %v2257
        %2321 = vmatprep.subr.mxu0 0.0
        %2322 = vmatpush1.msra.mxu0 %v2258
        %2323 = vmatprep.mubr.f32.mxu0 %v2225
        %2324 = vmatmul.mubr.f32.gmra.mrb[0].mxu0 %v2224
        %v2325 = vpop.f32.mrb[0].mxu0
        %v2326 = vadd.f32 0.0, %v2325
        %v2327 = vpop.f32.mrb[0].mxu0
        %2328 = vdwg.mxu0
        %v2329 = vadd.f32 %v2115, %v2326
        %v2330 = vadd.f32 %v2329, %v1472
        %v2331 = vld [vmem:[%s6 + $0x41] sm:$0x1]
        %v2332 = vld [vmem:[%s6 + $0x42] sm:$0x1]
        %vm2333 = vcmask 516096
        %v2334 = vsel %vm2333, %v2330, 0.0
        %2335 = vadd.xlane.f32.xlu0 %v2334
        %v2336 = vpop.xlane.xlu0 %2335
        %v2337 = vmul.f32 %v2336, %v635
        %v2338 = vsub.f32 %v2330, %v2337
        %v2339 = vmul.f32 %v2338, %v2338
        %v2340 = vsel %vm2333, %v2339, 0.0
        %2341 = vadd.xlane.f32.xlu0 %v2340
        %v2342 = vpop.xlane.xlu0 %2341
        %v2343 = vmul.f32 %v2342, %v635
        %v2344 = vadd.f32 %v2343, 1e-06
        %v2345 = vrsqrt.pop %v2344
        %v2346 = vmul.f32 %v2338, %v2345
        %v2347 = vmul.f32 %v2346, %v2331
        %v2348 = vadd.f32 %v2347, %v2332
        %v2349 = vld [vmem:[%s6] sm:$0xff]
        %v2350 = vld [vmem:[%s6 + $0x8] sm:$0xff]
        %v2351 = vld [vmem:[%s6 + $0x10] sm:$0xff]
        %v2352 = vld [vmem:[%s6 + $0x18] sm:$0xff]
        %v2353 = vld [vmem:[%s6 + $0x20] sm:$0xff]
        %v2354 = vld [vmem:[%s6 + $0x28] sm:$0xff]
        %v2355 = vld [vmem:[%s6 + $0x30] sm:$0xff]
        %v2356 = vld [vmem:[%s6 + $0x38] sm:$0xff]
        %v2357 = vld [vmem:[%s6 + $0x40] sm:$0x1]
        %v2359 = vsel %vm659, %v2348, 0
        %2361 = vmatprep.subr.mxu0 0.0
        %2362 = vmatpush1.msra.mxu0 %v2349
        %2363 = vmatprep.subr.mxu0 0.0
        %2364 = vmatpush1.msra.mxu0 %v2350
        %2365 = vmatprep.subr.mxu0 0.0
        %2366 = vmatpush1.msra.mxu0 %v2351
        %2367 = vmatprep.subr.mxu0 0.0
        %2368 = vmatpush1.msra.mxu0 %v2352
        %2369 = vmatprep.subr.mxu0 0.0
        %2370 = vmatpush1.msra.mxu0 %v2353
        %2371 = vmatprep.subr.mxu0 0.0
        %2372 = vmatpush1.msra.mxu0 %v2354
        %2373 = vmatprep.subr.mxu0 0.0
        %2374 = vmatpush1.msra.mxu0 %v2355
        %2375 = vmatprep.subr.mxu0 0.0
        %2376 = vmatpush1.msra.mxu0 %v2356
        %2377 = vmatprep.subr.mxu0 0.0
        %2378 = vmatpush1.msra.mxu0 0.0
        %2379 = vmatprep.subr.mxu0 0.0
        %2380 = vmatpush1.msra.mxu0 0.0
        %2381 = vmatprep.subr.mxu0 0.0
        %2382 = vmatpush1.msra.mxu0 0.0
        %2383 = vmatprep.subr.mxu0 0.0
        %2384 = vmatpush1.msra.mxu0 0.0
        %2385 = vmatprep.subr.mxu0 0.0
        %2386 = vmatpush1.msra.mxu0 0.0
        %2387 = vmatprep.subr.mxu0 0.0
        %2388 = vmatpush1.msra.mxu0 0.0
        %2389 = vmatprep.subr.mxu0 0.0
        %2390 = vmatpush1.msra.mxu0 0.0
        %2391 = vmatprep.subr.mxu0 0.0
        %2392 = vmatpush1.msra.mxu0 0.0
        %2393 = vmatprep.subr.mxu0 0.0
        %2394 = vmatpush1.msra.mxu0 0.0
        %2395 = vmatprep.subr.mxu0 0.0
        %2396 = vmatpush1.msra.mxu0 0.0
        %2397 = vmatprep.subr.mxu0 0.0
        %2398 = vmatpush1.msra.mxu0 0.0
        %2399 = vmatprep.subr.mxu0 0.0
        %2400 = vmatpush1.msra.mxu0 0.0
        %2401 = vmatprep.subr.mxu0 0.0
        %2402 = vmatpush1.msra.mxu0 0.0
        %2403 = vmatprep.subr.mxu0 0.0
        %2404 = vmatpush1.msra.mxu0 0.0
        %2405 = vmatprep.subr.mxu0 0.0
        %2406 = vmatpush1.msra.mxu0 0.0
        %2407 = vmatprep.subr.mxu0 0.0
        %2408 = vmatpush1.msra.mxu0 0.0
        %2409 = vmatprep.subr.mxu0 0.0
        %2410 = vmatpush1.msra.mxu0 0.0
        %2411 = vmatprep.subr.mxu0 0.0
        %2412 = vmatpush1.msra.mxu0 0.0
        %2413 = vmatprep.subr.mxu0 0.0
        %2414 = vmatpush1.msra.mxu0 0.0
        %2415 = vmatprep.subr.mxu0 0.0
        %2416 = vmatpush1.msra.mxu0 0.0
        %2417 = vmatprep.subr.mxu0 0.0
        %2418 = vmatpush1.msra.mxu0 0.0
        %2419 = vmatprep.subr.mxu0 0.0
        %2420 = vmatpush1.msra.mxu0 0.0
        %2421 = vmatprep.subr.mxu0 0.0
        %2422 = vmatpush1.msra.mxu0 0.0
        %2423 = vmatprep.subr.mxu0 0.0
        %2424 = vmatpush1.msra.mxu0 0.0
        %2425 = vmatprep.mubr.f32.mxu0 0.0
        %2426 = vmatmul.mubr.f32.gmra.mrb[0].mxu0 %v2359
        %v2427 = vpop.f32.mrb[0].mxu0
        %v2428 = vadd.f32 %v2357, %v2427
        %v2429 = vpop.f32.mrb[0].mxu0
        %2430 = vdwg.mxu0
        %2431 = vst [vmem:[%s270] sm:$0x1] %v2428
        %s2432 = sand.u32 %s181, 1
        %s2433 = scalar_lea.sflag [#allocation3], %s2432
        %s2434 = sand.u32 %s181, 1
        %s2435 = scalar_lea.vmem [#allocation2], %s2434
        // Predicated region
        $region49: #{vit_forward.1} parent=47 // pred_check
          %p2436 = pneg %p191
        $region50: #{vit_forward.1} parent=47 // pred_check_branch
          %2438 = sbr.rel (%p2436) target = $region52
        $region51: #{vit_forward.1} parent=47 // pred_region
          %s2440 = ssub.s32 16, 16
          %2441 = vsyncadd %s2433, %s2440
          %s2442 = smul.addr %s21, 16
          %s2443 = scalar_lea.hbm %s7, %s2442
          %s2445 = sshll.u32 %s2435, 4
          %s2446 = int_to_ptr.vmem [resolvable:$true] %s2445
          %2448 = dma.vmem_to_hbm [thread:$0]  %s2446, 16, %s2443, %s2433
        $region52: #{vit_forward.1} parent=47 // pred_fallthru
          _
      $region48: #{vit_forward.1} parent=5 // pred_fallthru
        _
      %p2449 = scmp.le.s32.totalorder 2, %s16
      // Predicated region
      $region53: #{vit_forward.1} parent=5 // pred_check
        %p2450 = pneg %p2449
      $region54: #{vit_forward.1} parent=5 // pred_check_branch
        %2452 = sbr.rel (%p2450) target = $region56
      $region55: #{vit_forward.1} parent=5 // pred_region
        %s2453 = ssub.s32 %s16, 2
        // Predicated region
        $region57: #{vit_forward.1} parent=55 // pred_check
          %p2454 = pneg %p197
        $region58: #{vit_forward.1} parent=55 // pred_check_branch
          %2456 = sbr.rel (%p2454) target = $region60
        $region59: #{vit_forward.1} parent=55 // pred_region
          %s2457 = sand.u32 %s182, 1
          %s2458 = scalar_lea.sflag [#allocation3], %s2457
          %s2459 = sand.u32 %s182, 1
          %s2460 = scalar_lea.vmem [#allocation2], %s2459
          %2461 = dma.done %s2458, 16
        $region60: #{vit_forward.1} parent=55 // pred_fallthru
          _
      $region56: #{vit_forward.1} parent=5 // pred_fallthru
        _
    $region6: #{vit_forward.1} parent=1 // loop_footer
      %s20 = sadd.s32 1, %s16
    $region7: #{vit_forward.1} parent=1 // loop_footer_branch
      %15 = sbr.rel target = $region3
    $region8: #{vit_forward.1} parent=1 // loop_exit
      _
    %2462 = vsyncpa [#allocation3], 1
    %s2463 = scalar_lea.sflag [#allocation3], 1
    %2464 = vsyncpa %s2463, 1

</llo_original>
